<compile_context>
chip_gen: v6e
topology: v6e:2x2x1
jax: 0.10.0
libtpu: 0.0.40
codegen_flags: <defaults>
</compile_context>

<pallas_src>
import jax
import jax.numpy as jnp
from jax.experimental import pallas as pl
from jax.experimental.pallas import tpu as pltpu

HIDDEN = 32       # hidden_size   (original default 256, scaled down for demo)
OUTPUT = 64       # output_size   (vocab)
MAX_LEN = 128     # max_length    (original default 1000, scaled down for demo)
LANE = 128        # TPU lane width

# Fused first-matmul slab width: [ attn(L) | comb_x(H) | W_hh gates(3H) ]
W0_WIDTH = MAX_LEN + 4 * HIDDEN          # 128 + 128 = 256 (two lane tiles)


# ---------------------------------------------------------------------------
# Kernel: ONE invocation decodes all T teacher-forced steps.
#   inputs : x_all (T,H) embedded tokens, h0 (1,H), E_c (L,H),
#            w0/b0 fused slab, w_ih/b_ih, w_out/b_out
#   outputs: log_probs (T,V), hiddens (T,H), attn_weights (T,L)
# ---------------------------------------------------------------------------
def attn_decoder_seq_kernel(x_ref, h0_ref, ec_ref, w0_ref, b0_ref,
                            wih_ref, bih_ref, wout_ref, bout_ref,
                            lp_ref, hs_ref, aw_ref):
    H, V, L = HIDDEN, OUTPUT, MAX_LEN
    T = x_ref.shape[0]                                    # static at trace time

    # ---- loop-invariant hoists (off the recurrence critical path) ----
    # x-dependent half of the fused first matmul, for ALL steps at once,
    # with the full bias row folded in:  (T,H) @ (H, W0_WIDTH).
    xw_all = (jnp.dot(x_ref[...], w0_ref[0:H, :],
                      preferred_element_type=jnp.float32)
              + b0_ref[...])                              # (T, W0_WIDTH)
    ec = ec_ref[...]                                      # (L, H) = enc @ W_comb_h
    w0_h = w0_ref[H:2 * H, :]                             # h-part of fused slab
    wih, bih = wih_ref[...], bih_ref[...]
    wout, bout = wout_ref[...], bout_ref[...]

    h = h0_ref[...]                                       # (1, H), carried in vregs

    # Fully-unrolled static loop (T known at trace time): equivalent to
    # lax.fori_loop(..., unroll=True) but with static indices everywhere.
    for t in range(T):
        # h-dependent half of the fused first matmul:
        #   lin = [ attn logits | x@Wc_x + b_c | h@W_hh + b_hh ]
        lin = xw_all[t:t + 1, :] + jnp.dot(
            h, w0_h, preferred_element_type=jnp.float32)  # (1, W0_WIDTH)

        # ---- attention softmax over MAX_LEN lanes ----
        logit_a = lin[:, 0:L]
        m_a = jnp.max(logit_a, axis=1, keepdims=True)
        e_a = jnp.exp(logit_a - m_a)
        s_a = jnp.sum(e_a, axis=1, keepdims=True)
        attn_w = e_a * pl.reciprocal(s_a, approx=True)    # (1, L)

        # ---- fused attn_combine + ReLU ----
        # comb = x@Wc_x + b_c + attn_w @ (enc @ Wc_h)   (== cat(x, attn_applied)@Wc + b_c)
        comb = lin[:, L:L + H] + jnp.dot(
            attn_w, ec, preferred_element_type=jnp.float32)   # (1, H)
        gx = jnp.maximum(comb, 0.0)

        # ---- GRU cell (PyTorch gate order r, z, n) ----
        gh = lin[:, L + H:L + 4 * H]                      # (1,3H) h@W_hh + b_hh
        gi = jnp.dot(gx, wih,
                     preferred_element_type=jnp.float32) + bih   # (1,3H)
        r = jax.nn.sigmoid(gi[:, 0:H] + gh[:, 0:H])
        z = jax.nn.sigmoid(gi[:, H:2 * H] + gh[:, H:2 * H])
        n = jnp.tanh(gi[:, 2 * H:3 * H] + r * gh[:, 2 * H:3 * H])
        h_new = (1.0 - z) * n + z * h                     # (1, H)

        # ---- output head: log_softmax(h_new @ W_out + b_out) ----
        # Off the recurrence path (only h_new feeds the next step).
        logit_o = jnp.dot(h_new, wout,
                          preferred_element_type=jnp.float32) + bout   # (1, V)
        m_o = jnp.max(logit_o, axis=1, keepdims=True)
        lse = jnp.log(jnp.sum(jnp.exp(logit_o - m_o), axis=1,
                              keepdims=True)) + m_o

        # ---- direct sub-slice stores (no packed-row lane concat) ----
        lp_ref[t:t + 1, :] = logit_o - lse
        hs_ref[t:t + 1, :] = h_new
        aw_ref[t:t + 1, :] = attn_w

        h = h_new                                         # vreg-carried recurrence


# ---------------------------------------------------------------------------
# Host-side packing of the fused first-matmul slab.
#   columns [0:L)        attention linear over [x|h]        (bias b_attn)
#   columns [L:L+H)      attn_combine, x rows only           (bias b_comb)
#   columns [L+H:L+4H)   GRU W_hh (r|z|n), h rows only        (bias b_hh)
# ---------------------------------------------------------------------------
def pack_params(params):
    H, L = HIDDEN, MAX_LEN
    w0 = jnp.zeros((2 * H, W0_WIDTH), jnp.float32)
    b0 = jnp.zeros((1, W0_WIDTH), jnp.float32)

    w0 = w0.at[:, 0:L].set(params["w_attn"])
    b0 = b0.at[:, 0:L].set(params["b_attn"])

    w0 = w0.at[0:H, L:L + H].set(params["w_comb"][0:H, :])   # x part only
    b0 = b0.at[:, L:L + H].set(params["b_comb"])

    w0 = w0.at[H:2 * H, L + H:L + 4 * H].set(params["w_hh"])  # h part only
    b0 = b0.at[:, L + H:L + 4 * H].set(params["b_hh"])
    return w0, b0


# ---------------------------------------------------------------------------
# Fused multi-step decode: T teacher-forced steps in ONE grid-less pallas_call.
# Returns (log_probs [T,V], hiddens [T,H], attn_weights [T,L]).
# ---------------------------------------------------------------------------
def attn_decoder_fused(tokens, hidden, encoder_outputs, params):
    T = int(tokens.shape[0])
    w0, b0 = pack_params(params)

    # Loop-invariant precompute: encoder half of attn_combine.
    e_c = jnp.dot(encoder_outputs,
                  params["w_comb"][HIDDEN:2 * HIDDEN, :])     # (L, H)

    # Hoisted embedding gather (dropout = identity in eval mode).
    # TODO(synk): training-mode dropout mask not implemented (eval semantics).
    tok = jnp.clip(tokens.astype(jnp.int32), 0, OUTPUT - 1)
    x_all = params["embedding"][tok]                          # (T, H)

    h0 = hidden.reshape(1, HIDDEN)

    vmem = lambda: pl.BlockSpec(memory_space=pltpu.MemorySpace.VMEM)
    lp, hs, aw = pl.pallas_call(
        attn_decoder_seq_kernel,
        out_shape=(jax.ShapeDtypeStruct((T, OUTPUT), jnp.float32),
                   jax.ShapeDtypeStruct((T, HIDDEN), jnp.float32),
                   jax.ShapeDtypeStruct((T, MAX_LEN), jnp.float32)),
        in_specs=[vmem() for _ in range(9)],
        out_specs=(vmem(), vmem(), vmem()),
    )(x_all, h0, e_c, w0, b0,
      params["w_ih"], params["b_ih"], params["w_out"], params["b_out"])
    return lp, hs, aw


def attn_decoder_forward(token, hidden, encoder_outputs, params):
    """Single decoder step with the original module signature:
    returns (log_probs [1,V], hidden [1,1,H], attn_weights [1,L])."""
    tokens = jnp.reshape(token, (1,)).astype(jnp.int32)
    lp, hs, aw = attn_decoder_fused(tokens, hidden, encoder_outputs, params)
    return lp, hs.reshape(1, 1, HIDDEN), aw


# ---------------------------------------------------------------------------
# Pure-JAX references (eval mode), mirroring the PyTorch forward.
# ---------------------------------------------------------------------------
def reference_forward(token, hidden, encoder_outputs, params):
    H = HIDDEN
    emb = params["embedding"][token].reshape(1, H)
    h = hidden.reshape(1, H)
    cat1 = jnp.concatenate([emb, h], axis=1)
    attn_w = jax.nn.softmax(cat1 @ params["w_attn"] + params["b_attn"], axis=1)
    attn_applied = attn_w @ encoder_outputs
    cat2 = jnp.concatenate([emb, attn_applied], axis=1)
    gx = jnp.maximum(cat2 @ params["w_comb"] + params["b_comb"], 0.0)
    gi = gx @ params["w_ih"] + params["b_ih"]
    gh = h @ params["w_hh"] + params["b_hh"]
    r = jax.nn.sigmoid(gi[:, :H] + gh[:, :H])
    z = jax.nn.sigmoid(gi[:, H:2 * H] + gh[:, H:2 * H])
    n = jnp.tanh(gi[:, 2 * H:] + r * gh[:, 2 * H:])
    h_new = (1.0 - z) * n + z * h
    log_probs = jax.nn.log_softmax(h_new @ params["w_out"] + params["b_out"], axis=1)
    return log_probs, h_new.reshape(1, 1, H), attn_w


def reference_sequence(tokens, hidden, encoder_outputs, params):
    lps, hs, aws = [], [], []
    h = hidden
    for tok in tokens:
        lp, h, aw = reference_forward(tok, h, encoder_outputs, params)
        lps.append(lp)
        hs.append(h.reshape(1, HIDDEN))
        aws.append(aw)
    return (jnp.concatenate(lps, axis=0),
            jnp.concatenate(hs, axis=0),
            jnp.concatenate(aws, axis=0))


def init_params(key):
    ks = jax.random.split(key, 11)
    scale = 0.1

    def u(k, shape):
        return jax.random.uniform(k, shape, jnp.float32, -scale, scale)

    return {
        "embedding": u(ks[0], (OUTPUT, HIDDEN)),           # nn.Embedding(output, hidden)
        "w_attn":    u(ks[1], (2 * HIDDEN, MAX_LEN)),      # nn.Linear(2H, max_length) (transposed)
        "b_attn":    u(ks[2], (1, MAX_LEN)),
        "w_comb":    u(ks[3], (2 * HIDDEN, HIDDEN)),       # nn.Linear(2H, H) (transposed)
        "b_comb":    u(ks[4], (1, HIDDEN)),
        "w_ih":      u(ks[5], (HIDDEN, 3 * HIDDEN)),       # GRU weight_ih_l0 (transposed)
        "b_ih":      u(ks[6], (1, 3 * HIDDEN)),
        "w_hh":      u(ks[7], (HIDDEN, 3 * HIDDEN)),       # GRU weight_hh_l0 (transposed)
        "b_hh":      u(ks[8], (1, 3 * HIDDEN)),
        "w_out":     u(ks[9], (HIDDEN, OUTPUT)),           # nn.Linear(H, output) (transposed)
        "b_out":     u(ks[10], (1, OUTPUT)),
    }


if __name__ == "__main__":
    key = jax.random.PRNGKey(0)
    pkey, hkey, ekey, tkey = jax.random.split(key, 4)

    params = init_params(pkey)
    T = 8                                                  # decode steps (teacher forcing)
    tokens = jax.random.randint(tkey, (T,), 0, OUTPUT, dtype=jnp.int32)
    hidden0 = jax.random.normal(hkey, (1, 1, HIDDEN), jnp.float32)
    encoder_outputs = jax.random.normal(ekey, (MAX_LEN, HIDDEN), jnp.float32)

    # --- fused multi-step decode (single pallas_call, single invocation) ---
    log_probs, hiddens, attn_ws = attn_decoder_fused(tokens, hidden0,
                                                     encoder_outputs, params)
    jax.block_until_ready((log_probs, hiddens, attn_ws))

    ref_lp, ref_h, ref_aw = reference_sequence(tokens, hidden0,
                                               encoder_outputs, params)
    assert log_probs.shape == (T, OUTPUT)
    assert hiddens.shape == (T, HIDDEN)
    assert attn_ws.shape == (T, MAX_LEN)
    # Tolerance slightly loosened (5e-4): approx-reciprocal softmax denom and
    # the algebraic refactoring (E_c precompute, W_hh fold, bias folding)
    # introduce ~1e-5-level f32 reassociation diffs vs. the XLA reference.
    assert jnp.allclose(log_probs, ref_lp, atol=5e-4)
    assert jnp.allclose(hiddens, ref_h, atol=5e-4)
    assert jnp.allclose(attn_ws, ref_aw, atol=5e-4)

    # --- single-step API parity with the PyTorch module signature ---
    lp1, h1, aw1 = attn_decoder_forward(tokens[0], hidden0, encoder_outputs, params)
    jax.block_until_ready((lp1, h1, aw1))
    r_lp1, r_h1, r_aw1 = reference_forward(tokens[0], hidden0, encoder_outputs, params)
    assert lp1.shape == (1, OUTPUT)
    assert h1.shape == (1, 1, HIDDEN)
    assert aw1.shape == (1, MAX_LEN)
    assert jnp.allclose(lp1, r_lp1, atol=5e-4)
    assert jnp.allclose(h1, r_h1, atol=5e-4)
    assert jnp.allclose(aw1, r_aw1, atol=5e-4)

    print("KERNEL_OK")
</pallas_src>

<mosaic_0001>
module attributes {stable_mosaic.version = 11 : i64} {
  func.func @attn_decoder_seq_kernel(%arg0: memref<8x32xf32, #tpu.memory_space<vmem>>, %arg1: memref<1x32xf32, #tpu.memory_space<vmem>>, %arg2: memref<128x32xf32, #tpu.memory_space<vmem>>, %arg3: memref<64x256xf32, #tpu.memory_space<vmem>>, %arg4: memref<1x256xf32, #tpu.memory_space<vmem>>, %arg5: memref<32x96xf32, #tpu.memory_space<vmem>>, %arg6: memref<1x96xf32, #tpu.memory_space<vmem>>, %arg7: memref<32x64xf32, #tpu.memory_space<vmem>>, %arg8: memref<1x64xf32, #tpu.memory_space<vmem>>, %arg9: memref<8x64xf32, #tpu.memory_space<vmem>>, %arg10: memref<8x32xf32, #tpu.memory_space<vmem>>, %arg11: memref<8x128xf32, #tpu.memory_space<vmem>>) attributes {dimension_semantics = [], scalar_prefetch = 0 : i64, scratch_operands = 0 : i64, tpu.core_type = #tpu.core_type<tc>} {
    %c0 = arith.constant 0 : index
    %c0_0 = arith.constant 0 : index
    %0 = vector.load %arg0[%c0, %c0_0] : memref<8x32xf32, #tpu.memory_space<vmem>>, vector<8x32xf32>
    %c0_1 = arith.constant 0 : index
    %c0_2 = arith.constant 0 : index
    %1 = vector.load %arg3[%c0_1, %c0_2] : memref<64x256xf32, #tpu.memory_space<vmem>>, vector<32x256xf32>
    %cst = arith.constant dense<0.000000e+00> : vector<8x256xf32>
    %2 = tpu.matmul %0, %1, %cst {dimension_numbers = #tpu.dot_dimension_numbers<[1], [0], [0], [1], [0, 0, 1, 1], [], []>} : vector<8x32xf32>, vector<32x256xf32>, vector<8x256xf32> -> vector<8x256xf32>
    %c0_3 = arith.constant 0 : index
    %c0_4 = arith.constant 0 : index
    %3 = vector.load %arg4[%c0_3, %c0_4] : memref<1x256xf32, #tpu.memory_space<vmem>>, vector<1x256xf32>
    %4 = vector.broadcast %3 : vector<1x256xf32> to vector<8x256xf32>
    %5 = arith.addf %2, %4 : vector<8x256xf32>
    %c0_5 = arith.constant 0 : index
    %c0_6 = arith.constant 0 : index
    %6 = vector.load %arg2[%c0_5, %c0_6] : memref<128x32xf32, #tpu.memory_space<vmem>>, vector<128x32xf32>
    %c32 = arith.constant 32 : index
    %c0_7 = arith.constant 0 : index
    %7 = vector.load %arg3[%c32, %c0_7] : memref<64x256xf32, #tpu.memory_space<vmem>>, vector<32x256xf32>
    %c0_8 = arith.constant 0 : index
    %c0_9 = arith.constant 0 : index
    %8 = vector.load %arg5[%c0_8, %c0_9] : memref<32x96xf32, #tpu.memory_space<vmem>>, vector<32x96xf32>
    %c0_10 = arith.constant 0 : index
    %c0_11 = arith.constant 0 : index
    %9 = vector.load %arg6[%c0_10, %c0_11] : memref<1x96xf32, #tpu.memory_space<vmem>>, vector<1x96xf32>
    %c0_12 = arith.constant 0 : index
    %c0_13 = arith.constant 0 : index
    %10 = vector.load %arg7[%c0_12, %c0_13] : memref<32x64xf32, #tpu.memory_space<vmem>>, vector<32x64xf32>
    %c0_14 = arith.constant 0 : index
    %c0_15 = arith.constant 0 : index
    %11 = vector.load %arg8[%c0_14, %c0_15] : memref<1x64xf32, #tpu.memory_space<vmem>>, vector<1x64xf32>
    %c0_16 = arith.constant 0 : index
    %c0_17 = arith.constant 0 : index
    %12 = vector.load %arg1[%c0_16, %c0_17] : memref<1x32xf32, #tpu.memory_space<vmem>>, vector<1x32xf32>
    %13 = vector.extract_strided_slice %5 {offsets = [0, 0], sizes = [1, 256], strides = [1, 1]} : vector<8x256xf32> to vector<1x256xf32>
    %cst_18 = arith.constant dense<0.000000e+00> : vector<1x256xf32>
    %14 = tpu.matmul %12, %7, %cst_18 {dimension_numbers = #tpu.dot_dimension_numbers<[1], [0], [0], [1], [0, 0, 1, 1], [], []>} : vector<1x32xf32>, vector<32x256xf32>, vector<1x256xf32> -> vector<1x256xf32>
    %15 = arith.addf %13, %14 : vector<1x256xf32>
    %16 = vector.extract_strided_slice %15 {offsets = [0, 0], sizes = [1, 128], strides = [1, 1]} : vector<1x256xf32> to vector<1x128xf32>
    %cst_19 = arith.constant dense<0xFF800000> : vector<1xf32>
    %17 = vector.multi_reduction <maximumf>, %16, %cst_19 [1] : vector<1x128xf32> to vector<1xf32>
    %18 = vector.shape_cast %17 : vector<1xf32> to vector<1x1xf32>
    %19 = vector.broadcast %18 : vector<1x1xf32> to vector<1x128xf32>
    %20 = arith.subf %16, %19 : vector<1x128xf32>
    %21 = math.exp %20 : vector<1x128xf32>
    %cst_20 = arith.constant dense<0.000000e+00> : vector<1xf32>
    %22 = vector.multi_reduction <add>, %21, %cst_20 [1] : vector<1x128xf32> to vector<1xf32>
    %23 = vector.shape_cast %22 : vector<1xf32> to vector<1x1xf32>
    %24 = tpu.reciprocal %23 {approx = true} : vector<1x1xf32> -> vector<1x1xf32>
    %25 = vector.broadcast %24 : vector<1x1xf32> to vector<1x128xf32>
    %26 = arith.mulf %21, %25 : vector<1x128xf32>
    %27 = vector.extract_strided_slice %15 {offsets = [0, 128], sizes = [1, 32], strides = [1, 1]} : vector<1x256xf32> to vector<1x32xf32>
    %cst_21 = arith.constant dense<0.000000e+00> : vector<1x32xf32>
    %28 = tpu.matmul %26, %6, %cst_21 {dimension_numbers = #tpu.dot_dimension_numbers<[1], [0], [0], [1], [0, 0, 1, 1], [], []>} : vector<1x128xf32>, vector<128x32xf32>, vector<1x32xf32> -> vector<1x32xf32>
    %29 = arith.addf %27, %28 : vector<1x32xf32>
    %cst_22 = arith.constant 0.000000e+00 : f32
    %30 = vector.broadcast %cst_22 : f32 to vector<1x32xf32>
    %31 = arith.maximumf %29, %30 : vector<1x32xf32>
    %32 = vector.extract_strided_slice %15 {offsets = [0, 160], sizes = [1, 96], strides = [1, 1]} : vector<1x256xf32> to vector<1x96xf32>
    %cst_23 = arith.constant dense<0.000000e+00> : vector<1x96xf32>
    %33 = tpu.matmul %31, %8, %cst_23 {dimension_numbers = #tpu.dot_dimension_numbers<[1], [0], [0], [1], [0, 0, 1, 1], [], []>} : vector<1x32xf32>, vector<32x96xf32>, vector<1x96xf32> -> vector<1x96xf32>
    %34 = arith.addf %33, %9 : vector<1x96xf32>
    %35 = vector.extract_strided_slice %34 {offsets = [0, 0], sizes = [1, 32], strides = [1, 1]} : vector<1x96xf32> to vector<1x32xf32>
    %36 = vector.extract_strided_slice %32 {offsets = [0, 0], sizes = [1, 32], strides = [1, 1]} : vector<1x96xf32> to vector<1x32xf32>
    %37 = arith.addf %35, %36 : vector<1x32xf32>
    %38 = arith.negf %37 : vector<1x32xf32>
    %39 = math.exp %38 : vector<1x32xf32>
    %cst_24 = arith.constant 1.000000e+00 : f32
    %40 = vector.broadcast %cst_24 : f32 to vector<1x32xf32>
    %41 = arith.addf %40, %39 : vector<1x32xf32>
    %42 = arith.divf %40, %41 : vector<1x32xf32>
    %43 = vector.extract_strided_slice %34 {offsets = [0, 32], sizes = [1, 32], strides = [1, 1]} : vector<1x96xf32> to vector<1x32xf32>
    %44 = vector.extract_strided_slice %32 {offsets = [0, 32], sizes = [1, 32], strides = [1, 1]} : vector<1x96xf32> to vector<1x32xf32>
    %45 = arith.addf %43, %44 : vector<1x32xf32>
    %46 = arith.negf %45 : vector<1x32xf32>
    %47 = math.exp %46 : vector<1x32xf32>
    %cst_25 = arith.constant 1.000000e+00 : f32
    %48 = vector.broadcast %cst_25 : f32 to vector<1x32xf32>
    %49 = arith.addf %48, %47 : vector<1x32xf32>
    %50 = arith.divf %48, %49 : vector<1x32xf32>
    %51 = vector.extract_strided_slice %34 {offsets = [0, 64], sizes = [1, 32], strides = [1, 1]} : vector<1x96xf32> to vector<1x32xf32>
    %52 = vector.extract_strided_slice %32 {offsets = [0, 64], sizes = [1, 32], strides = [1, 1]} : vector<1x96xf32> to vector<1x32xf32>
    %53 = arith.mulf %42, %52 : vector<1x32xf32>
    %54 = arith.addf %51, %53 : vector<1x32xf32>
    %55 = math.tanh %54 : vector<1x32xf32>
    %cst_26 = arith.constant 1.000000e+00 : f32
    %56 = vector.broadcast %cst_26 : f32 to vector<1x32xf32>
    %57 = arith.subf %56, %50 : vector<1x32xf32>
    %58 = arith.mulf %57, %55 : vector<1x32xf32>
    %59 = arith.mulf %50, %12 : vector<1x32xf32>
    %60 = arith.addf %58, %59 : vector<1x32xf32>
    %cst_27 = arith.constant dense<0.000000e+00> : vector<1x64xf32>
    %61 = tpu.matmul %60, %10, %cst_27 {dimension_numbers = #tpu.dot_dimension_numbers<[1], [0], [0], [1], [0, 0, 1, 1], [], []>} : vector<1x32xf32>, vector<32x64xf32>, vector<1x64xf32> -> vector<1x64xf32>
    %62 = arith.addf %61, %11 : vector<1x64xf32>
    %cst_28 = arith.constant dense<0xFF800000> : vector<1xf32>
    %63 = vector.multi_reduction <maximumf>, %62, %cst_28 [1] : vector<1x64xf32> to vector<1xf32>
    %64 = vector.shape_cast %63 : vector<1xf32> to vector<1x1xf32>
    %65 = vector.broadcast %64 : vector<1x1xf32> to vector<1x64xf32>
    %66 = arith.subf %62, %65 : vector<1x64xf32>
    %67 = math.exp %66 : vector<1x64xf32>
    %cst_29 = arith.constant dense<0.000000e+00> : vector<1xf32>
    %68 = vector.multi_reduction <add>, %67, %cst_29 [1] : vector<1x64xf32> to vector<1xf32>
    %69 = vector.shape_cast %68 : vector<1xf32> to vector<1x1xf32>
    %70 = math.log %69 : vector<1x1xf32>
    %71 = arith.addf %70, %64 : vector<1x1xf32>
    %72 = vector.broadcast %71 : vector<1x1xf32> to vector<1x64xf32>
    %73 = arith.subf %62, %72 : vector<1x64xf32>
    %c0_30 = arith.constant 0 : index
    %c0_31 = arith.constant 0 : index
    %74 = vector.load %arg9[%c0_30, %c0_31] : memref<8x64xf32, #tpu.memory_space<vmem>>, vector<1x64xf32>
    tpu.vector_store %arg9[%c0_30, %c0_31], %73 {strides = array<i32>} : memref<8x64xf32, #tpu.memory_space<vmem>>, vector<1x64xf32>,
    %c0_32 = arith.constant 0 : index
    %c0_33 = arith.constant 0 : index
    %75 = vector.load %arg10[%c0_32, %c0_33] : memref<8x32xf32, #tpu.memory_space<vmem>>, vector<1x32xf32>
    tpu.vector_store %arg10[%c0_32, %c0_33], %60 {strides = array<i32>} : memref<8x32xf32, #tpu.memory_space<vmem>>, vector<1x32xf32>,
    %c0_34 = arith.constant 0 : index
    %c0_35 = arith.constant 0 : index
    %76 = vector.load %arg11[%c0_34, %c0_35] : memref<8x128xf32, #tpu.memory_space<vmem>>, vector<1x128xf32>
    tpu.vector_store %arg11[%c0_34, %c0_35], %26 {strides = array<i32>} : memref<8x128xf32, #tpu.memory_space<vmem>>, vector<1x128xf32>,
    %77 = vector.extract_strided_slice %5 {offsets = [1, 0], sizes = [1, 256], strides = [1, 1]} : vector<8x256xf32> to vector<1x256xf32>
    %cst_36 = arith.constant dense<0.000000e+00> : vector<1x256xf32>
    %78 = tpu.matmul %60, %7, %cst_36 {dimension_numbers = #tpu.dot_dimension_numbers<[1], [0], [0], [1], [0, 0, 1, 1], [], []>} : vector<1x32xf32>, vector<32x256xf32>, vector<1x256xf32> -> vector<1x256xf32>
    %79 = arith.addf %77, %78 : vector<1x256xf32>
    %80 = vector.extract_strided_slice %79 {offsets = [0, 0], sizes = [1, 128], strides = [1, 1]} : vector<1x256xf32> to vector<1x128xf32>
    %cst_37 = arith.constant dense<0xFF800000> : vector<1xf32>
    %81 = vector.multi_reduction <maximumf>, %80, %cst_37 [1] : vector<1x128xf32> to vector<1xf32>
    %82 = vector.shape_cast %81 : vector<1xf32> to vector<1x1xf32>
    %83 = vector.broadcast %82 : vector<1x1xf32> to vector<1x128xf32>
    %84 = arith.subf %80, %83 : vector<1x128xf32>
    %85 = math.exp %84 : vector<1x128xf32>
    %cst_38 = arith.constant dense<0.000000e+00> : vector<1xf32>
    %86 = vector.multi_reduction <add>, %85, %cst_38 [1] : vector<1x128xf32> to vector<1xf32>
    %87 = vector.shape_cast %86 : vector<1xf32> to vector<1x1xf32>
    %88 = tpu.reciprocal %87 {approx = true} : vector<1x1xf32> -> vector<1x1xf32>
    %89 = vector.broadcast %88 : vector<1x1xf32> to vector<1x128xf32>
    %90 = arith.mulf %85, %89 : vector<1x128xf32>
    %91 = vector.extract_strided_slice %79 {offsets = [0, 128], sizes = [1, 32], strides = [1, 1]} : vector<1x256xf32> to vector<1x32xf32>
    %cst_39 = arith.constant dense<0.000000e+00> : vector<1x32xf32>
    %92 = tpu.matmul %90, %6, %cst_39 {dimension_numbers = #tpu.dot_dimension_numbers<[1], [0], [0], [1], [0, 0, 1, 1], [], []>} : vector<1x128xf32>, vector<128x32xf32>, vector<1x32xf32> -> vector<1x32xf32>
    %93 = arith.addf %91, %92 : vector<1x32xf32>
    %cst_40 = arith.constant 0.000000e+00 : f32
    %94 = vector.broadcast %cst_40 : f32 to vector<1x32xf32>
    %95 = arith.maximumf %93, %94 : vector<1x32xf32>
    %96 = vector.extract_strided_slice %79 {offsets = [0, 160], sizes = [1, 96], strides = [1, 1]} : vector<1x256xf32> to vector<1x96xf32>
    %cst_41 = arith.constant dense<0.000000e+00> : vector<1x96xf32>
    %97 = tpu.matmul %95, %8, %cst_41 {dimension_numbers = #tpu.dot_dimension_numbers<[1], [0], [0], [1], [0, 0, 1, 1], [], []>} : vector<1x32xf32>, vector<32x96xf32>, vector<1x96xf32> -> vector<1x96xf32>
    %98 = arith.addf %97, %9 : vector<1x96xf32>
    %99 = vector.extract_strided_slice %98 {offsets = [0, 0], sizes = [1, 32], strides = [1, 1]} : vector<1x96xf32> to vector<1x32xf32>
    %100 = vector.extract_strided_slice %96 {offsets = [0, 0], sizes = [1, 32], strides = [1, 1]} : vector<1x96xf32> to vector<1x32xf32>
    %101 = arith.addf %99, %100 : vector<1x32xf32>
    %102 = arith.negf %101 : vector<1x32xf32>
    %103 = math.exp %102 : vector<1x32xf32>
    %cst_42 = arith.constant 1.000000e+00 : f32
    %104 = vector.broadcast %cst_42 : f32 to vector<1x32xf32>
    %105 = arith.addf %104, %103 : vector<1x32xf32>
    %106 = arith.divf %104, %105 : vector<1x32xf32>
    %107 = vector.extract_strided_slice %98 {offsets = [0, 32], sizes = [1, 32], strides = [1, 1]} : vector<1x96xf32> to vector<1x32xf32>
    %108 = vector.extract_strided_slice %96 {offsets = [0, 32], sizes = [1, 32], strides = [1, 1]} : vector<1x96xf32> to vector<1x32xf32>
    %109 = arith.addf %107, %108 : vector<1x32xf32>
    %110 = arith.negf %109 : vector<1x32xf32>
    %111 = math.exp %110 : vector<1x32xf32>
    %cst_43 = arith.constant 1.000000e+00 : f32
    %112 = vector.broadcast %cst_43 : f32 to vector<1x32xf32>
    %113 = arith.addf %112, %111 : vector<1x32xf32>
    %114 = arith.divf %112, %113 : vector<1x32xf32>
    %115 = vector.extract_strided_slice %98 {offsets = [0, 64], sizes = [1, 32], strides = [1, 1]} : vector<1x96xf32> to vector<1x32xf32>
    %116 = vector.extract_strided_slice %96 {offsets = [0, 64], sizes = [1, 32], strides = [1, 1]} : vector<1x96xf32> to vector<1x32xf32>
    %117 = arith.mulf %106, %116 : vector<1x32xf32>
    %118 = arith.addf %115, %117 : vector<1x32xf32>
    %119 = math.tanh %118 : vector<1x32xf32>
    %cst_44 = arith.constant 1.000000e+00 : f32
    %120 = vector.broadcast %cst_44 : f32 to vector<1x32xf32>
    %121 = arith.subf %120, %114 : vector<1x32xf32>
    %122 = arith.mulf %121, %119 : vector<1x32xf32>
    %123 = arith.mulf %114, %60 : vector<1x32xf32>
    %124 = arith.addf %122, %123 : vector<1x32xf32>
    %cst_45 = arith.constant dense<0.000000e+00> : vector<1x64xf32>
    %125 = tpu.matmul %124, %10, %cst_45 {dimension_numbers = #tpu.dot_dimension_numbers<[1], [0], [0], [1], [0, 0, 1, 1], [], []>} : vector<1x32xf32>, vector<32x64xf32>, vector<1x64xf32> -> vector<1x64xf32>
    %126 = arith.addf %125, %11 : vector<1x64xf32>
    %cst_46 = arith.constant dense<0xFF800000> : vector<1xf32>
    %127 = vector.multi_reduction <maximumf>, %126, %cst_46 [1] : vector<1x64xf32> to vector<1xf32>
    %128 = vector.shape_cast %127 : vector<1xf32> to vector<1x1xf32>
    %129 = vector.broadcast %128 : vector<1x1xf32> to vector<1x64xf32>
    %130 = arith.subf %126, %129 : vector<1x64xf32>
    %131 = math.exp %130 : vector<1x64xf32>
    %cst_47 = arith.constant dense<0.000000e+00> : vector<1xf32>
    %132 = vector.multi_reduction <add>, %131, %cst_47 [1] : vector<1x64xf32> to vector<1xf32>
    %133 = vector.shape_cast %132 : vector<1xf32> to vector<1x1xf32>
    %134 = math.log %133 : vector<1x1xf32>
    %135 = arith.addf %134, %128 : vector<1x1xf32>
    %136 = vector.broadcast %135 : vector<1x1xf32> to vector<1x64xf32>
    %137 = arith.subf %126, %136 : vector<1x64xf32>
    %c1 = arith.constant 1 : index
    %c0_48 = arith.constant 0 : index
    %138 = vector.load %arg9[%c1, %c0_48] : memref<8x64xf32, #tpu.memory_space<vmem>>, vector<1x64xf32>
    tpu.vector_store %arg9[%c1, %c0_48], %137 {strides = array<i32>} : memref<8x64xf32, #tpu.memory_space<vmem>>, vector<1x64xf32>,
    %c1_49 = arith.constant 1 : index
    %c0_50 = arith.constant 0 : index
    %139 = vector.load %arg10[%c1_49, %c0_50] : memref<8x32xf32, #tpu.memory_space<vmem>>, vector<1x32xf32>
    tpu.vector_store %arg10[%c1_49, %c0_50], %124 {strides = array<i32>} : memref<8x32xf32, #tpu.memory_space<vmem>>, vector<1x32xf32>,
    %c1_51 = arith.constant 1 : index
    %c0_52 = arith.constant 0 : index
    %140 = vector.load %arg11[%c1_51, %c0_52] : memref<8x128xf32, #tpu.memory_space<vmem>>, vector<1x128xf32>
    tpu.vector_store %arg11[%c1_51, %c0_52], %90 {strides = array<i32>} : memref<8x128xf32, #tpu.memory_space<vmem>>, vector<1x128xf32>,
    %141 = vector.extract_strided_slice %5 {offsets = [2, 0], sizes = [1, 256], strides = [1, 1]} : vector<8x256xf32> to vector<1x256xf32>
    %cst_53 = arith.constant dense<0.000000e+00> : vector<1x256xf32>
    %142 = tpu.matmul %124, %7, %cst_53 {dimension_numbers = #tpu.dot_dimension_numbers<[1], [0], [0], [1], [0, 0, 1, 1], [], []>} : vector<1x32xf32>, vector<32x256xf32>, vector<1x256xf32> -> vector<1x256xf32>
    %143 = arith.addf %141, %142 : vector<1x256xf32>
    %144 = vector.extract_strided_slice %143 {offsets = [0, 0], sizes = [1, 128], strides = [1, 1]} : vector<1x256xf32> to vector<1x128xf32>
    %cst_54 = arith.constant dense<0xFF800000> : vector<1xf32>
    %145 = vector.multi_reduction <maximumf>, %144, %cst_54 [1] : vector<1x128xf32> to vector<1xf32>
    %146 = vector.shape_cast %145 : vector<1xf32> to vector<1x1xf32>
    %147 = vector.broadcast %146 : vector<1x1xf32> to vector<1x128xf32>
    %148 = arith.subf %144, %147 : vector<1x128xf32>
    %149 = math.exp %148 : vector<1x128xf32>
    %cst_55 = arith.constant dense<0.000000e+00> : vector<1xf32>
    %150 = vector.multi_reduction <add>, %149, %cst_55 [1] : vector<1x128xf32> to vector<1xf32>
    %151 = vector.shape_cast %150 : vector<1xf32> to vector<1x1xf32>
    %152 = tpu.reciprocal %151 {approx = true} : vector<1x1xf32> -> vector<1x1xf32>
    %153 = vector.broadcast %152 : vector<1x1xf32> to vector<1x128xf32>
    %154 = arith.mulf %149, %153 : vector<1x128xf32>
    %155 = vector.extract_strided_slice %143 {offsets = [0, 128], sizes = [1, 32], strides = [1, 1]} : vector<1x256xf32> to vector<1x32xf32>
    %cst_56 = arith.constant dense<0.000000e+00> : vector<1x32xf32>
    %156 = tpu.matmul %154, %6, %cst_56 {dimension_numbers = #tpu.dot_dimension_numbers<[1], [0], [0], [1], [0, 0, 1, 1], [], []>} : vector<1x128xf32>, vector<128x32xf32>, vector<1x32xf32> -> vector<1x32xf32>
    %157 = arith.addf %155, %156 : vector<1x32xf32>
    %cst_57 = arith.constant 0.000000e+00 : f32
    %158 = vector.broadcast %cst_57 : f32 to vector<1x32xf32>
    %159 = arith.maximumf %157, %158 : vector<1x32xf32>
    %160 = vector.extract_strided_slice %143 {offsets = [0, 160], sizes = [1, 96], strides = [1, 1]} : vector<1x256xf32> to vector<1x96xf32>
    %cst_58 = arith.constant dense<0.000000e+00> : vector<1x96xf32>
    %161 = tpu.matmul %159, %8, %cst_58 {dimension_numbers = #tpu.dot_dimension_numbers<[1], [0], [0], [1], [0, 0, 1, 1], [], []>} : vector<1x32xf32>, vector<32x96xf32>, vector<1x96xf32> -> vector<1x96xf32>
    %162 = arith.addf %161, %9 : vector<1x96xf32>
    %163 = vector.extract_strided_slice %162 {offsets = [0, 0], sizes = [1, 32], strides = [1, 1]} : vector<1x96xf32> to vector<1x32xf32>
    %164 = vector.extract_strided_slice %160 {offsets = [0, 0], sizes = [1, 32], strides = [1, 1]} : vector<1x96xf32> to vector<1x32xf32>
    %165 = arith.addf %163, %164 : vector<1x32xf32>
    %166 = arith.negf %165 : vector<1x32xf32>
    %167 = math.exp %166 : vector<1x32xf32>
    %cst_59 = arith.constant 1.000000e+00 : f32
    %168 = vector.broadcast %cst_59 : f32 to vector<1x32xf32>
    %169 = arith.addf %168, %167 : vector<1x32xf32>
    %170 = arith.divf %168, %169 : vector<1x32xf32>
    %171 = vector.extract_strided_slice %162 {offsets = [0, 32], sizes = [1, 32], strides = [1, 1]} : vector<1x96xf32> to vector<1x32xf32>
    %172 = vector.extract_strided_slice %160 {offsets = [0, 32], sizes = [1, 32], strides = [1, 1]} : vector<1x96xf32> to vector<1x32xf32>
    %173 = arith.addf %171, %172 : vector<1x32xf32>
    %174 = arith.negf %173 : vector<1x32xf32>
    %175 = math.exp %174 : vector<1x32xf32>
    %cst_60 = arith.constant 1.000000e+00 : f32
    %176 = vector.broadcast %cst_60 : f32 to vector<1x32xf32>
    %177 = arith.addf %176, %175 : vector<1x32xf32>
    %178 = arith.divf %176, %177 : vector<1x32xf32>
    %179 = vector.extract_strided_slice %162 {offsets = [0, 64], sizes = [1, 32], strides = [1, 1]} : vector<1x96xf32> to vector<1x32xf32>
    %180 = vector.extract_strided_slice %160 {offsets = [0, 64], sizes = [1, 32], strides = [1, 1]} : vector<1x96xf32> to vector<1x32xf32>
    %181 = arith.mulf %170, %180 : vector<1x32xf32>
    %182 = arith.addf %179, %181 : vector<1x32xf32>
    %183 = math.tanh %182 : vector<1x32xf32>
    %cst_61 = arith.constant 1.000000e+00 : f32
    %184 = vector.broadcast %cst_61 : f32 to vector<1x32xf32>
    %185 = arith.subf %184, %178 : vector<1x32xf32>
    %186 = arith.mulf %185, %183 : vector<1x32xf32>
    %187 = arith.mulf %178, %124 : vector<1x32xf32>
    %188 = arith.addf %186, %187 : vector<1x32xf32>
    %cst_62 = arith.constant dense<0.000000e+00> : vector<1x64xf32>
    %189 = tpu.matmul %188, %10, %cst_62 {dimension_numbers = #tpu.dot_dimension_numbers<[1], [0], [0], [1], [0, 0, 1, 1], [], []>} : vector<1x32xf32>, vector<32x64xf32>, vector<1x64xf32> -> vector<1x64xf32>
    %190 = arith.addf %189, %11 : vector<1x64xf32>
    %cst_63 = arith.constant dense<0xFF800000> : vector<1xf32>
    %191 = vector.multi_reduction <maximumf>, %190, %cst_63 [1] : vector<1x64xf32> to vector<1xf32>
    %192 = vector.shape_cast %191 : vector<1xf32> to vector<1x1xf32>
    %193 = vector.broadcast %192 : vector<1x1xf32> to vector<1x64xf32>
    %194 = arith.subf %190, %193 : vector<1x64xf32>
    %195 = math.exp %194 : vector<1x64xf32>
    %cst_64 = arith.constant dense<0.000000e+00> : vector<1xf32>
    %196 = vector.multi_reduction <add>, %195, %cst_64 [1] : vector<1x64xf32> to vector<1xf32>
    %197 = vector.shape_cast %196 : vector<1xf32> to vector<1x1xf32>
    %198 = math.log %197 : vector<1x1xf32>
    %199 = arith.addf %198, %192 : vector<1x1xf32>
    %200 = vector.broadcast %199 : vector<1x1xf32> to vector<1x64xf32>
    %201 = arith.subf %190, %200 : vector<1x64xf32>
    %c2 = arith.constant 2 : index
    %c0_65 = arith.constant 0 : index
    %202 = vector.load %arg9[%c2, %c0_65] : memref<8x64xf32, #tpu.memory_space<vmem>>, vector<1x64xf32>
    tpu.vector_store %arg9[%c2, %c0_65], %201 {strides = array<i32>} : memref<8x64xf32, #tpu.memory_space<vmem>>, vector<1x64xf32>,
    %c2_66 = arith.constant 2 : index
    %c0_67 = arith.constant 0 : index
    %203 = vector.load %arg10[%c2_66, %c0_67] : memref<8x32xf32, #tpu.memory_space<vmem>>, vector<1x32xf32>
    tpu.vector_store %arg10[%c2_66, %c0_67], %188 {strides = array<i32>} : memref<8x32xf32, #tpu.memory_space<vmem>>, vector<1x32xf32>,
    %c2_68 = arith.constant 2 : index
    %c0_69 = arith.constant 0 : index
    %204 = vector.load %arg11[%c2_68, %c0_69] : memref<8x128xf32, #tpu.memory_space<vmem>>, vector<1x128xf32>
    tpu.vector_store %arg11[%c2_68, %c0_69], %154 {strides = array<i32>} : memref<8x128xf32, #tpu.memory_space<vmem>>, vector<1x128xf32>,
    %205 = vector.extract_strided_slice %5 {offsets = [3, 0], sizes = [1, 256], strides = [1, 1]} : vector<8x256xf32> to vector<1x256xf32>
    %cst_70 = arith.constant dense<0.000000e+00> : vector<1x256xf32>
    %206 = tpu.matmul %188, %7, %cst_70 {dimension_numbers = #tpu.dot_dimension_numbers<[1], [0], [0], [1], [0, 0, 1, 1], [], []>} : vector<1x32xf32>, vector<32x256xf32>, vector<1x256xf32> -> vector<1x256xf32>
    %207 = arith.addf %205, %206 : vector<1x256xf32>
    %208 = vector.extract_strided_slice %207 {offsets = [0, 0], sizes = [1, 128], strides = [1, 1]} : vector<1x256xf32> to vector<1x128xf32>
    %cst_71 = arith.constant dense<0xFF800000> : vector<1xf32>
    %209 = vector.multi_reduction <maximumf>, %208, %cst_71 [1] : vector<1x128xf32> to vector<1xf32>
    %210 = vector.shape_cast %209 : vector<1xf32> to vector<1x1xf32>
    %211 = vector.broadcast %210 : vector<1x1xf32> to vector<1x128xf32>
    %212 = arith.subf %208, %211 : vector<1x128xf32>
    %213 = math.exp %212 : vector<1x128xf32>
    %cst_72 = arith.constant dense<0.000000e+00> : vector<1xf32>
    %214 = vector.multi_reduction <add>, %213, %cst_72 [1] : vector<1x128xf32> to vector<1xf32>
    %215 = vector.shape_cast %214 : vector<1xf32> to vector<1x1xf32>
    %216 = tpu.reciprocal %215 {approx = true} : vector<1x1xf32> -> vector<1x1xf32>
    %217 = vector.broadcast %216 : vector<1x1xf32> to vector<1x128xf32>
    %218 = arith.mulf %213, %217 : vector<1x128xf32>
    %219 = vector.extract_strided_slice %207 {offsets = [0, 128], sizes = [1, 32], strides = [1, 1]} : vector<1x256xf32> to vector<1x32xf32>
    %cst_73 = arith.constant dense<0.000000e+00> : vector<1x32xf32>
    %220 = tpu.matmul %218, %6, %cst_73 {dimension_numbers = #tpu.dot_dimension_numbers<[1], [0], [0], [1], [0, 0, 1, 1], [], []>} : vector<1x128xf32>, vector<128x32xf32>, vector<1x32xf32> -> vector<1x32xf32>
    %221 = arith.addf %219, %220 : vector<1x32xf32>
    %cst_74 = arith.constant 0.000000e+00 : f32
    %222 = vector.broadcast %cst_74 : f32 to vector<1x32xf32>
    %223 = arith.maximumf %221, %222 : vector<1x32xf32>
    %224 = vector.extract_strided_slice %207 {offsets = [0, 160], sizes = [1, 96], strides = [1, 1]} : vector<1x256xf32> to vector<1x96xf32>
    %cst_75 = arith.constant dense<0.000000e+00> : vector<1x96xf32>
    %225 = tpu.matmul %223, %8, %cst_75 {dimension_numbers = #tpu.dot_dimension_numbers<[1], [0], [0], [1], [0, 0, 1, 1], [], []>} : vector<1x32xf32>, vector<32x96xf32>, vector<1x96xf32> -> vector<1x96xf32>
    %226 = arith.addf %225, %9 : vector<1x96xf32>
    %227 = vector.extract_strided_slice %226 {offsets = [0, 0], sizes = [1, 32], strides = [1, 1]} : vector<1x96xf32> to vector<1x32xf32>
    %228 = vector.extract_strided_slice %224 {offsets = [0, 0], sizes = [1, 32], strides = [1, 1]} : vector<1x96xf32> to vector<1x32xf32>
    %229 = arith.addf %227, %228 : vector<1x32xf32>
    %230 = arith.negf %229 : vector<1x32xf32>
    %231 = math.exp %230 : vector<1x32xf32>
    %cst_76 = arith.constant 1.000000e+00 : f32
    %232 = vector.broadcast %cst_76 : f32 to vector<1x32xf32>
    %233 = arith.addf %232, %231 : vector<1x32xf32>
    %234 = arith.divf %232, %233 : vector<1x32xf32>
    %235 = vector.extract_strided_slice %226 {offsets = [0, 32], sizes = [1, 32], strides = [1, 1]} : vector<1x96xf32> to vector<1x32xf32>
    %236 = vector.extract_strided_slice %224 {offsets = [0, 32], sizes = [1, 32], strides = [1, 1]} : vector<1x96xf32> to vector<1x32xf32>
    %237 = arith.addf %235, %236 : vector<1x32xf32>
    %238 = arith.negf %237 : vector<1x32xf32>
    %239 = math.exp %238 : vector<1x32xf32>
    %cst_77 = arith.constant 1.000000e+00 : f32
    %240 = vector.broadcast %cst_77 : f32 to vector<1x32xf32>
    %241 = arith.addf %240, %239 : vector<1x32xf32>
    %242 = arith.divf %240, %241 : vector<1x32xf32>
    %243 = vector.extract_strided_slice %226 {offsets = [0, 64], sizes = [1, 32], strides = [1, 1]} : vector<1x96xf32> to vector<1x32xf32>
    %244 = vector.extract_strided_slice %224 {offsets = [0, 64], sizes = [1, 32], strides = [1, 1]} : vector<1x96xf32> to vector<1x32xf32>
    %245 = arith.mulf %234, %244 : vector<1x32xf32>
    %246 = arith.addf %243, %245 : vector<1x32xf32>
    %247 = math.tanh %246 : vector<1x32xf32>
    %cst_78 = arith.constant 1.000000e+00 : f32
    %248 = vector.broadcast %cst_78 : f32 to vector<1x32xf32>
    %249 = arith.subf %248, %242 : vector<1x32xf32>
    %250 = arith.mulf %249, %247 : vector<1x32xf32>
    %251 = arith.mulf %242, %188 : vector<1x32xf32>
    %252 = arith.addf %250, %251 : vector<1x32xf32>
    %cst_79 = arith.constant dense<0.000000e+00> : vector<1x64xf32>
    %253 = tpu.matmul %252, %10, %cst_79 {dimension_numbers = #tpu.dot_dimension_numbers<[1], [0], [0], [1], [0, 0, 1, 1], [], []>} : vector<1x32xf32>, vector<32x64xf32>, vector<1x64xf32> -> vector<1x64xf32>
    %254 = arith.addf %253, %11 : vector<1x64xf32>
    %cst_80 = arith.constant dense<0xFF800000> : vector<1xf32>
    %255 = vector.multi_reduction <maximumf>, %254, %cst_80 [1] : vector<1x64xf32> to vector<1xf32>
    %256 = vector.shape_cast %255 : vector<1xf32> to vector<1x1xf32>
    %257 = vector.broadcast %256 : vector<1x1xf32> to vector<1x64xf32>
    %258 = arith.subf %254, %257 : vector<1x64xf32>
    %259 = math.exp %258 : vector<1x64xf32>
    %cst_81 = arith.constant dense<0.000000e+00> : vector<1xf32>
    %260 = vector.multi_reduction <add>, %259, %cst_81 [1] : vector<1x64xf32> to vector<1xf32>
    %261 = vector.shape_cast %260 : vector<1xf32> to vector<1x1xf32>
    %262 = math.log %261 : vector<1x1xf32>
    %263 = arith.addf %262, %256 : vector<1x1xf32>
    %264 = vector.broadcast %263 : vector<1x1xf32> to vector<1x64xf32>
    %265 = arith.subf %254, %264 : vector<1x64xf32>
    %c3 = arith.constant 3 : index
    %c0_82 = arith.constant 0 : index
    %266 = vector.load %arg9[%c3, %c0_82] : memref<8x64xf32, #tpu.memory_space<vmem>>, vector<1x64xf32>
    tpu.vector_store %arg9[%c3, %c0_82], %265 {strides = array<i32>} : memref<8x64xf32, #tpu.memory_space<vmem>>, vector<1x64xf32>,
    %c3_83 = arith.constant 3 : index
    %c0_84 = arith.constant 0 : index
    %267 = vector.load %arg10[%c3_83, %c0_84] : memref<8x32xf32, #tpu.memory_space<vmem>>, vector<1x32xf32>
    tpu.vector_store %arg10[%c3_83, %c0_84], %252 {strides = array<i32>} : memref<8x32xf32, #tpu.memory_space<vmem>>, vector<1x32xf32>,
    %c3_85 = arith.constant 3 : index
    %c0_86 = arith.constant 0 : index
    %268 = vector.load %arg11[%c3_85, %c0_86] : memref<8x128xf32, #tpu.memory_space<vmem>>, vector<1x128xf32>
    tpu.vector_store %arg11[%c3_85, %c0_86], %218 {strides = array<i32>} : memref<8x128xf32, #tpu.memory_space<vmem>>, vector<1x128xf32>,
    %269 = vector.extract_strided_slice %5 {offsets = [4, 0], sizes = [1, 256], strides = [1, 1]} : vector<8x256xf32> to vector<1x256xf32>
    %cst_87 = arith.constant dense<0.000000e+00> : vector<1x256xf32>
    %270 = tpu.matmul %252, %7, %cst_87 {dimension_numbers = #tpu.dot_dimension_numbers<[1], [0], [0], [1], [0, 0, 1, 1], [], []>} : vector<1x32xf32>, vector<32x256xf32>, vector<1x256xf32> -> vector<1x256xf32>
    %271 = arith.addf %269, %270 : vector<1x256xf32>
    %272 = vector.extract_strided_slice %271 {offsets = [0, 0], sizes = [1, 128], strides = [1, 1]} : vector<1x256xf32> to vector<1x128xf32>
    %cst_88 = arith.constant dense<0xFF800000> : vector<1xf32>
    %273 = vector.multi_reduction <maximumf>, %272, %cst_88 [1] : vector<1x128xf32> to vector<1xf32>
    %274 = vector.shape_cast %273 : vector<1xf32> to vector<1x1xf32>
    %275 = vector.broadcast %274 : vector<1x1xf32> to vector<1x128xf32>
    %276 = arith.subf %272, %275 : vector<1x128xf32>
    %277 = math.exp %276 : vector<1x128xf32>
    %cst_89 = arith.constant dense<0.000000e+00> : vector<1xf32>
    %278 = vector.multi_reduction <add>, %277, %cst_89 [1] : vector<1x128xf32> to vector<1xf32>
    %279 = vector.shape_cast %278 : vector<1xf32> to vector<1x1xf32>
    %280 = tpu.reciprocal %279 {approx = true} : vector<1x1xf32> -> vector<1x1xf32>
    %281 = vector.broadcast %280 : vector<1x1xf32> to vector<1x128xf32>
    %282 = arith.mulf %277, %281 : vector<1x128xf32>
    %283 = vector.extract_strided_slice %271 {offsets = [0, 128], sizes = [1, 32], strides = [1, 1]} : vector<1x256xf32> to vector<1x32xf32>
    %cst_90 = arith.constant dense<0.000000e+00> : vector<1x32xf32>
    %284 = tpu.matmul %282, %6, %cst_90 {dimension_numbers = #tpu.dot_dimension_numbers<[1], [0], [0], [1], [0, 0, 1, 1], [], []>} : vector<1x128xf32>, vector<128x32xf32>, vector<1x32xf32> -> vector<1x32xf32>
    %285 = arith.addf %283, %284 : vector<1x32xf32>
    %cst_91 = arith.constant 0.000000e+00 : f32
    %286 = vector.broadcast %cst_91 : f32 to vector<1x32xf32>
    %287 = arith.maximumf %285, %286 : vector<1x32xf32>
    %288 = vector.extract_strided_slice %271 {offsets = [0, 160], sizes = [1, 96], strides = [1, 1]} : vector<1x256xf32> to vector<1x96xf32>
    %cst_92 = arith.constant dense<0.000000e+00> : vector<1x96xf32>
    %289 = tpu.matmul %287, %8, %cst_92 {dimension_numbers = #tpu.dot_dimension_numbers<[1], [0], [0], [1], [0, 0, 1, 1], [], []>} : vector<1x32xf32>, vector<32x96xf32>, vector<1x96xf32> -> vector<1x96xf32>
    %290 = arith.addf %289, %9 : vector<1x96xf32>
    %291 = vector.extract_strided_slice %290 {offsets = [0, 0], sizes = [1, 32], strides = [1, 1]} : vector<1x96xf32> to vector<1x32xf32>
    %292 = vector.extract_strided_slice %288 {offsets = [0, 0], sizes = [1, 32], strides = [1, 1]} : vector<1x96xf32> to vector<1x32xf32>
    %293 = arith.addf %291, %292 : vector<1x32xf32>
    %294 = arith.negf %293 : vector<1x32xf32>
    %295 = math.exp %294 : vector<1x32xf32>
    %cst_93 = arith.constant 1.000000e+00 : f32
    %296 = vector.broadcast %cst_93 : f32 to vector<1x32xf32>
    %297 = arith.addf %296, %295 : vector<1x32xf32>
    %298 = arith.divf %296, %297 : vector<1x32xf32>
    %299 = vector.extract_strided_slice %290 {offsets = [0, 32], sizes = [1, 32], strides = [1, 1]} : vector<1x96xf32> to vector<1x32xf32>
    %300 = vector.extract_strided_slice %288 {offsets = [0, 32], sizes = [1, 32], strides = [1, 1]} : vector<1x96xf32> to vector<1x32xf32>
    %301 = arith.addf %299, %300 : vector<1x32xf32>
    %302 = arith.negf %301 : vector<1x32xf32>
    %303 = math.exp %302 : vector<1x32xf32>
    %cst_94 = arith.constant 1.000000e+00 : f32
    %304 = vector.broadcast %cst_94 : f32 to vector<1x32xf32>
    %305 = arith.addf %304, %303 : vector<1x32xf32>
    %306 = arith.divf %304, %305 : vector<1x32xf32>
    %307 = vector.extract_strided_slice %290 {offsets = [0, 64], sizes = [1, 32], strides = [1, 1]} : vector<1x96xf32> to vector<1x32xf32>
    %308 = vector.extract_strided_slice %288 {offsets = [0, 64], sizes = [1, 32], strides = [1, 1]} : vector<1x96xf32> to vector<1x32xf32>
    %309 = arith.mulf %298, %308 : vector<1x32xf32>
    %310 = arith.addf %307, %309 : vector<1x32xf32>
    %311 = math.tanh %310 : vector<1x32xf32>
    %cst_95 = arith.constant 1.000000e+00 : f32
    %312 = vector.broadcast %cst_95 : f32 to vector<1x32xf32>
    %313 = arith.subf %312, %306 : vector<1x32xf32>
    %314 = arith.mulf %313, %311 : vector<1x32xf32>
    %315 = arith.mulf %306, %252 : vector<1x32xf32>
    %316 = arith.addf %314, %315 : vector<1x32xf32>
    %cst_96 = arith.constant dense<0.000000e+00> : vector<1x64xf32>
    %317 = tpu.matmul %316, %10, %cst_96 {dimension_numbers = #tpu.dot_dimension_numbers<[1], [0], [0], [1], [0, 0, 1, 1], [], []>} : vector<1x32xf32>, vector<32x64xf32>, vector<1x64xf32> -> vector<1x64xf32>
    %318 = arith.addf %317, %11 : vector<1x64xf32>
    %cst_97 = arith.constant dense<0xFF800000> : vector<1xf32>
    %319 = vector.multi_reduction <maximumf>, %318, %cst_97 [1] : vector<1x64xf32> to vector<1xf32>
    %320 = vector.shape_cast %319 : vector<1xf32> to vector<1x1xf32>
    %321 = vector.broadcast %320 : vector<1x1xf32> to vector<1x64xf32>
    %322 = arith.subf %318, %321 : vector<1x64xf32>
    %323 = math.exp %322 : vector<1x64xf32>
    %cst_98 = arith.constant dense<0.000000e+00> : vector<1xf32>
    %324 = vector.multi_reduction <add>, %323, %cst_98 [1] : vector<1x64xf32> to vector<1xf32>
    %325 = vector.shape_cast %324 : vector<1xf32> to vector<1x1xf32>
    %326 = math.log %325 : vector<1x1xf32>
    %327 = arith.addf %326, %320 : vector<1x1xf32>
    %328 = vector.broadcast %327 : vector<1x1xf32> to vector<1x64xf32>
    %329 = arith.subf %318, %328 : vector<1x64xf32>
    %c4 = arith.constant 4 : index
    %c0_99 = arith.constant 0 : index
    %330 = vector.load %arg9[%c4, %c0_99] : memref<8x64xf32, #tpu.memory_space<vmem>>, vector<1x64xf32>
    tpu.vector_store %arg9[%c4, %c0_99], %329 {strides = array<i32>} : memref<8x64xf32, #tpu.memory_space<vmem>>, vector<1x64xf32>,
    %c4_100 = arith.constant 4 : index
    %c0_101 = arith.constant 0 : index
    %331 = vector.load %arg10[%c4_100, %c0_101] : memref<8x32xf32, #tpu.memory_space<vmem>>, vector<1x32xf32>
    tpu.vector_store %arg10[%c4_100, %c0_101], %316 {strides = array<i32>} : memref<8x32xf32, #tpu.memory_space<vmem>>, vector<1x32xf32>,
    %c4_102 = arith.constant 4 : index
    %c0_103 = arith.constant 0 : index
    %332 = vector.load %arg11[%c4_102, %c0_103] : memref<8x128xf32, #tpu.memory_space<vmem>>, vector<1x128xf32>
    tpu.vector_store %arg11[%c4_102, %c0_103], %282 {strides = array<i32>} : memref<8x128xf32, #tpu.memory_space<vmem>>, vector<1x128xf32>,
    %333 = vector.extract_strided_slice %5 {offsets = [5, 0], sizes = [1, 256], strides = [1, 1]} : vector<8x256xf32> to vector<1x256xf32>
    %cst_104 = arith.constant dense<0.000000e+00> : vector<1x256xf32>
    %334 = tpu.matmul %316, %7, %cst_104 {dimension_numbers = #tpu.dot_dimension_numbers<[1], [0], [0], [1], [0, 0, 1, 1], [], []>} : vector<1x32xf32>, vector<32x256xf32>, vector<1x256xf32> -> vector<1x256xf32>
    %335 = arith.addf %333, %334 : vector<1x256xf32>
    %336 = vector.extract_strided_slice %335 {offsets = [0, 0], sizes = [1, 128], strides = [1, 1]} : vector<1x256xf32> to vector<1x128xf32>
    %cst_105 = arith.constant dense<0xFF800000> : vector<1xf32>
    %337 = vector.multi_reduction <maximumf>, %336, %cst_105 [1] : vector<1x128xf32> to vector<1xf32>
    %338 = vector.shape_cast %337 : vector<1xf32> to vector<1x1xf32>
    %339 = vector.broadcast %338 : vector<1x1xf32> to vector<1x128xf32>
    %340 = arith.subf %336, %339 : vector<1x128xf32>
    %341 = math.exp %340 : vector<1x128xf32>
    %cst_106 = arith.constant dense<0.000000e+00> : vector<1xf32>
    %342 = vector.multi_reduction <add>, %341, %cst_106 [1] : vector<1x128xf32> to vector<1xf32>
    %343 = vector.shape_cast %342 : vector<1xf32> to vector<1x1xf32>
    %344 = tpu.reciprocal %343 {approx = true} : vector<1x1xf32> -> vector<1x1xf32>
    %345 = vector.broadcast %344 : vector<1x1xf32> to vector<1x128xf32>
    %346 = arith.mulf %341, %345 : vector<1x128xf32>
    %347 = vector.extract_strided_slice %335 {offsets = [0, 128], sizes = [1, 32], strides = [1, 1]} : vector<1x256xf32> to vector<1x32xf32>
    %cst_107 = arith.constant dense<0.000000e+00> : vector<1x32xf32>
    %348 = tpu.matmul %346, %6, %cst_107 {dimension_numbers = #tpu.dot_dimension_numbers<[1], [0], [0], [1], [0, 0, 1, 1], [], []>} : vector<1x128xf32>, vector<128x32xf32>, vector<1x32xf32> -> vector<1x32xf32>
    %349 = arith.addf %347, %348 : vector<1x32xf32>
    %cst_108 = arith.constant 0.000000e+00 : f32
    %350 = vector.broadcast %cst_108 : f32 to vector<1x32xf32>
    %351 = arith.maximumf %349, %350 : vector<1x32xf32>
    %352 = vector.extract_strided_slice %335 {offsets = [0, 160], sizes = [1, 96], strides = [1, 1]} : vector<1x256xf32> to vector<1x96xf32>
    %cst_109 = arith.constant dense<0.000000e+00> : vector<1x96xf32>
    %353 = tpu.matmul %351, %8, %cst_109 {dimension_numbers = #tpu.dot_dimension_numbers<[1], [0], [0], [1], [0, 0, 1, 1], [], []>} : vector<1x32xf32>, vector<32x96xf32>, vector<1x96xf32> -> vector<1x96xf32>
    %354 = arith.addf %353, %9 : vector<1x96xf32>
    %355 = vector.extract_strided_slice %354 {offsets = [0, 0], sizes = [1, 32], strides = [1, 1]} : vector<1x96xf32> to vector<1x32xf32>
    %356 = vector.extract_strided_slice %352 {offsets = [0, 0], sizes = [1, 32], strides = [1, 1]} : vector<1x96xf32> to vector<1x32xf32>
    %357 = arith.addf %355, %356 : vector<1x32xf32>
    %358 = arith.negf %357 : vector<1x32xf32>
    %359 = math.exp %358 : vector<1x32xf32>
    %cst_110 = arith.constant 1.000000e+00 : f32
    %360 = vector.broadcast %cst_110 : f32 to vector<1x32xf32>
    %361 = arith.addf %360, %359 : vector<1x32xf32>
    %362 = arith.divf %360, %361 : vector<1x32xf32>
    %363 = vector.extract_strided_slice %354 {offsets = [0, 32], sizes = [1, 32], strides = [1, 1]} : vector<1x96xf32> to vector<1x32xf32>
    %364 = vector.extract_strided_slice %352 {offsets = [0, 32], sizes = [1, 32], strides = [1, 1]} : vector<1x96xf32> to vector<1x32xf32>
    %365 = arith.addf %363, %364 : vector<1x32xf32>
    %366 = arith.negf %365 : vector<1x32xf32>
    %367 = math.exp %366 : vector<1x32xf32>
    %cst_111 = arith.constant 1.000000e+00 : f32
    %368 = vector.broadcast %cst_111 : f32 to vector<1x32xf32>
    %369 = arith.addf %368, %367 : vector<1x32xf32>
    %370 = arith.divf %368, %369 : vector<1x32xf32>
    %371 = vector.extract_strided_slice %354 {offsets = [0, 64], sizes = [1, 32], strides = [1, 1]} : vector<1x96xf32> to vector<1x32xf32>
    %372 = vector.extract_strided_slice %352 {offsets = [0, 64], sizes = [1, 32], strides = [1, 1]} : vector<1x96xf32> to vector<1x32xf32>
    %373 = arith.mulf %362, %372 : vector<1x32xf32>
    %374 = arith.addf %371, %373 : vector<1x32xf32>
    %375 = math.tanh %374 : vector<1x32xf32>
    %cst_112 = arith.constant 1.000000e+00 : f32
    %376 = vector.broadcast %cst_112 : f32 to vector<1x32xf32>
    %377 = arith.subf %376, %370 : vector<1x32xf32>
    %378 = arith.mulf %377, %375 : vector<1x32xf32>
    %379 = arith.mulf %370, %316 : vector<1x32xf32>
    %380 = arith.addf %378, %379 : vector<1x32xf32>
    %cst_113 = arith.constant dense<0.000000e+00> : vector<1x64xf32>
    %381 = tpu.matmul %380, %10, %cst_113 {dimension_numbers = #tpu.dot_dimension_numbers<[1], [0], [0], [1], [0, 0, 1, 1], [], []>} : vector<1x32xf32>, vector<32x64xf32>, vector<1x64xf32> -> vector<1x64xf32>
    %382 = arith.addf %381, %11 : vector<1x64xf32>
    %cst_114 = arith.constant dense<0xFF800000> : vector<1xf32>
    %383 = vector.multi_reduction <maximumf>, %382, %cst_114 [1] : vector<1x64xf32> to vector<1xf32>
    %384 = vector.shape_cast %383 : vector<1xf32> to vector<1x1xf32>
    %385 = vector.broadcast %384 : vector<1x1xf32> to vector<1x64xf32>
    %386 = arith.subf %382, %385 : vector<1x64xf32>
    %387 = math.exp %386 : vector<1x64xf32>
    %cst_115 = arith.constant dense<0.000000e+00> : vector<1xf32>
    %388 = vector.multi_reduction <add>, %387, %cst_115 [1] : vector<1x64xf32> to vector<1xf32>
    %389 = vector.shape_cast %388 : vector<1xf32> to vector<1x1xf32>
    %390 = math.log %389 : vector<1x1xf32>
    %391 = arith.addf %390, %384 : vector<1x1xf32>
    %392 = vector.broadcast %391 : vector<1x1xf32> to vector<1x64xf32>
    %393 = arith.subf %382, %392 : vector<1x64xf32>
    %c5 = arith.constant 5 : index
    %c0_116 = arith.constant 0 : index
    %394 = vector.load %arg9[%c5, %c0_116] : memref<8x64xf32, #tpu.memory_space<vmem>>, vector<1x64xf32>
    tpu.vector_store %arg9[%c5, %c0_116], %393 {strides = array<i32>} : memref<8x64xf32, #tpu.memory_space<vmem>>, vector<1x64xf32>,
    %c5_117 = arith.constant 5 : index
    %c0_118 = arith.constant 0 : index
    %395 = vector.load %arg10[%c5_117, %c0_118] : memref<8x32xf32, #tpu.memory_space<vmem>>, vector<1x32xf32>
    tpu.vector_store %arg10[%c5_117, %c0_118], %380 {strides = array<i32>} : memref<8x32xf32, #tpu.memory_space<vmem>>, vector<1x32xf32>,
    %c5_119 = arith.constant 5 : index
    %c0_120 = arith.constant 0 : index
    %396 = vector.load %arg11[%c5_119, %c0_120] : memref<8x128xf32, #tpu.memory_space<vmem>>, vector<1x128xf32>
    tpu.vector_store %arg11[%c5_119, %c0_120], %346 {strides = array<i32>} : memref<8x128xf32, #tpu.memory_space<vmem>>, vector<1x128xf32>,
    %397 = vector.extract_strided_slice %5 {offsets = [6, 0], sizes = [1, 256], strides = [1, 1]} : vector<8x256xf32> to vector<1x256xf32>
    %cst_121 = arith.constant dense<0.000000e+00> : vector<1x256xf32>
    %398 = tpu.matmul %380, %7, %cst_121 {dimension_numbers = #tpu.dot_dimension_numbers<[1], [0], [0], [1], [0, 0, 1, 1], [], []>} : vector<1x32xf32>, vector<32x256xf32>, vector<1x256xf32> -> vector<1x256xf32>
    %399 = arith.addf %397, %398 : vector<1x256xf32>
    %400 = vector.extract_strided_slice %399 {offsets = [0, 0], sizes = [1, 128], strides = [1, 1]} : vector<1x256xf32> to vector<1x128xf32>
    %cst_122 = arith.constant dense<0xFF800000> : vector<1xf32>
    %401 = vector.multi_reduction <maximumf>, %400, %cst_122 [1] : vector<1x128xf32> to vector<1xf32>
    %402 = vector.shape_cast %401 : vector<1xf32> to vector<1x1xf32>
    %403 = vector.broadcast %402 : vector<1x1xf32> to vector<1x128xf32>
    %404 = arith.subf %400, %403 : vector<1x128xf32>
    %405 = math.exp %404 : vector<1x128xf32>
    %cst_123 = arith.constant dense<0.000000e+00> : vector<1xf32>
    %406 = vector.multi_reduction <add>, %405, %cst_123 [1] : vector<1x128xf32> to vector<1xf32>
    %407 = vector.shape_cast %406 : vector<1xf32> to vector<1x1xf32>
    %408 = tpu.reciprocal %407 {approx = true} : vector<1x1xf32> -> vector<1x1xf32>
    %409 = vector.broadcast %408 : vector<1x1xf32> to vector<1x128xf32>
    %410 = arith.mulf %405, %409 : vector<1x128xf32>
    %411 = vector.extract_strided_slice %399 {offsets = [0, 128], sizes = [1, 32], strides = [1, 1]} : vector<1x256xf32> to vector<1x32xf32>
    %cst_124 = arith.constant dense<0.000000e+00> : vector<1x32xf32>
    %412 = tpu.matmul %410, %6, %cst_124 {dimension_numbers = #tpu.dot_dimension_numbers<[1], [0], [0], [1], [0, 0, 1, 1], [], []>} : vector<1x128xf32>, vector<128x32xf32>, vector<1x32xf32> -> vector<1x32xf32>
    %413 = arith.addf %411, %412 : vector<1x32xf32>
    %cst_125 = arith.constant 0.000000e+00 : f32
    %414 = vector.broadcast %cst_125 : f32 to vector<1x32xf32>
    %415 = arith.maximumf %413, %414 : vector<1x32xf32>
    %416 = vector.extract_strided_slice %399 {offsets = [0, 160], sizes = [1, 96], strides = [1, 1]} : vector<1x256xf32> to vector<1x96xf32>
    %cst_126 = arith.constant dense<0.000000e+00> : vector<1x96xf32>
    %417 = tpu.matmul %415, %8, %cst_126 {dimension_numbers = #tpu.dot_dimension_numbers<[1], [0], [0], [1], [0, 0, 1, 1], [], []>} : vector<1x32xf32>, vector<32x96xf32>, vector<1x96xf32> -> vector<1x96xf32>
    %418 = arith.addf %417, %9 : vector<1x96xf32>
    %419 = vector.extract_strided_slice %418 {offsets = [0, 0], sizes = [1, 32], strides = [1, 1]} : vector<1x96xf32> to vector<1x32xf32>
    %420 = vector.extract_strided_slice %416 {offsets = [0, 0], sizes = [1, 32], strides = [1, 1]} : vector<1x96xf32> to vector<1x32xf32>
    %421 = arith.addf %419, %420 : vector<1x32xf32>
    %422 = arith.negf %421 : vector<1x32xf32>
    %423 = math.exp %422 : vector<1x32xf32>
    %cst_127 = arith.constant 1.000000e+00 : f32
    %424 = vector.broadcast %cst_127 : f32 to vector<1x32xf32>
    %425 = arith.addf %424, %423 : vector<1x32xf32>
    %426 = arith.divf %424, %425 : vector<1x32xf32>
    %427 = vector.extract_strided_slice %418 {offsets = [0, 32], sizes = [1, 32], strides = [1, 1]} : vector<1x96xf32> to vector<1x32xf32>
    %428 = vector.extract_strided_slice %416 {offsets = [0, 32], sizes = [1, 32], strides = [1, 1]} : vector<1x96xf32> to vector<1x32xf32>
    %429 = arith.addf %427, %428 : vector<1x32xf32>
    %430 = arith.negf %429 : vector<1x32xf32>
    %431 = math.exp %430 : vector<1x32xf32>
    %cst_128 = arith.constant 1.000000e+00 : f32
    %432 = vector.broadcast %cst_128 : f32 to vector<1x32xf32>
    %433 = arith.addf %432, %431 : vector<1x32xf32>
    %434 = arith.divf %432, %433 : vector<1x32xf32>
    %435 = vector.extract_strided_slice %418 {offsets = [0, 64], sizes = [1, 32], strides = [1, 1]} : vector<1x96xf32> to vector<1x32xf32>
    %436 = vector.extract_strided_slice %416 {offsets = [0, 64], sizes = [1, 32], strides = [1, 1]} : vector<1x96xf32> to vector<1x32xf32>
    %437 = arith.mulf %426, %436 : vector<1x32xf32>
    %438 = arith.addf %435, %437 : vector<1x32xf32>
    %439 = math.tanh %438 : vector<1x32xf32>
    %cst_129 = arith.constant 1.000000e+00 : f32
    %440 = vector.broadcast %cst_129 : f32 to vector<1x32xf32>
    %441 = arith.subf %440, %434 : vector<1x32xf32>
    %442 = arith.mulf %441, %439 : vector<1x32xf32>
    %443 = arith.mulf %434, %380 : vector<1x32xf32>
    %444 = arith.addf %442, %443 : vector<1x32xf32>
    %cst_130 = arith.constant dense<0.000000e+00> : vector<1x64xf32>
    %445 = tpu.matmul %444, %10, %cst_130 {dimension_numbers = #tpu.dot_dimension_numbers<[1], [0], [0], [1], [0, 0, 1, 1], [], []>} : vector<1x32xf32>, vector<32x64xf32>, vector<1x64xf32> -> vector<1x64xf32>
    %446 = arith.addf %445, %11 : vector<1x64xf32>
    %cst_131 = arith.constant dense<0xFF800000> : vector<1xf32>
    %447 = vector.multi_reduction <maximumf>, %446, %cst_131 [1] : vector<1x64xf32> to vector<1xf32>
    %448 = vector.shape_cast %447 : vector<1xf32> to vector<1x1xf32>
    %449 = vector.broadcast %448 : vector<1x1xf32> to vector<1x64xf32>
    %450 = arith.subf %446, %449 : vector<1x64xf32>
    %451 = math.exp %450 : vector<1x64xf32>
    %cst_132 = arith.constant dense<0.000000e+00> : vector<1xf32>
    %452 = vector.multi_reduction <add>, %451, %cst_132 [1] : vector<1x64xf32> to vector<1xf32>
    %453 = vector.shape_cast %452 : vector<1xf32> to vector<1x1xf32>
    %454 = math.log %453 : vector<1x1xf32>
    %455 = arith.addf %454, %448 : vector<1x1xf32>
    %456 = vector.broadcast %455 : vector<1x1xf32> to vector<1x64xf32>
    %457 = arith.subf %446, %456 : vector<1x64xf32>
    %c6 = arith.constant 6 : index
    %c0_133 = arith.constant 0 : index
    %458 = vector.load %arg9[%c6, %c0_133] : memref<8x64xf32, #tpu.memory_space<vmem>>, vector<1x64xf32>
    tpu.vector_store %arg9[%c6, %c0_133], %457 {strides = array<i32>} : memref<8x64xf32, #tpu.memory_space<vmem>>, vector<1x64xf32>,
    %c6_134 = arith.constant 6 : index
    %c0_135 = arith.constant 0 : index
    %459 = vector.load %arg10[%c6_134, %c0_135] : memref<8x32xf32, #tpu.memory_space<vmem>>, vector<1x32xf32>
    tpu.vector_store %arg10[%c6_134, %c0_135], %444 {strides = array<i32>} : memref<8x32xf32, #tpu.memory_space<vmem>>, vector<1x32xf32>,
    %c6_136 = arith.constant 6 : index
    %c0_137 = arith.constant 0 : index
    %460 = vector.load %arg11[%c6_136, %c0_137] : memref<8x128xf32, #tpu.memory_space<vmem>>, vector<1x128xf32>
    tpu.vector_store %arg11[%c6_136, %c0_137], %410 {strides = array<i32>} : memref<8x128xf32, #tpu.memory_space<vmem>>, vector<1x128xf32>,
    %461 = vector.extract_strided_slice %5 {offsets = [7, 0], sizes = [1, 256], strides = [1, 1]} : vector<8x256xf32> to vector<1x256xf32>
    %cst_138 = arith.constant dense<0.000000e+00> : vector<1x256xf32>
    %462 = tpu.matmul %444, %7, %cst_138 {dimension_numbers = #tpu.dot_dimension_numbers<[1], [0], [0], [1], [0, 0, 1, 1], [], []>} : vector<1x32xf32>, vector<32x256xf32>, vector<1x256xf32> -> vector<1x256xf32>
    %463 = arith.addf %461, %462 : vector<1x256xf32>
    %464 = vector.extract_strided_slice %463 {offsets = [0, 0], sizes = [1, 128], strides = [1, 1]} : vector<1x256xf32> to vector<1x128xf32>
    %cst_139 = arith.constant dense<0xFF800000> : vector<1xf32>
    %465 = vector.multi_reduction <maximumf>, %464, %cst_139 [1] : vector<1x128xf32> to vector<1xf32>
    %466 = vector.shape_cast %465 : vector<1xf32> to vector<1x1xf32>
    %467 = vector.broadcast %466 : vector<1x1xf32> to vector<1x128xf32>
    %468 = arith.subf %464, %467 : vector<1x128xf32>
    %469 = math.exp %468 : vector<1x128xf32>
    %cst_140 = arith.constant dense<0.000000e+00> : vector<1xf32>
    %470 = vector.multi_reduction <add>, %469, %cst_140 [1] : vector<1x128xf32> to vector<1xf32>
    %471 = vector.shape_cast %470 : vector<1xf32> to vector<1x1xf32>
    %472 = tpu.reciprocal %471 {approx = true} : vector<1x1xf32> -> vector<1x1xf32>
    %473 = vector.broadcast %472 : vector<1x1xf32> to vector<1x128xf32>
    %474 = arith.mulf %469, %473 : vector<1x128xf32>
    %475 = vector.extract_strided_slice %463 {offsets = [0, 128], sizes = [1, 32], strides = [1, 1]} : vector<1x256xf32> to vector<1x32xf32>
    %cst_141 = arith.constant dense<0.000000e+00> : vector<1x32xf32>
    %476 = tpu.matmul %474, %6, %cst_141 {dimension_numbers = #tpu.dot_dimension_numbers<[1], [0], [0], [1], [0, 0, 1, 1], [], []>} : vector<1x128xf32>, vector<128x32xf32>, vector<1x32xf32> -> vector<1x32xf32>
    %477 = arith.addf %475, %476 : vector<1x32xf32>
    %cst_142 = arith.constant 0.000000e+00 : f32
    %478 = vector.broadcast %cst_142 : f32 to vector<1x32xf32>
    %479 = arith.maximumf %477, %478 : vector<1x32xf32>
    %480 = vector.extract_strided_slice %463 {offsets = [0, 160], sizes = [1, 96], strides = [1, 1]} : vector<1x256xf32> to vector<1x96xf32>
    %cst_143 = arith.constant dense<0.000000e+00> : vector<1x96xf32>
    %481 = tpu.matmul %479, %8, %cst_143 {dimension_numbers = #tpu.dot_dimension_numbers<[1], [0], [0], [1], [0, 0, 1, 1], [], []>} : vector<1x32xf32>, vector<32x96xf32>, vector<1x96xf32> -> vector<1x96xf32>
    %482 = arith.addf %481, %9 : vector<1x96xf32>
    %483 = vector.extract_strided_slice %482 {offsets = [0, 0], sizes = [1, 32], strides = [1, 1]} : vector<1x96xf32> to vector<1x32xf32>
    %484 = vector.extract_strided_slice %480 {offsets = [0, 0], sizes = [1, 32], strides = [1, 1]} : vector<1x96xf32> to vector<1x32xf32>
    %485 = arith.addf %483, %484 : vector<1x32xf32>
    %486 = arith.negf %485 : vector<1x32xf32>
    %487 = math.exp %486 : vector<1x32xf32>
    %cst_144 = arith.constant 1.000000e+00 : f32
    %488 = vector.broadcast %cst_144 : f32 to vector<1x32xf32>
    %489 = arith.addf %488, %487 : vector<1x32xf32>
    %490 = arith.divf %488, %489 : vector<1x32xf32>
    %491 = vector.extract_strided_slice %482 {offsets = [0, 32], sizes = [1, 32], strides = [1, 1]} : vector<1x96xf32> to vector<1x32xf32>
    %492 = vector.extract_strided_slice %480 {offsets = [0, 32], sizes = [1, 32], strides = [1, 1]} : vector<1x96xf32> to vector<1x32xf32>
    %493 = arith.addf %491, %492 : vector<1x32xf32>
    %494 = arith.negf %493 : vector<1x32xf32>
    %495 = math.exp %494 : vector<1x32xf32>
    %cst_145 = arith.constant 1.000000e+00 : f32
    %496 = vector.broadcast %cst_145 : f32 to vector<1x32xf32>
    %497 = arith.addf %496, %495 : vector<1x32xf32>
    %498 = arith.divf %496, %497 : vector<1x32xf32>
    %499 = vector.extract_strided_slice %482 {offsets = [0, 64], sizes = [1, 32], strides = [1, 1]} : vector<1x96xf32> to vector<1x32xf32>
    %500 = vector.extract_strided_slice %480 {offsets = [0, 64], sizes = [1, 32], strides = [1, 1]} : vector<1x96xf32> to vector<1x32xf32>
    %501 = arith.mulf %490, %500 : vector<1x32xf32>
    %502 = arith.addf %499, %501 : vector<1x32xf32>
    %503 = math.tanh %502 : vector<1x32xf32>
    %cst_146 = arith.constant 1.000000e+00 : f32
    %504 = vector.broadcast %cst_146 : f32 to vector<1x32xf32>
    %505 = arith.subf %504, %498 : vector<1x32xf32>
    %506 = arith.mulf %505, %503 : vector<1x32xf32>
    %507 = arith.mulf %498, %444 : vector<1x32xf32>
    %508 = arith.addf %506, %507 : vector<1x32xf32>
    %cst_147 = arith.constant dense<0.000000e+00> : vector<1x64xf32>
    %509 = tpu.matmul %508, %10, %cst_147 {dimension_numbers = #tpu.dot_dimension_numbers<[1], [0], [0], [1], [0, 0, 1, 1], [], []>} : vector<1x32xf32>, vector<32x64xf32>, vector<1x64xf32> -> vector<1x64xf32>
    %510 = arith.addf %509, %11 : vector<1x64xf32>
    %cst_148 = arith.constant dense<0xFF800000> : vector<1xf32>
    %511 = vector.multi_reduction <maximumf>, %510, %cst_148 [1] : vector<1x64xf32> to vector<1xf32>
    %512 = vector.shape_cast %511 : vector<1xf32> to vector<1x1xf32>
    %513 = vector.broadcast %512 : vector<1x1xf32> to vector<1x64xf32>
    %514 = arith.subf %510, %513 : vector<1x64xf32>
    %515 = math.exp %514 : vector<1x64xf32>
    %cst_149 = arith.constant dense<0.000000e+00> : vector<1xf32>
    %516 = vector.multi_reduction <add>, %515, %cst_149 [1] : vector<1x64xf32> to vector<1xf32>
    %517 = vector.shape_cast %516 : vector<1xf32> to vector<1x1xf32>
    %518 = math.log %517 : vector<1x1xf32>
    %519 = arith.addf %518, %512 : vector<1x1xf32>
    %520 = vector.broadcast %519 : vector<1x1xf32> to vector<1x64xf32>
    %521 = arith.subf %510, %520 : vector<1x64xf32>
    %c7 = arith.constant 7 : index
    %c0_150 = arith.constant 0 : index
    %522 = vector.load %arg9[%c7, %c0_150] : memref<8x64xf32, #tpu.memory_space<vmem>>, vector<1x64xf32>
    tpu.vector_store %arg9[%c7, %c0_150], %521 {strides = array<i32>} : memref<8x64xf32, #tpu.memory_space<vmem>>, vector<1x64xf32>,
    %c7_151 = arith.constant 7 : index
    %c0_152 = arith.constant 0 : index
    %523 = vector.load %arg10[%c7_151, %c0_152] : memref<8x32xf32, #tpu.memory_space<vmem>>, vector<1x32xf32>
    tpu.vector_store %arg10[%c7_151, %c0_152], %508 {strides = array<i32>} : memref<8x32xf32, #tpu.memory_space<vmem>>, vector<1x32xf32>,
    %c7_153 = arith.constant 7 : index
    %c0_154 = arith.constant 0 : index
    %524 = vector.load %arg11[%c7_153, %c0_154] : memref<8x128xf32, #tpu.memory_space<vmem>>, vector<1x128xf32>
    tpu.vector_store %arg11[%c7_153, %c0_154], %474 {strides = array<i32>} : memref<8x128xf32, #tpu.memory_space<vmem>>, vector<1x128xf32>,
    return
  }
}

</mosaic_0001>

<llo_original>
// kernel: tpu_custom_call.1
$region0: #{tpu_custom_call.1}
  #allocation0 [shape = 'u32[]', space=smem, size = 0x4, offset = 0x4, fixed_abs, tag = 'smem constant byte address 0x4 - core index']
  #allocation1 [shape = 'u32[144,128]{1,0:T(1,128)}', space=vmem, size = 0x12000, scoped, tag = 'internal scratch']
  %s0 = inlined_call_operand.hbm [shape: f32[8,32], index: 0, kind: input, shape index: {}]
  %s1 = inlined_call_operand.vmem [shape: f32[1,32], index: 1, kind: input, shape index: {}]
  %s2 = inlined_call_operand.vmem [shape: f32[128,32], index: 2, kind: input, shape index: {}]
  %s3 = inlined_call_operand.vmem [shape: f32[64,256], index: 3, kind: input, shape index: {}]
  %s4 = inlined_call_operand.vmem [shape: f32[1,256], index: 4, kind: input, shape index: {}]
  %s5 = inlined_call_operand.vmem [shape: f32[32,96], index: 5, kind: input, shape index: {}]
  %s6 = inlined_call_operand.vmem [shape: f32[1,96], index: 6, kind: input, shape index: {}]
  %s7 = inlined_call_operand.hbm [shape: f32[32,64], index: 7, kind: input, shape index: {}]
  %s8 = inlined_call_operand.vmem [shape: f32[1,64], index: 8, kind: input, shape index: {}]
  %s9 = inlined_call_operand.hbm [shape: f32[8,64], index: 9, kind: output, shape index: {0}]
  %s10 = inlined_call_operand.hbm [shape: f32[8,32], index: 10, kind: output, shape index: {1}]
  %s11 = inlined_call_operand.hbm [shape: f32[8,128], index: 11, kind: output, shape index: {2}]
  %12 = xla_tuple %s9, %s10, %s11
  %s13 = sld [smem:[#allocation0]]
  $region70: #{tpu_custom_call.1} parent=0
    _
  %s15 = ssub.s32 1, %s13
  %s16 = scalar_select 0, %s15, %s13
  $region1: #{tpu_custom_call.1} parent=0
    #allocation2 [shape = 'u8[4096]{0}', space=vmem, size = 0x1000, scoped, tag = 'input window, operand 0, single buffered']
    #allocation3 [shape = 's32[1]{0}', space=sflag, size = 0x4, scoped, tag = 'scoped memory for tpu_custom_call.1']
    #allocation4 [shape = 's32[1]{0}', space=sflag, size = 0x4, scoped, tag = 'scoped memory for tpu_custom_call.1']
    #allocation5 [shape = 'u8[16384]{0}', space=vmem, size = 0x4000, scoped, tag = 'input window, operand 7, single buffered']
    #allocation6 [shape = 's32[1]{0}', space=sflag, size = 0x4, scoped, tag = 'scoped memory for tpu_custom_call.1']
    #allocation7 [shape = 'u8[4096]{0}', space=vmem, size = 0x1000, scoped, tag = 'output window, operand 0, single buffered']
    #allocation8 [shape = 'u8[4096]{0}', space=vmem, size = 0x1000, scoped, tag = 'output window, operand 1, single buffered']
    #allocation9 [shape = 's32[1]{0}', space=sflag, size = 0x4, scoped, tag = 'scoped memory for tpu_custom_call.1']
    #allocation10 [shape = 'u8[4096]{0}', space=vmem, size = 0x1000, scoped, tag = 'output window, operand 2, single buffered']
    %17 = vsyncpa [#allocation3], 0
    %18 = vsyncpa [#allocation6], 0
    %19 = vsyncpa [#allocation4], 0
    %20 = vsyncpa [#allocation9], 0
    // Predicated region
    $region2: #{tpu_custom_call.1} parent=1 // pred_check
      _
    $region3: #{tpu_custom_call.1} parent=1 // pred_check_branch
      %22 = sbr.rel (0) target = $region5
    $region4: #{tpu_custom_call.1} parent=1 // pred_region
      %s24 = ssub.s32 128, 128
      %25 = vsyncadd [#allocation3], %s24
      %s27 = sshll.u32 [#allocation2], 4
      %s28 = int_to_ptr.vmem [resolvable:$true] %s27
      %30 = dma.hbm_to_vmem [thread:$0]  %s0, 128, %s28, [#allocation3]
    $region5: #{tpu_custom_call.1} parent=1 // pred_fallthru
      _
    // Predicated region
    $region6: #{tpu_custom_call.1} parent=1 // pred_check
      _
    $region7: #{tpu_custom_call.1} parent=1 // pred_check_branch
      %32 = sbr.rel (0) target = $region9
    $region8: #{tpu_custom_call.1} parent=1 // pred_region
      _
    $region9: #{tpu_custom_call.1} parent=1 // pred_fallthru
      _
    // Predicated region
    $region10: #{tpu_custom_call.1} parent=1 // pred_check
      _
    $region11: #{tpu_custom_call.1} parent=1 // pred_check_branch
      %34 = sbr.rel (0) target = $region13
    $region12: #{tpu_custom_call.1} parent=1 // pred_region
      _
    $region13: #{tpu_custom_call.1} parent=1 // pred_fallthru
      _
    // Predicated region
    $region14: #{tpu_custom_call.1} parent=1 // pred_check
      _
    $region15: #{tpu_custom_call.1} parent=1 // pred_check_branch
      %36 = sbr.rel (0) target = $region17
    $region16: #{tpu_custom_call.1} parent=1 // pred_region
      _
    $region17: #{tpu_custom_call.1} parent=1 // pred_fallthru
      _
    // Predicated region
    $region18: #{tpu_custom_call.1} parent=1 // pred_check
      _
    $region19: #{tpu_custom_call.1} parent=1 // pred_check_branch
      %38 = sbr.rel (0) target = $region21
    $region20: #{tpu_custom_call.1} parent=1 // pred_region
      _
    $region21: #{tpu_custom_call.1} parent=1 // pred_fallthru
      _
    // Predicated region
    $region22: #{tpu_custom_call.1} parent=1 // pred_check
      _
    $region23: #{tpu_custom_call.1} parent=1 // pred_check_branch
      %40 = sbr.rel (0) target = $region25
    $region24: #{tpu_custom_call.1} parent=1 // pred_region
      _
    $region25: #{tpu_custom_call.1} parent=1 // pred_fallthru
      _
    // Predicated region
    $region26: #{tpu_custom_call.1} parent=1 // pred_check
      _
    $region27: #{tpu_custom_call.1} parent=1 // pred_check_branch
      %42 = sbr.rel (0) target = $region29
    $region28: #{tpu_custom_call.1} parent=1 // pred_region
      _
    $region29: #{tpu_custom_call.1} parent=1 // pred_fallthru
      _
    // Predicated region
    $region30: #{tpu_custom_call.1} parent=1 // pred_check
      _
    $region31: #{tpu_custom_call.1} parent=1 // pred_check_branch
      %44 = sbr.rel (0) target = $region33
    $region32: #{tpu_custom_call.1} parent=1 // pred_region
      %s46 = ssub.s32 512, 512
      %47 = vsyncadd [#allocation6], %s46
      %s48 = sshll.u32 [#allocation5], 4
      %s49 = int_to_ptr.vmem [resolvable:$true] %s48
      %54 = dma.hbm_to_vmem [thread:$0]  %s7, 512, %s49, [#allocation6], 128, 128, 8
    $region33: #{tpu_custom_call.1} parent=1 // pred_fallthru
      _
    // Predicated region
    $region34: #{tpu_custom_call.1} parent=1 // pred_check
      _
    $region35: #{tpu_custom_call.1} parent=1 // pred_check_branch
      %56 = sbr.rel (0) target = $region37
    $region36: #{tpu_custom_call.1} parent=1 // pred_region
      _
    $region37: #{tpu_custom_call.1} parent=1 // pred_fallthru
      _
    // Predicated region
    $region38: #{tpu_custom_call.1} parent=1 // pred_check
      _
    $region39: #{tpu_custom_call.1} parent=1 // pred_check_branch
      %58 = sbr.rel (0) target = $region41
    $region40: #{tpu_custom_call.1} parent=1 // pred_region
      %59 = dma.done [#allocation3], 128
    $region41: #{tpu_custom_call.1} parent=1 // pred_fallthru
      _
    // Predicated region
    $region42: #{tpu_custom_call.1} parent=1 // pred_check
      _
    $region43: #{tpu_custom_call.1} parent=1 // pred_check_branch
      %61 = sbr.rel (0) target = $region45
    $region44: #{tpu_custom_call.1} parent=1 // pred_region
      %62 = dma.done [#allocation6], 512
    $region45: #{tpu_custom_call.1} parent=1 // pred_fallthru
      _
    %v63 = vld [vmem:[#allocation2] sm:$0xff]
    %v64 = vld [vmem:[%s3] sm:$0xff]
    %v65 = vld [vmem:[%s3 + $0x8] sm:$0xff]
    %v66 = vld [vmem:[%s3 + $0x10] sm:$0xff]
    %v67 = vld [vmem:[%s3 + $0x18] sm:$0xff]
    %v68 = vld [vmem:[%s3 + $0x20] sm:$0xff]
    %v69 = vld [vmem:[%s3 + $0x28] sm:$0xff]
    %v70 = vld [vmem:[%s3 + $0x30] sm:$0xff]
    %v71 = vld [vmem:[%s3 + $0x38] sm:$0xff]
    %v72 = vld [vmem:[%s4] sm:$0x3]
    %v74 = vlaneseq
    %v75 = vshrl.u32 %v74, 7
    %v76 = vsub.s32 0, %v75
    %v77 = vrot.slane %v72, %v76
    %v78 = vlaneseq
    %v79 = vshrl.u32 %v78, 7
    %v80 = vsub.s32 1, %v79
    %v81 = vrot.slane %v72, %v80
    %vm84 = vcmask 261120
    %v86 = vsel %vm84, %v63, 0
    %88 = vmatprep.subr.mxu0 0.0
    %89 = vmatpush1.msra.mxu0 0.0
    %90 = vmatprep.subr.mxu0 0.0
    %91 = vmatpush1.msra.mxu0 0.0
    %92 = vmatprep.subr.mxu0 0.0
    %93 = vmatpush1.msra.mxu0 0.0
    %94 = vmatprep.subr.mxu0 0.0
    %95 = vmatpush1.msra.mxu0 0.0
    %96 = vmatprep.subr.mxu0 0.0
    %97 = vmatpush1.msra.mxu0 0.0
    %98 = vmatprep.subr.mxu0 0.0
    %99 = vmatpush1.msra.mxu0 0.0
    %100 = vmatprep.subr.mxu0 0.0
    %101 = vmatpush1.msra.mxu0 0.0
    %102 = vmatprep.subr.mxu0 0.0
    %103 = vmatpush1.msra.mxu0 0.0
    %104 = vmatprep.subr.mxu0 0.0
    %105 = vmatpush1.msra.mxu0 0.0
    %106 = vmatprep.subr.mxu0 0.0
    %107 = vmatpush1.msra.mxu0 0.0
    %108 = vmatprep.subr.mxu0 0.0
    %109 = vmatpush1.msra.mxu0 0.0
    %110 = vmatprep.subr.mxu0 0.0
    %111 = vmatpush1.msra.mxu0 0.0
    %112 = vmatprep.subr.mxu0 %v71
    %113 = vmatpush1.msra.mxu0 %v70
    %114 = vmatprep.subr.mxu0 %v69
    %115 = vmatpush1.msra.mxu0 %v68
    %116 = vmatprep.subr.mxu0 %v67
    %117 = vmatpush1.msra.mxu0 %v66
    %118 = vmatprep.subr.mxu0 %v65
    %119 = vmatpush1.msra.mxu0 %v64
    %120 = vmatprep.subr.mxu0 0.0
    %121 = vmatpush2.msra.mxu0 0.0
    %122 = vmatprep.subr.mxu0 0.0
    %123 = vmatpush2.msra.mxu0 0.0
    %124 = vmatprep.subr.mxu0 0.0
    %125 = vmatpush2.msra.mxu0 0.0
    %126 = vmatprep.subr.mxu0 0.0
    %127 = vmatpush2.msra.mxu0 0.0
    %128 = vmatprep.subr.mxu0 0.0
    %129 = vmatpush2.msra.mxu0 0.0
    %130 = vmatprep.subr.mxu0 0.0
    %131 = vmatpush2.msra.mxu0 0.0
    %132 = vmatprep.subr.mxu0 0.0
    %133 = vmatpush2.msra.mxu0 0.0
    %134 = vmatprep.subr.mxu0 0.0
    %135 = vmatpush2.msra.mxu0 0.0
    %136 = vmatprep.subr.mxu0 0.0
    %137 = vmatpush2.msra.mxu0 0.0
    %138 = vmatprep.subr.mxu0 0.0
    %139 = vmatpush2.msra.mxu0 0.0
    %140 = vmatprep.subr.mxu0 0.0
    %141 = vmatpush2.msra.mxu0 0.0
    %142 = vmatprep.subr.mxu0 0.0
    %143 = vmatpush2.msra.mxu0 0.0
    %144 = vmatprep.subr.mxu0 0.0
    %145 = vmatpush2.msra.mxu0 0.0
    %146 = vmatprep.subr.mxu0 0.0
    %147 = vmatpush2.msra.mxu0 0.0
    %148 = vmatprep.subr.mxu0 0.0
    %149 = vmatpush2.msra.mxu0 0.0
    %150 = vmatprep.subr.mxu0 0.0
    %151 = vmatpush2.msra.mxu0 0.0
    %152 = vmatprep.mubr.f32.mxu0 0.0
    %153 = vmatmul.mubr.f32.gmra.mxu0 %v86
    %v154 = vpop.f32.mrf.mxu0
    %v155 = vadd.f32 %v77, %v154
    %v156 = vpop.f32.mrf.mxu0
    %v157 = vadd.f32 %v81, %v156
    %158 = vdwg.mxu0
    %v159 = vld [vmem:[%s2] sm:$0xff]
    %v160 = vld [vmem:[%s2 + $0x8] sm:$0xff]
    %v161 = vld [vmem:[%s2 + $0x10] sm:$0xff]
    %v162 = vld [vmem:[%s2 + $0x18] sm:$0xff]
    %v163 = vld [vmem:[%s2 + $0x20] sm:$0xff]
    %v164 = vld [vmem:[%s2 + $0x28] sm:$0xff]
    %v165 = vld [vmem:[%s2 + $0x30] sm:$0xff]
    %v166 = vld [vmem:[%s2 + $0x38] sm:$0xff]
    %v167 = vld [vmem:[%s2 + $0x40] sm:$0xff]
    %v168 = vld [vmem:[%s2 + $0x48] sm:$0xff]
    %v169 = vld [vmem:[%s2 + $0x50] sm:$0xff]
    %v170 = vld [vmem:[%s2 + $0x58] sm:$0xff]
    %v171 = vld [vmem:[%s2 + $0x60] sm:$0xff]
    %v172 = vld [vmem:[%s2 + $0x68] sm:$0xff]
    %v173 = vld [vmem:[%s2 + $0x70] sm:$0xff]
    %v174 = vld [vmem:[%s2 + $0x78] sm:$0xff]
    %v175 = vld [vmem:[%s3 + $0x40] sm:$0xff]
    %v176 = vld [vmem:[%s3 + $0x48] sm:$0xff]
    %v177 = vld [vmem:[%s3 + $0x50] sm:$0xff]
    %v178 = vld [vmem:[%s3 + $0x58] sm:$0xff]
    %v179 = vld [vmem:[%s3 + $0x60] sm:$0xff]
    %v180 = vld [vmem:[%s3 + $0x68] sm:$0xff]
    %v181 = vld [vmem:[%s3 + $0x70] sm:$0xff]
    %v182 = vld [vmem:[%s3 + $0x78] sm:$0xff]
    %v183 = vld [vmem:[%s5] sm:$0xff]
    %v184 = vld [vmem:[%s5 + $0x8] sm:$0xff]
    %v185 = vld [vmem:[%s5 + $0x10] sm:$0xff]
    %v186 = vld [vmem:[%s5 + $0x18] sm:$0xff]
    %v187 = vld [vmem:[%s6] sm:$0x1]
    %v188 = vld [vmem:[#allocation5] sm:$0xff]
    %v189 = vld [vmem:[#allocation5 + $0x8] sm:$0xff]
    %v190 = vld [vmem:[#allocation5 + $0x10] sm:$0xff]
    %v191 = vld [vmem:[#allocation5 + $0x18] sm:$0xff]
    %v192 = vld [vmem:[%s8] sm:$0x1]
    %v193 = vld [vmem:[%s1] sm:$0x1]
    %v195 = vsel %vm84, %v193, 0
    %197 = vmatprep.subr.mxu0 0.0
    %198 = vmatpush1.msra.mxu0 0.0
    %199 = vmatprep.subr.mxu0 0.0
    %200 = vmatpush1.msra.mxu0 0.0
    %201 = vmatprep.subr.mxu0 0.0
    %202 = vmatpush1.msra.mxu0 0.0
    %203 = vmatprep.subr.mxu0 0.0
    %204 = vmatpush1.msra.mxu0 0.0
    %205 = vmatprep.subr.mxu0 0.0
    %206 = vmatpush1.msra.mxu0 0.0
    %207 = vmatprep.subr.mxu0 0.0
    %208 = vmatpush1.msra.mxu0 0.0
    %209 = vmatprep.subr.mxu0 0.0
    %210 = vmatpush1.msra.mxu0 0.0
    %211 = vmatprep.subr.mxu0 0.0
    %212 = vmatpush1.msra.mxu0 0.0
    %213 = vmatprep.subr.mxu0 0.0
    %214 = vmatpush1.msra.mxu0 0.0
    %215 = vmatprep.subr.mxu0 0.0
    %216 = vmatpush1.msra.mxu0 0.0
    %217 = vmatprep.subr.mxu0 0.0
    %218 = vmatpush1.msra.mxu0 0.0
    %219 = vmatprep.subr.mxu0 0.0
    %220 = vmatpush1.msra.mxu0 0.0
    %221 = vmatprep.subr.mxu0 %v182
    %222 = vmatpush1.msra.mxu0 %v181
    %223 = vmatprep.subr.mxu0 %v180
    %224 = vmatpush1.msra.mxu0 %v179
    %225 = vmatprep.subr.mxu0 %v178
    %226 = vmatpush1.msra.mxu0 %v177
    %227 = vmatprep.subr.mxu0 %v176
    %228 = vmatpush1.msra.mxu0 %v175
    %229 = vmatprep.subr.mxu0 0.0
    %230 = vmatpush2.msra.mxu0 0.0
    %231 = vmatprep.subr.mxu0 0.0
    %232 = vmatpush2.msra.mxu0 0.0
    %233 = vmatprep.subr.mxu0 0.0
    %234 = vmatpush2.msra.mxu0 0.0
    %235 = vmatprep.subr.mxu0 0.0
    %236 = vmatpush2.msra.mxu0 0.0
    %237 = vmatprep.subr.mxu0 0.0
    %238 = vmatpush2.msra.mxu0 0.0
    %239 = vmatprep.subr.mxu0 0.0
    %240 = vmatpush2.msra.mxu0 0.0
    %241 = vmatprep.subr.mxu0 0.0
    %242 = vmatpush2.msra.mxu0 0.0
    %243 = vmatprep.subr.mxu0 0.0
    %244 = vmatpush2.msra.mxu0 0.0
    %245 = vmatprep.subr.mxu0 0.0
    %246 = vmatpush2.msra.mxu0 0.0
    %247 = vmatprep.subr.mxu0 0.0
    %248 = vmatpush2.msra.mxu0 0.0
    %249 = vmatprep.subr.mxu0 0.0
    %250 = vmatpush2.msra.mxu0 0.0
    %251 = vmatprep.subr.mxu0 0.0
    %252 = vmatpush2.msra.mxu0 0.0
    %253 = vmatprep.subr.mxu0 0.0
    %254 = vmatpush2.msra.mxu0 0.0
    %255 = vmatprep.subr.mxu0 0.0
    %256 = vmatpush2.msra.mxu0 0.0
    %257 = vmatprep.subr.mxu0 0.0
    %258 = vmatpush2.msra.mxu0 0.0
    %259 = vmatprep.subr.mxu0 0.0
    %260 = vmatpush2.msra.mxu0 0.0
    %261 = vmatprep.mubr.f32.mxu0 0.0
    %262 = vmatmul.mubr.f32.gmra.mxu0 %v195
    %v263 = vpop.f32.mrf.mxu0
    %v264 = vadd.f32 0.0, %v263
    %v265 = vpop.f32.mrf.mxu0
    %v266 = vadd.f32 0.0, %v265
    %267 = vdwg.mxu0
    %v268 = vadd.f32 %v155, %v264
    %v269 = vadd.f32 %v157, %v266
    %vm270 = vcmask 1040384
    %v271 = vsel %vm270, %v268, -inf
    %272 = vmax.xlane.f32.xlu0 %v271
    %v273 = vpop.xlane.xlu0 %272
    %v274 = vsub.f32 %v268, %v273
    %v275 = vmul.f32 %v274, 1.442695
    %v276 = vpow.pop %v275
    %v277 = vsel %vm270, %v276, 0.0
    %278 = vadd.xlane.f32.xlu0 %v277
    %v279 = vpop.xlane.xlu0 %278
    %v280 = vrcp.pop %v279
    %v281 = vmul.f32 %v276, %v280
    %282 = vmatprep.subr.mxu0 0.0
    %283 = vmatpush1.msra.mxu0 %v174
    %284 = vmatprep.subr.mxu0 0.0
    %285 = vmatpush1.msra.mxu0 %v173
    %286 = vmatprep.subr.mxu0 0.0
    %287 = vmatpush1.msra.mxu0 %v172
    %288 = vmatprep.subr.mxu0 0.0
    %289 = vmatpush1.msra.mxu0 %v171
    %290 = vmatprep.subr.mxu0 0.0
    %291 = vmatpush1.msra.mxu0 %v170
    %292 = vmatprep.subr.mxu0 0.0
    %293 = vmatpush1.msra.mxu0 %v169
    %294 = vmatprep.subr.mxu0 0.0
    %295 = vmatpush1.msra.mxu0 %v168
    %296 = vmatprep.subr.mxu0 0.0
    %297 = vmatpush1.msra.mxu0 %v167
    %298 = vmatprep.subr.mxu0 0.0
    %299 = vmatpush1.msra.mxu0 %v166
    %300 = vmatprep.subr.mxu0 0.0
    %301 = vmatpush1.msra.mxu0 %v165
    %302 = vmatprep.subr.mxu0 0.0
    %303 = vmatpush1.msra.mxu0 %v164
    %304 = vmatprep.subr.mxu0 0.0
    %305 = vmatpush1.msra.mxu0 %v163
    %306 = vmatprep.subr.mxu0 0.0
    %307 = vmatpush1.msra.mxu0 %v162
    %308 = vmatprep.subr.mxu0 0.0
    %309 = vmatpush1.msra.mxu0 %v161
    %310 = vmatprep.subr.mxu0 0.0
    %311 = vmatpush1.msra.mxu0 %v160
    %312 = vmatprep.subr.mxu0 0.0
    %313 = vmatpush1.msra.mxu0 %v159
    %314 = vmatprep.subr.mxu0 0.0
    %315 = vmatpush2.msra.mxu0 0.0
    %316 = vmatprep.subr.mxu0 0.0
    %317 = vmatpush2.msra.mxu0 0.0
    %318 = vmatprep.subr.mxu0 0.0
    %319 = vmatpush2.msra.mxu0 0.0
    %320 = vmatprep.subr.mxu0 0.0
    %321 = vmatpush2.msra.mxu0 0.0
    %322 = vmatprep.subr.mxu0 0.0
    %323 = vmatpush2.msra.mxu0 0.0
    %324 = vmatprep.subr.mxu0 0.0
    %325 = vmatpush2.msra.mxu0 0.0
    %326 = vmatprep.subr.mxu0 0.0
    %327 = vmatpush2.msra.mxu0 0.0
    %328 = vmatprep.subr.mxu0 0.0
    %329 = vmatpush2.msra.mxu0 0.0
    %330 = vmatprep.subr.mxu0 0.0
    %331 = vmatpush2.msra.mxu0 0.0
    %332 = vmatprep.subr.mxu0 0.0
    %333 = vmatpush2.msra.mxu0 0.0
    %334 = vmatprep.subr.mxu0 0.0
    %335 = vmatpush2.msra.mxu0 0.0
    %336 = vmatprep.subr.mxu0 0.0
    %337 = vmatpush2.msra.mxu0 0.0
    %338 = vmatprep.subr.mxu0 0.0
    %339 = vmatpush2.msra.mxu0 0.0
    %340 = vmatprep.subr.mxu0 0.0
    %341 = vmatpush2.msra.mxu0 0.0
    %342 = vmatprep.subr.mxu0 0.0
    %343 = vmatpush2.msra.mxu0 0.0
    %344 = vmatprep.subr.mxu0 0.0
    %345 = vmatpush2.msra.mxu0 0.0
    %346 = vmatprep.mubr.f32.mxu0 0.0
    %347 = vmatmul.mubr.f32.gmra.mxu0 %v281
    %v348 = vpop.f32.mrf.mxu0
    %v349 = vadd.f32 0.0, %v348
    %v350 = vpop.f32.mrf.mxu0
    %351 = vdwg.mxu0
    %v352 = vadd.f32 %v269, %v349
    %v353 = vmax.f32 %v352, 0.0
    %v355 = vsel %vm84, %v353, 0
    %357 = vmatprep.subr.mxu0 0.0
    %358 = vmatpush1.msra.mxu0 0.0
    %359 = vmatprep.subr.mxu0 0.0
    %360 = vmatpush1.msra.mxu0 0.0
    %361 = vmatprep.subr.mxu0 0.0
    %362 = vmatpush1.msra.mxu0 0.0
    %363 = vmatprep.subr.mxu0 0.0
    %364 = vmatpush1.msra.mxu0 0.0
    %365 = vmatprep.subr.mxu0 0.0
    %366 = vmatpush1.msra.mxu0 0.0
    %367 = vmatprep.subr.mxu0 0.0
    %368 = vmatpush1.msra.mxu0 0.0
    %369 = vmatprep.subr.mxu0 0.0
    %370 = vmatpush1.msra.mxu0 0.0
    %371 = vmatprep.subr.mxu0 0.0
    %372 = vmatpush1.msra.mxu0 0.0
    %373 = vmatprep.subr.mxu0 0.0
    %374 = vmatpush1.msra.mxu0 0.0
    %375 = vmatprep.subr.mxu0 0.0
    %376 = vmatpush1.msra.mxu0 0.0
    %377 = vmatprep.subr.mxu0 0.0
    %378 = vmatpush1.msra.mxu0 0.0
    %379 = vmatprep.subr.mxu0 0.0
    %380 = vmatpush1.msra.mxu0 0.0
    %381 = vmatprep.subr.mxu0 0.0
    %382 = vmatpush1.msra.mxu0 %v186
    %383 = vmatprep.subr.mxu0 0.0
    %384 = vmatpush1.msra.mxu0 %v185
    %385 = vmatprep.subr.mxu0 0.0
    %386 = vmatpush1.msra.mxu0 %v184
    %387 = vmatprep.subr.mxu0 0.0
    %388 = vmatpush1.msra.mxu0 %v183
    %389 = vmatprep.subr.mxu0 0.0
    %390 = vmatpush2.msra.mxu0 0.0
    %391 = vmatprep.subr.mxu0 0.0
    %392 = vmatpush2.msra.mxu0 0.0
    %393 = vmatprep.subr.mxu0 0.0
    %394 = vmatpush2.msra.mxu0 0.0
    %395 = vmatprep.subr.mxu0 0.0
    %396 = vmatpush2.msra.mxu0 0.0
    %397 = vmatprep.subr.mxu0 0.0
    %398 = vmatpush2.msra.mxu0 0.0
    %399 = vmatprep.subr.mxu0 0.0
    %400 = vmatpush2.msra.mxu0 0.0
    %401 = vmatprep.subr.mxu0 0.0
    %402 = vmatpush2.msra.mxu0 0.0
    %403 = vmatprep.subr.mxu0 0.0
    %404 = vmatpush2.msra.mxu0 0.0
    %405 = vmatprep.subr.mxu0 0.0
    %406 = vmatpush2.msra.mxu0 0.0
    %407 = vmatprep.subr.mxu0 0.0
    %408 = vmatpush2.msra.mxu0 0.0
    %409 = vmatprep.subr.mxu0 0.0
    %410 = vmatpush2.msra.mxu0 0.0
    %411 = vmatprep.subr.mxu0 0.0
    %412 = vmatpush2.msra.mxu0 0.0
    %413 = vmatprep.subr.mxu0 0.0
    %414 = vmatpush2.msra.mxu0 0.0
    %415 = vmatprep.subr.mxu0 0.0
    %416 = vmatpush2.msra.mxu0 0.0
    %417 = vmatprep.subr.mxu0 0.0
    %418 = vmatpush2.msra.mxu0 0.0
    %419 = vmatprep.subr.mxu0 0.0
    %420 = vmatpush2.msra.mxu0 0.0
    %421 = vmatprep.mubr.f32.mxu0 0.0
    %422 = vmatmul.mubr.f32.gmra.mxu0 %v355
    %v423 = vpop.f32.mrf.mxu0
    %v424 = vadd.f32 %v187, %v423
    %v425 = vpop.f32.mrf.mxu0
    %426 = vdwg.mxu0
    %428 = vrot.lane.b32.xlu0 %v269, 96
    %v429 = vpop.permute.xlu0 %428
    %v431 = vadd.f32 %v424, %v429
    %v432 = vxor.u32 %v431, 2147483648
    %v433 = vmul.f32 %v432, 1.442695
    %v434 = vpow.pop %v433
    %v435 = vadd.f32 %v434, 1.0
    %v436 = vrcp.pop %v435
    %v437 = vmul.f32 1.0, %v436
    %438 = vrot.lane.b32.xlu0 %v269, 32
    %v439 = vpop.permute.xlu0 %438
    %v441 = vmul.f32 %v437, %v439
    %443 = vrot.lane.b32.xlu0 %v441, 64
    %v444 = vpop.permute.xlu0 %443
    %v446 = vadd.f32 %v424, %v444
    %v447 = vtanh.pop %v446
    %v448 = vsub.f32 1.0, %v437
    %450 = vrot.lane.b32.xlu0 %v447, 96
    %v451 = vpop.permute.xlu0 %450
    %v453 = vmul.f32 %v448, %v451
    %v454 = vlaneseq
    %v455 = vshrl.u32 %v454, 7
    %v456 = vsub.s32 0, %v455
    %v457 = vrot.slane %v193, %v456
    %458 = vrot.lane.b32.xlu0 %v457, 32
    %v459 = vpop.permute.xlu0 %458
    %v461 = vmul.f32 %v437, %v459
    %v462 = vadd.f32 %v453, %v461
    %464 = vrot.lane.b32.xlu0 %v462, 96
    %v465 = vpop.permute.xlu0 %464
    %v466 = vsel %vm84, %v465, 0
    %468 = vmatprep.subr.mxu0 0.0
    %469 = vmatpush1.msra.mxu0 0.0
    %470 = vmatprep.subr.mxu0 0.0
    %471 = vmatpush1.msra.mxu0 0.0
    %472 = vmatprep.subr.mxu0 0.0
    %473 = vmatpush1.msra.mxu0 0.0
    %474 = vmatprep.subr.mxu0 0.0
    %475 = vmatpush1.msra.mxu0 0.0
    %476 = vmatprep.subr.mxu0 0.0
    %477 = vmatpush1.msra.mxu0 0.0
    %478 = vmatprep.subr.mxu0 0.0
    %479 = vmatpush1.msra.mxu0 0.0
    %480 = vmatprep.subr.mxu0 0.0
    %481 = vmatpush1.msra.mxu0 0.0
    %482 = vmatprep.subr.mxu0 0.0
    %483 = vmatpush1.msra.mxu0 0.0
    %484 = vmatprep.subr.mxu0 0.0
    %485 = vmatpush1.msra.mxu0 0.0
    %486 = vmatprep.subr.mxu0 0.0
    %487 = vmatpush1.msra.mxu0 0.0
    %488 = vmatprep.subr.mxu0 0.0
    %489 = vmatpush1.msra.mxu0 0.0
    %490 = vmatprep.subr.mxu0 0.0
    %491 = vmatpush1.msra.mxu0 0.0
    %492 = vmatprep.subr.mxu0 0.0
    %493 = vmatpush1.msra.mxu0 %v191
    %494 = vmatprep.subr.mxu0 0.0
    %495 = vmatpush1.msra.mxu0 %v190
    %496 = vmatprep.subr.mxu0 0.0
    %497 = vmatpush1.msra.mxu0 %v189
    %498 = vmatprep.subr.mxu0 0.0
    %499 = vmatpush1.msra.mxu0 %v188
    %500 = vmatprep.subr.mxu0 0.0
    %501 = vmatpush2.msra.mxu0 0.0
    %502 = vmatprep.subr.mxu0 0.0
    %503 = vmatpush2.msra.mxu0 0.0
    %504 = vmatprep.subr.mxu0 0.0
    %505 = vmatpush2.msra.mxu0 0.0
    %506 = vmatprep.subr.mxu0 0.0
    %507 = vmatpush2.msra.mxu0 0.0
    %508 = vmatprep.subr.mxu0 0.0
    %509 = vmatpush2.msra.mxu0 0.0
    %510 = vmatprep.subr.mxu0 0.0
    %511 = vmatpush2.msra.mxu0 0.0
    %512 = vmatprep.subr.mxu0 0.0
    %513 = vmatpush2.msra.mxu0 0.0
    %514 = vmatprep.subr.mxu0 0.0
    %515 = vmatpush2.msra.mxu0 0.0
    %516 = vmatprep.subr.mxu0 0.0
    %517 = vmatpush2.msra.mxu0 0.0
    %518 = vmatprep.subr.mxu0 0.0
    %519 = vmatpush2.msra.mxu0 0.0
    %520 = vmatprep.subr.mxu0 0.0
    %521 = vmatpush2.msra.mxu0 0.0
    %522 = vmatprep.subr.mxu0 0.0
    %523 = vmatpush2.msra.mxu0 0.0
    %524 = vmatprep.subr.mxu0 0.0
    %525 = vmatpush2.msra.mxu0 0.0
    %526 = vmatprep.subr.mxu0 0.0
    %527 = vmatpush2.msra.mxu0 0.0
    %528 = vmatprep.subr.mxu0 0.0
    %529 = vmatpush2.msra.mxu0 0.0
    %530 = vmatprep.subr.mxu0 0.0
    %531 = vmatpush2.msra.mxu0 0.0
    %532 = vmatprep.mubr.f32.mxu0 0.0
    %533 = vmatmul.mubr.f32.gmra.mxu0 %v466
    %v534 = vpop.f32.mrf.mxu0
    %v535 = vadd.f32 %v192, %v534
    %v536 = vpop.f32.mrf.mxu0
    %537 = vdwg.mxu0
    %vm538 = vcmask 516096
    %v539 = vsel %vm538, %v535, -inf
    %540 = vmax.xlane.f32.xlu0 %v539
    %v541 = vpop.xlane.xlu0 %540
    %v542 = vsub.f32 %v535, %v541
    %v543 = vmul.f32 %v542, 1.442695
    %v544 = vpow.pop %v543
    %v545 = vsel %vm538, %v544, 0.0
    %546 = vadd.xlane.f32.xlu0 %v545
    %v547 = vpop.xlane.xlu0 %546
    %v548 = vlog2.pop %v547
    %v549 = vmul.f32 %v548, 0.6931472
    %v550 = vadd.f32 %v549, %v541
    %v551 = vsub.f32 %v535, %v550
    %552 = vst.msk [vmem:[#allocation7] sm:$0x1] %vm538, %v551
    %vm554 = vcmask 253952
    %555 = vst.msk [vmem:[#allocation8] sm:$0x1] %vm554, %v465
    %556 = vst [vmem:[#allocation10] sm:$0x1] %v281
    %557 = vmatprep.subr.mxu0 0.0
    %558 = vmatpush1.msra.mxu0 0.0
    %559 = vmatprep.subr.mxu0 0.0
    %560 = vmatpush1.msra.mxu0 0.0
    %561 = vmatprep.subr.mxu0 0.0
    %562 = vmatpush1.msra.mxu0 0.0
    %563 = vmatprep.subr.mxu0 0.0
    %564 = vmatpush1.msra.mxu0 0.0
    %565 = vmatprep.subr.mxu0 0.0
    %566 = vmatpush1.msra.mxu0 0.0
    %567 = vmatprep.subr.mxu0 0.0
    %568 = vmatpush1.msra.mxu0 0.0
    %569 = vmatprep.subr.mxu0 0.0
    %570 = vmatpush1.msra.mxu0 0.0
    %571 = vmatprep.subr.mxu0 0.0
    %572 = vmatpush1.msra.mxu0 0.0
    %573 = vmatprep.subr.mxu0 0.0
    %574 = vmatpush1.msra.mxu0 0.0
    %575 = vmatprep.subr.mxu0 0.0
    %576 = vmatpush1.msra.mxu0 0.0
    %577 = vmatprep.subr.mxu0 0.0
    %578 = vmatpush1.msra.mxu0 0.0
    %579 = vmatprep.subr.mxu0 0.0
    %580 = vmatpush1.msra.mxu0 0.0
    %581 = vmatprep.subr.mxu0 %v182
    %582 = vmatpush1.msra.mxu0 %v181
    %583 = vmatprep.subr.mxu0 %v180
    %584 = vmatpush1.msra.mxu0 %v179
    %585 = vmatprep.subr.mxu0 %v178
    %586 = vmatpush1.msra.mxu0 %v177
    %587 = vmatprep.subr.mxu0 %v176
    %588 = vmatpush1.msra.mxu0 %v175
    %589 = vmatprep.subr.mxu0 0.0
    %590 = vmatpush2.msra.mxu0 0.0
    %591 = vmatprep.subr.mxu0 0.0
    %592 = vmatpush2.msra.mxu0 0.0
    %593 = vmatprep.subr.mxu0 0.0
    %594 = vmatpush2.msra.mxu0 0.0
    %595 = vmatprep.subr.mxu0 0.0
    %596 = vmatpush2.msra.mxu0 0.0
    %597 = vmatprep.subr.mxu0 0.0
    %598 = vmatpush2.msra.mxu0 0.0
    %599 = vmatprep.subr.mxu0 0.0
    %600 = vmatpush2.msra.mxu0 0.0
    %601 = vmatprep.subr.mxu0 0.0
    %602 = vmatpush2.msra.mxu0 0.0
    %603 = vmatprep.subr.mxu0 0.0
    %604 = vmatpush2.msra.mxu0 0.0
    %605 = vmatprep.subr.mxu0 0.0
    %606 = vmatpush2.msra.mxu0 0.0
    %607 = vmatprep.subr.mxu0 0.0
    %608 = vmatpush2.msra.mxu0 0.0
    %609 = vmatprep.subr.mxu0 0.0
    %610 = vmatpush2.msra.mxu0 0.0
    %611 = vmatprep.subr.mxu0 0.0
    %612 = vmatpush2.msra.mxu0 0.0
    %613 = vmatprep.subr.mxu0 0.0
    %614 = vmatpush2.msra.mxu0 0.0
    %615 = vmatprep.subr.mxu0 0.0
    %616 = vmatpush2.msra.mxu0 0.0
    %617 = vmatprep.subr.mxu0 0.0
    %618 = vmatpush2.msra.mxu0 0.0
    %619 = vmatprep.subr.mxu0 0.0
    %620 = vmatpush2.msra.mxu0 0.0
    %621 = vmatprep.mubr.f32.mxu0 0.0
    %622 = vmatmul.mubr.f32.gmra.mxu0 %v466
    %v623 = vpop.f32.mrf.mxu0
    %v624 = vadd.f32 0.0, %v623
    %v625 = vpop.f32.mrf.mxu0
    %v626 = vadd.f32 0.0, %v625
    %627 = vdwg.mxu0
    %v630 = vrot.slane %v624, 7
    %v631 = vrot.slane %v626, 7
    %v634 = vadd.f32 %v155, %v630
    %v635 = vadd.f32 %v157, %v631
    %vm636 = vcmask 1041409
    %v637 = vsel %vm636, %v634, -inf
    %638 = vmax.xlane.f32.xlu0 %v637
    %v639 = vpop.xlane.xlu0 %638
    %v640 = vsub.f32 %v634, %v639
    %v641 = vmul.f32 %v640, 1.442695
    %v642 = vpow.pop %v641
    %v643 = vsel %vm636, %v642, 0.0
    %644 = vadd.xlane.f32.xlu0 %v643
    %v645 = vpop.xlane.xlu0 %644
    %v646 = vrcp.pop %v645
    %v647 = vmul.f32 %v642, %v646
    %v649 = vrot.slane %v647, 1
    %651 = vmatprep.subr.mxu0 0.0
    %652 = vmatpush1.msra.mxu0 %v174
    %653 = vmatprep.subr.mxu0 0.0
    %654 = vmatpush1.msra.mxu0 %v173
    %655 = vmatprep.subr.mxu0 0.0
    %656 = vmatpush1.msra.mxu0 %v172
    %657 = vmatprep.subr.mxu0 0.0
    %658 = vmatpush1.msra.mxu0 %v171
    %659 = vmatprep.subr.mxu0 0.0
    %660 = vmatpush1.msra.mxu0 %v170
    %661 = vmatprep.subr.mxu0 0.0
    %662 = vmatpush1.msra.mxu0 %v169
    %663 = vmatprep.subr.mxu0 0.0
    %664 = vmatpush1.msra.mxu0 %v168
    %665 = vmatprep.subr.mxu0 0.0
    %666 = vmatpush1.msra.mxu0 %v167
    %667 = vmatprep.subr.mxu0 0.0
    %668 = vmatpush1.msra.mxu0 %v166
    %669 = vmatprep.subr.mxu0 0.0
    %670 = vmatpush1.msra.mxu0 %v165
    %671 = vmatprep.subr.mxu0 0.0
    %672 = vmatpush1.msra.mxu0 %v164
    %673 = vmatprep.subr.mxu0 0.0
    %674 = vmatpush1.msra.mxu0 %v163
    %675 = vmatprep.subr.mxu0 0.0
    %676 = vmatpush1.msra.mxu0 %v162
    %677 = vmatprep.subr.mxu0 0.0
    %678 = vmatpush1.msra.mxu0 %v161
    %679 = vmatprep.subr.mxu0 0.0
    %680 = vmatpush1.msra.mxu0 %v160
    %681 = vmatprep.subr.mxu0 0.0
    %682 = vmatpush1.msra.mxu0 %v159
    %683 = vmatprep.subr.mxu0 0.0
    %684 = vmatpush2.msra.mxu0 0.0
    %685 = vmatprep.subr.mxu0 0.0
    %686 = vmatpush2.msra.mxu0 0.0
    %687 = vmatprep.subr.mxu0 0.0
    %688 = vmatpush2.msra.mxu0 0.0
    %689 = vmatprep.subr.mxu0 0.0
    %690 = vmatpush2.msra.mxu0 0.0
    %691 = vmatprep.subr.mxu0 0.0
    %692 = vmatpush2.msra.mxu0 0.0
    %693 = vmatprep.subr.mxu0 0.0
    %694 = vmatpush2.msra.mxu0 0.0
    %695 = vmatprep.subr.mxu0 0.0
    %696 = vmatpush2.msra.mxu0 0.0
    %697 = vmatprep.subr.mxu0 0.0
    %698 = vmatpush2.msra.mxu0 0.0
    %699 = vmatprep.subr.mxu0 0.0
    %700 = vmatpush2.msra.mxu0 0.0
    %701 = vmatprep.subr.mxu0 0.0
    %702 = vmatpush2.msra.mxu0 0.0
    %703 = vmatprep.subr.mxu0 0.0
    %704 = vmatpush2.msra.mxu0 0.0
    %705 = vmatprep.subr.mxu0 0.0
    %706 = vmatpush2.msra.mxu0 0.0
    %707 = vmatprep.subr.mxu0 0.0
    %708 = vmatpush2.msra.mxu0 0.0
    %709 = vmatprep.subr.mxu0 0.0
    %710 = vmatpush2.msra.mxu0 0.0
    %711 = vmatprep.subr.mxu0 0.0
    %712 = vmatpush2.msra.mxu0 0.0
    %713 = vmatprep.subr.mxu0 0.0
    %714 = vmatpush2.msra.mxu0 0.0
    %715 = vmatprep.mubr.f32.mxu0 0.0
    %716 = vmatmul.mubr.f32.gmra.mxu0 %v649
    %v717 = vpop.f32.mrf.mxu0
    %v718 = vadd.f32 0.0, %v717
    %v719 = vpop.f32.mrf.mxu0
    %720 = vdwg.mxu0
    %v722 = vrot.slane %v718, 7
    %v724 = vadd.f32 %v635, %v722
    %v725 = vmax.f32 %v724, 0.0
    %v727 = vrot.slane %v725, 1
    %v728 = vsel %vm84, %v727, 0
    %730 = vmatprep.subr.mxu0 0.0
    %731 = vmatpush1.msra.mxu0 0.0
    %732 = vmatprep.subr.mxu0 0.0
    %733 = vmatpush1.msra.mxu0 0.0
    %734 = vmatprep.subr.mxu0 0.0
    %735 = vmatpush1.msra.mxu0 0.0
    %736 = vmatprep.subr.mxu0 0.0
    %737 = vmatpush1.msra.mxu0 0.0
    %738 = vmatprep.subr.mxu0 0.0
    %739 = vmatpush1.msra.mxu0 0.0
    %740 = vmatprep.subr.mxu0 0.0
    %741 = vmatpush1.msra.mxu0 0.0
    %742 = vmatprep.subr.mxu0 0.0
    %743 = vmatpush1.msra.mxu0 0.0
    %744 = vmatprep.subr.mxu0 0.0
    %745 = vmatpush1.msra.mxu0 0.0
    %746 = vmatprep.subr.mxu0 0.0
    %747 = vmatpush1.msra.mxu0 0.0
    %748 = vmatprep.subr.mxu0 0.0
    %749 = vmatpush1.msra.mxu0 0.0
    %750 = vmatprep.subr.mxu0 0.0
    %751 = vmatpush1.msra.mxu0 0.0
    %752 = vmatprep.subr.mxu0 0.0
    %753 = vmatpush1.msra.mxu0 0.0
    %754 = vmatprep.subr.mxu0 0.0
    %755 = vmatpush1.msra.mxu0 %v186
    %756 = vmatprep.subr.mxu0 0.0
    %757 = vmatpush1.msra.mxu0 %v185
    %758 = vmatprep.subr.mxu0 0.0
    %759 = vmatpush1.msra.mxu0 %v184
    %760 = vmatprep.subr.mxu0 0.0
    %761 = vmatpush1.msra.mxu0 %v183
    %762 = vmatprep.subr.mxu0 0.0
    %763 = vmatpush2.msra.mxu0 0.0
    %764 = vmatprep.subr.mxu0 0.0
    %765 = vmatpush2.msra.mxu0 0.0
    %766 = vmatprep.subr.mxu0 0.0
    %767 = vmatpush2.msra.mxu0 0.0
    %768 = vmatprep.subr.mxu0 0.0
    %769 = vmatpush2.msra.mxu0 0.0
    %770 = vmatprep.subr.mxu0 0.0
    %771 = vmatpush2.msra.mxu0 0.0
    %772 = vmatprep.subr.mxu0 0.0
    %773 = vmatpush2.msra.mxu0 0.0
    %774 = vmatprep.subr.mxu0 0.0
    %775 = vmatpush2.msra.mxu0 0.0
    %776 = vmatprep.subr.mxu0 0.0
    %777 = vmatpush2.msra.mxu0 0.0
    %778 = vmatprep.subr.mxu0 0.0
    %779 = vmatpush2.msra.mxu0 0.0
    %780 = vmatprep.subr.mxu0 0.0
    %781 = vmatpush2.msra.mxu0 0.0
    %782 = vmatprep.subr.mxu0 0.0
    %783 = vmatpush2.msra.mxu0 0.0
    %784 = vmatprep.subr.mxu0 0.0
    %785 = vmatpush2.msra.mxu0 0.0
    %786 = vmatprep.subr.mxu0 0.0
    %787 = vmatpush2.msra.mxu0 0.0
    %788 = vmatprep.subr.mxu0 0.0
    %789 = vmatpush2.msra.mxu0 0.0
    %790 = vmatprep.subr.mxu0 0.0
    %791 = vmatpush2.msra.mxu0 0.0
    %792 = vmatprep.subr.mxu0 0.0
    %793 = vmatpush2.msra.mxu0 0.0
    %794 = vmatprep.mubr.f32.mxu0 0.0
    %795 = vmatmul.mubr.f32.gmra.mxu0 %v728
    %v796 = vpop.f32.mrf.mxu0
    %v797 = vadd.f32 %v187, %v796
    %v798 = vpop.f32.mrf.mxu0
    %799 = vdwg.mxu0
    %v801 = vrot.slane %v635, 1
    %802 = vrot.lane.b32.xlu0 %v801, 96
    %v803 = vpop.permute.xlu0 %802
    %v805 = vadd.f32 %v797, %v803
    %v806 = vxor.u32 %v805, 2147483648
    %v807 = vmul.f32 %v806, 1.442695
    %v808 = vpow.pop %v807
    %v809 = vadd.f32 %v808, 1.0
    %v810 = vrcp.pop %v809
    %v811 = vmul.f32 1.0, %v810
    %812 = vrot.lane.b32.xlu0 %v801, 32
    %v813 = vpop.permute.xlu0 %812
    %v815 = vmul.f32 %v811, %v813
    %817 = vrot.lane.b32.xlu0 %v815, 64
    %v818 = vpop.permute.xlu0 %817
    %v820 = vadd.f32 %v797, %v818
    %v821 = vtanh.pop %v820
    %v822 = vsub.f32 1.0, %v811
    %824 = vrot.lane.b32.xlu0 %v821, 96
    %v825 = vpop.permute.xlu0 %824
    %v827 = vmul.f32 %v822, %v825
    %v828 = vmul.f32 %v811, %v462
    %v829 = vadd.f32 %v827, %v828
    %831 = vrot.lane.b32.xlu0 %v829, 96
    %v832 = vpop.permute.xlu0 %831
    %v833 = vsel %vm84, %v832, 0
    %835 = vmatprep.subr.mxu0 0.0
    %836 = vmatpush1.msra.mxu0 0.0
    %837 = vmatprep.subr.mxu0 0.0
    %838 = vmatpush1.msra.mxu0 0.0
    %839 = vmatprep.subr.mxu0 0.0
    %840 = vmatpush1.msra.mxu0 0.0
    %841 = vmatprep.subr.mxu0 0.0
    %842 = vmatpush1.msra.mxu0 0.0
    %843 = vmatprep.subr.mxu0 0.0
    %844 = vmatpush1.msra.mxu0 0.0
    %845 = vmatprep.subr.mxu0 0.0
    %846 = vmatpush1.msra.mxu0 0.0
    %847 = vmatprep.subr.mxu0 0.0
    %848 = vmatpush1.msra.mxu0 0.0
    %849 = vmatprep.subr.mxu0 0.0
    %850 = vmatpush1.msra.mxu0 0.0
    %851 = vmatprep.subr.mxu0 0.0
    %852 = vmatpush1.msra.mxu0 0.0
    %853 = vmatprep.subr.mxu0 0.0
    %854 = vmatpush1.msra.mxu0 0.0
    %855 = vmatprep.subr.mxu0 0.0
    %856 = vmatpush1.msra.mxu0 0.0
    %857 = vmatprep.subr.mxu0 0.0
    %858 = vmatpush1.msra.mxu0 0.0
    %859 = vmatprep.subr.mxu0 0.0
    %860 = vmatpush1.msra.mxu0 %v191
    %861 = vmatprep.subr.mxu0 0.0
    %862 = vmatpush1.msra.mxu0 %v190
    %863 = vmatprep.subr.mxu0 0.0
    %864 = vmatpush1.msra.mxu0 %v189
    %865 = vmatprep.subr.mxu0 0.0
    %866 = vmatpush1.msra.mxu0 %v188
    %867 = vmatprep.subr.mxu0 0.0
    %868 = vmatpush2.msra.mxu0 0.0
    %869 = vmatprep.subr.mxu0 0.0
    %870 = vmatpush2.msra.mxu0 0.0
    %871 = vmatprep.subr.mxu0 0.0
    %872 = vmatpush2.msra.mxu0 0.0
    %873 = vmatprep.subr.mxu0 0.0
    %874 = vmatpush2.msra.mxu0 0.0
    %875 = vmatprep.subr.mxu0 0.0
    %876 = vmatpush2.msra.mxu0 0.0
    %877 = vmatprep.subr.mxu0 0.0
    %878 = vmatpush2.msra.mxu0 0.0
    %879 = vmatprep.subr.mxu0 0.0
    %880 = vmatpush2.msra.mxu0 0.0
    %881 = vmatprep.subr.mxu0 0.0
    %882 = vmatpush2.msra.mxu0 0.0
    %883 = vmatprep.subr.mxu0 0.0
    %884 = vmatpush2.msra.mxu0 0.0
    %885 = vmatprep.subr.mxu0 0.0
    %886 = vmatpush2.msra.mxu0 0.0
    %887 = vmatprep.subr.mxu0 0.0
    %888 = vmatpush2.msra.mxu0 0.0
    %889 = vmatprep.subr.mxu0 0.0
    %890 = vmatpush2.msra.mxu0 0.0
    %891 = vmatprep.subr.mxu0 0.0
    %892 = vmatpush2.msra.mxu0 0.0
    %893 = vmatprep.subr.mxu0 0.0
    %894 = vmatpush2.msra.mxu0 0.0
    %895 = vmatprep.subr.mxu0 0.0
    %896 = vmatpush2.msra.mxu0 0.0
    %897 = vmatprep.subr.mxu0 0.0
    %898 = vmatpush2.msra.mxu0 0.0
    %899 = vmatprep.mubr.f32.mxu0 0.0
    %900 = vmatmul.mubr.f32.gmra.mxu0 %v833
    %v901 = vpop.f32.mrf.mxu0
    %v902 = vadd.f32 %v192, %v901
    %v903 = vpop.f32.mrf.mxu0
    %904 = vdwg.mxu0
    %v905 = vsel %vm538, %v902, -inf
    %906 = vmax.xlane.f32.xlu0 %v905
    %v907 = vpop.xlane.xlu0 %906
    %v908 = vsub.f32 %v902, %v907
    %v909 = vmul.f32 %v908, 1.442695
    %v910 = vpow.pop %v909
    %v911 = vsel %vm538, %v910, 0.0
    %912 = vadd.xlane.f32.xlu0 %v911
    %v913 = vpop.xlane.xlu0 %912
    %v914 = vlog2.pop %v913
    %v915 = vmul.f32 %v914, 0.6931472
    %v916 = vadd.f32 %v915, %v907
    %v917 = vsub.f32 %v902, %v916
    %918 = vst.msk [vmem:[#allocation7 + $0x1] sm:$0x1] %vm538, %v917
    %920 = vst.msk [vmem:[#allocation8 + $0x1] sm:$0x1] %vm554, %v832
    %921 = vst [vmem:[#allocation10] sm:$0x2] %v647
    %922 = vmatprep.subr.mxu0 0.0
    %923 = vmatpush1.msra.mxu0 0.0
    %924 = vmatprep.subr.mxu0 0.0
    %925 = vmatpush1.msra.mxu0 0.0
    %926 = vmatprep.subr.mxu0 0.0
    %927 = vmatpush1.msra.mxu0 0.0
    %928 = vmatprep.subr.mxu0 0.0
    %929 = vmatpush1.msra.mxu0 0.0
    %930 = vmatprep.subr.mxu0 0.0
    %931 = vmatpush1.msra.mxu0 0.0
    %932 = vmatprep.subr.mxu0 0.0
    %933 = vmatpush1.msra.mxu0 0.0
    %934 = vmatprep.subr.mxu0 0.0
    %935 = vmatpush1.msra.mxu0 0.0
    %936 = vmatprep.subr.mxu0 0.0
    %937 = vmatpush1.msra.mxu0 0.0
    %938 = vmatprep.subr.mxu0 0.0
    %939 = vmatpush1.msra.mxu0 0.0
    %940 = vmatprep.subr.mxu0 0.0
    %941 = vmatpush1.msra.mxu0 0.0
    %942 = vmatprep.subr.mxu0 0.0
    %943 = vmatpush1.msra.mxu0 0.0
    %944 = vmatprep.subr.mxu0 0.0
    %945 = vmatpush1.msra.mxu0 0.0
    %946 = vmatprep.subr.mxu0 %v182
    %947 = vmatpush1.msra.mxu0 %v181
    %948 = vmatprep.subr.mxu0 %v180
    %949 = vmatpush1.msra.mxu0 %v179
    %950 = vmatprep.subr.mxu0 %v178
    %951 = vmatpush1.msra.mxu0 %v177
    %952 = vmatprep.subr.mxu0 %v176
    %953 = vmatpush1.msra.mxu0 %v175
    %954 = vmatprep.subr.mxu0 0.0
    %955 = vmatpush2.msra.mxu0 0.0
    %956 = vmatprep.subr.mxu0 0.0
    %957 = vmatpush2.msra.mxu0 0.0
    %958 = vmatprep.subr.mxu0 0.0
    %959 = vmatpush2.msra.mxu0 0.0
    %960 = vmatprep.subr.mxu0 0.0
    %961 = vmatpush2.msra.mxu0 0.0
    %962 = vmatprep.subr.mxu0 0.0
    %963 = vmatpush2.msra.mxu0 0.0
    %964 = vmatprep.subr.mxu0 0.0
    %965 = vmatpush2.msra.mxu0 0.0
    %966 = vmatprep.subr.mxu0 0.0
    %967 = vmatpush2.msra.mxu0 0.0
    %968 = vmatprep.subr.mxu0 0.0
    %969 = vmatpush2.msra.mxu0 0.0
    %970 = vmatprep.subr.mxu0 0.0
    %971 = vmatpush2.msra.mxu0 0.0
    %972 = vmatprep.subr.mxu0 0.0
    %973 = vmatpush2.msra.mxu0 0.0
    %974 = vmatprep.subr.mxu0 0.0
    %975 = vmatpush2.msra.mxu0 0.0
    %976 = vmatprep.subr.mxu0 0.0
    %977 = vmatpush2.msra.mxu0 0.0
    %978 = vmatprep.subr.mxu0 0.0
    %979 = vmatpush2.msra.mxu0 0.0
    %980 = vmatprep.subr.mxu0 0.0
    %981 = vmatpush2.msra.mxu0 0.0
    %982 = vmatprep.subr.mxu0 0.0
    %983 = vmatpush2.msra.mxu0 0.0
    %984 = vmatprep.subr.mxu0 0.0
    %985 = vmatpush2.msra.mxu0 0.0
    %986 = vmatprep.mubr.f32.mxu0 0.0
    %987 = vmatmul.mubr.f32.gmra.mxu0 %v833
    %v988 = vpop.f32.mrf.mxu0
    %v989 = vadd.f32 0.0, %v988
    %v990 = vpop.f32.mrf.mxu0
    %v991 = vadd.f32 0.0, %v990
    %992 = vdwg.mxu0
    %v995 = vrot.slane %v989, 6
    %v996 = vrot.slane %v991, 6
    %v999 = vadd.f32 %v155, %v995
    %v1000 = vadd.f32 %v157, %v996
    %vm1001 = vcmask 1042434
    %v1002 = vsel %vm1001, %v999, -inf
    %1003 = vmax.xlane.f32.xlu0 %v1002
    %v1004 = vpop.xlane.xlu0 %1003
    %v1005 = vsub.f32 %v999, %v1004
    %v1006 = vmul.f32 %v1005, 1.442695
    %v1007 = vpow.pop %v1006
    %v1008 = vsel %vm1001, %v1007, 0.0
    %1009 = vadd.xlane.f32.xlu0 %v1008
    %v1010 = vpop.xlane.xlu0 %1009
    %v1011 = vrcp.pop %v1010
    %v1012 = vmul.f32 %v1007, %v1011
    %v1014 = vrot.slane %v1012, 2
    %1016 = vmatprep.subr.mxu0 0.0
    %1017 = vmatpush1.msra.mxu0 %v174
    %1018 = vmatprep.subr.mxu0 0.0
    %1019 = vmatpush1.msra.mxu0 %v173
    %1020 = vmatprep.subr.mxu0 0.0
    %1021 = vmatpush1.msra.mxu0 %v172
    %1022 = vmatprep.subr.mxu0 0.0
    %1023 = vmatpush1.msra.mxu0 %v171
    %1024 = vmatprep.subr.mxu0 0.0
    %1025 = vmatpush1.msra.mxu0 %v170
    %1026 = vmatprep.subr.mxu0 0.0
    %1027 = vmatpush1.msra.mxu0 %v169
    %1028 = vmatprep.subr.mxu0 0.0
    %1029 = vmatpush1.msra.mxu0 %v168
    %1030 = vmatprep.subr.mxu0 0.0
    %1031 = vmatpush1.msra.mxu0 %v167
    %1032 = vmatprep.subr.mxu0 0.0
    %1033 = vmatpush1.msra.mxu0 %v166
    %1034 = vmatprep.subr.mxu0 0.0
    %1035 = vmatpush1.msra.mxu0 %v165
    %1036 = vmatprep.subr.mxu0 0.0
    %1037 = vmatpush1.msra.mxu0 %v164
    %1038 = vmatprep.subr.mxu0 0.0
    %1039 = vmatpush1.msra.mxu0 %v163
    %1040 = vmatprep.subr.mxu0 0.0
    %1041 = vmatpush1.msra.mxu0 %v162
    %1042 = vmatprep.subr.mxu0 0.0
    %1043 = vmatpush1.msra.mxu0 %v161
    %1044 = vmatprep.subr.mxu0 0.0
    %1045 = vmatpush1.msra.mxu0 %v160
    %1046 = vmatprep.subr.mxu0 0.0
    %1047 = vmatpush1.msra.mxu0 %v159
    %1048 = vmatprep.subr.mxu0 0.0
    %1049 = vmatpush2.msra.mxu0 0.0
    %1050 = vmatprep.subr.mxu0 0.0
    %1051 = vmatpush2.msra.mxu0 0.0
    %1052 = vmatprep.subr.mxu0 0.0
    %1053 = vmatpush2.msra.mxu0 0.0
    %1054 = vmatprep.subr.mxu0 0.0
    %1055 = vmatpush2.msra.mxu0 0.0
    %1056 = vmatprep.subr.mxu0 0.0
    %1057 = vmatpush2.msra.mxu0 0.0
    %1058 = vmatprep.subr.mxu0 0.0
    %1059 = vmatpush2.msra.mxu0 0.0
    %1060 = vmatprep.subr.mxu0 0.0
    %1061 = vmatpush2.msra.mxu0 0.0
    %1062 = vmatprep.subr.mxu0 0.0
    %1063 = vmatpush2.msra.mxu0 0.0
    %1064 = vmatprep.subr.mxu0 0.0
    %1065 = vmatpush2.msra.mxu0 0.0
    %1066 = vmatprep.subr.mxu0 0.0
    %1067 = vmatpush2.msra.mxu0 0.0
    %1068 = vmatprep.subr.mxu0 0.0
    %1069 = vmatpush2.msra.mxu0 0.0
    %1070 = vmatprep.subr.mxu0 0.0
    %1071 = vmatpush2.msra.mxu0 0.0
    %1072 = vmatprep.subr.mxu0 0.0
    %1073 = vmatpush2.msra.mxu0 0.0
    %1074 = vmatprep.subr.mxu0 0.0
    %1075 = vmatpush2.msra.mxu0 0.0
    %1076 = vmatprep.subr.mxu0 0.0
    %1077 = vmatpush2.msra.mxu0 0.0
    %1078 = vmatprep.subr.mxu0 0.0
    %1079 = vmatpush2.msra.mxu0 0.0
    %1080 = vmatprep.mubr.f32.mxu0 0.0
    %1081 = vmatmul.mubr.f32.gmra.mxu0 %v1014
    %v1082 = vpop.f32.mrf.mxu0
    %v1083 = vadd.f32 0.0, %v1082
    %v1084 = vpop.f32.mrf.mxu0
    %1085 = vdwg.mxu0
    %v1087 = vrot.slane %v1083, 6
    %v1089 = vadd.f32 %v1000, %v1087
    %v1090 = vmax.f32 %v1089, 0.0
    %v1092 = vrot.slane %v1090, 2
    %v1093 = vsel %vm84, %v1092, 0
    %1095 = vmatprep.subr.mxu0 0.0
    %1096 = vmatpush1.msra.mxu0 0.0
    %1097 = vmatprep.subr.mxu0 0.0
    %1098 = vmatpush1.msra.mxu0 0.0
    %1099 = vmatprep.subr.mxu0 0.0
    %1100 = vmatpush1.msra.mxu0 0.0
    %1101 = vmatprep.subr.mxu0 0.0
    %1102 = vmatpush1.msra.mxu0 0.0
    %1103 = vmatprep.subr.mxu0 0.0
    %1104 = vmatpush1.msra.mxu0 0.0
    %1105 = vmatprep.subr.mxu0 0.0
    %1106 = vmatpush1.msra.mxu0 0.0
    %1107 = vmatprep.subr.mxu0 0.0
    %1108 = vmatpush1.msra.mxu0 0.0
    %1109 = vmatprep.subr.mxu0 0.0
    %1110 = vmatpush1.msra.mxu0 0.0
    %1111 = vmatprep.subr.mxu0 0.0
    %1112 = vmatpush1.msra.mxu0 0.0
    %1113 = vmatprep.subr.mxu0 0.0
    %1114 = vmatpush1.msra.mxu0 0.0
    %1115 = vmatprep.subr.mxu0 0.0
    %1116 = vmatpush1.msra.mxu0 0.0
    %1117 = vmatprep.subr.mxu0 0.0
    %1118 = vmatpush1.msra.mxu0 0.0
    %1119 = vmatprep.subr.mxu0 0.0
    %1120 = vmatpush1.msra.mxu0 %v186
    %1121 = vmatprep.subr.mxu0 0.0
    %1122 = vmatpush1.msra.mxu0 %v185
    %1123 = vmatprep.subr.mxu0 0.0
    %1124 = vmatpush1.msra.mxu0 %v184
    %1125 = vmatprep.subr.mxu0 0.0
    %1126 = vmatpush1.msra.mxu0 %v183
    %1127 = vmatprep.subr.mxu0 0.0
    %1128 = vmatpush2.msra.mxu0 0.0
    %1129 = vmatprep.subr.mxu0 0.0
    %1130 = vmatpush2.msra.mxu0 0.0
    %1131 = vmatprep.subr.mxu0 0.0
    %1132 = vmatpush2.msra.mxu0 0.0
    %1133 = vmatprep.subr.mxu0 0.0
    %1134 = vmatpush2.msra.mxu0 0.0
    %1135 = vmatprep.subr.mxu0 0.0
    %1136 = vmatpush2.msra.mxu0 0.0
    %1137 = vmatprep.subr.mxu0 0.0
    %1138 = vmatpush2.msra.mxu0 0.0
    %1139 = vmatprep.subr.mxu0 0.0
    %1140 = vmatpush2.msra.mxu0 0.0
    %1141 = vmatprep.subr.mxu0 0.0
    %1142 = vmatpush2.msra.mxu0 0.0
    %1143 = vmatprep.subr.mxu0 0.0
    %1144 = vmatpush2.msra.mxu0 0.0
    %1145 = vmatprep.subr.mxu0 0.0
    %1146 = vmatpush2.msra.mxu0 0.0
    %1147 = vmatprep.subr.mxu0 0.0
    %1148 = vmatpush2.msra.mxu0 0.0
    %1149 = vmatprep.subr.mxu0 0.0
    %1150 = vmatpush2.msra.mxu0 0.0
    %1151 = vmatprep.subr.mxu0 0.0
    %1152 = vmatpush2.msra.mxu0 0.0
    %1153 = vmatprep.subr.mxu0 0.0
    %1154 = vmatpush2.msra.mxu0 0.0
    %1155 = vmatprep.subr.mxu0 0.0
    %1156 = vmatpush2.msra.mxu0 0.0
    %1157 = vmatprep.subr.mxu0 0.0
    %1158 = vmatpush2.msra.mxu0 0.0
    %1159 = vmatprep.mubr.f32.mxu0 0.0
    %1160 = vmatmul.mubr.f32.gmra.mxu0 %v1093
    %v1161 = vpop.f32.mrf.mxu0
    %v1162 = vadd.f32 %v187, %v1161
    %v1163 = vpop.f32.mrf.mxu0
    %1164 = vdwg.mxu0
    %v1166 = vrot.slane %v1000, 2
    %1167 = vrot.lane.b32.xlu0 %v1166, 96
    %v1168 = vpop.permute.xlu0 %1167
    %v1170 = vadd.f32 %v1162, %v1168
    %v1171 = vxor.u32 %v1170, 2147483648
    %v1172 = vmul.f32 %v1171, 1.442695
    %v1173 = vpow.pop %v1172
    %v1174 = vadd.f32 %v1173, 1.0
    %v1175 = vrcp.pop %v1174
    %v1176 = vmul.f32 1.0, %v1175
    %1177 = vrot.lane.b32.xlu0 %v1166, 32
    %v1178 = vpop.permute.xlu0 %1177
    %v1180 = vmul.f32 %v1176, %v1178
    %1182 = vrot.lane.b32.xlu0 %v1180, 64
    %v1183 = vpop.permute.xlu0 %1182
    %v1185 = vadd.f32 %v1162, %v1183
    %v1186 = vtanh.pop %v1185
    %v1187 = vsub.f32 1.0, %v1176
    %1189 = vrot.lane.b32.xlu0 %v1186, 96
    %v1190 = vpop.permute.xlu0 %1189
    %v1192 = vmul.f32 %v1187, %v1190
    %v1193 = vmul.f32 %v1176, %v829
    %v1194 = vadd.f32 %v1192, %v1193
    %1196 = vrot.lane.b32.xlu0 %v1194, 96
    %v1197 = vpop.permute.xlu0 %1196
    %v1198 = vsel %vm84, %v1197, 0
    %1200 = vmatprep.subr.mxu0 0.0
    %1201 = vmatpush1.msra.mxu0 0.0
    %1202 = vmatprep.subr.mxu0 0.0
    %1203 = vmatpush1.msra.mxu0 0.0
    %1204 = vmatprep.subr.mxu0 0.0
    %1205 = vmatpush1.msra.mxu0 0.0
    %1206 = vmatprep.subr.mxu0 0.0
    %1207 = vmatpush1.msra.mxu0 0.0
    %1208 = vmatprep.subr.mxu0 0.0
    %1209 = vmatpush1.msra.mxu0 0.0
    %1210 = vmatprep.subr.mxu0 0.0
    %1211 = vmatpush1.msra.mxu0 0.0
    %1212 = vmatprep.subr.mxu0 0.0
    %1213 = vmatpush1.msra.mxu0 0.0
    %1214 = vmatprep.subr.mxu0 0.0
    %1215 = vmatpush1.msra.mxu0 0.0
    %1216 = vmatprep.subr.mxu0 0.0
    %1217 = vmatpush1.msra.mxu0 0.0
    %1218 = vmatprep.subr.mxu0 0.0
    %1219 = vmatpush1.msra.mxu0 0.0
    %1220 = vmatprep.subr.mxu0 0.0
    %1221 = vmatpush1.msra.mxu0 0.0
    %1222 = vmatprep.subr.mxu0 0.0
    %1223 = vmatpush1.msra.mxu0 0.0
    %1224 = vmatprep.subr.mxu0 0.0
    %1225 = vmatpush1.msra.mxu0 %v191
    %1226 = vmatprep.subr.mxu0 0.0
    %1227 = vmatpush1.msra.mxu0 %v190
    %1228 = vmatprep.subr.mxu0 0.0
    %1229 = vmatpush1.msra.mxu0 %v189
    %1230 = vmatprep.subr.mxu0 0.0
    %1231 = vmatpush1.msra.mxu0 %v188
    %1232 = vmatprep.subr.mxu0 0.0
    %1233 = vmatpush2.msra.mxu0 0.0
    %1234 = vmatprep.subr.mxu0 0.0
    %1235 = vmatpush2.msra.mxu0 0.0
    %1236 = vmatprep.subr.mxu0 0.0
    %1237 = vmatpush2.msra.mxu0 0.0
    %1238 = vmatprep.subr.mxu0 0.0
    %1239 = vmatpush2.msra.mxu0 0.0
    %1240 = vmatprep.subr.mxu0 0.0
    %1241 = vmatpush2.msra.mxu0 0.0
    %1242 = vmatprep.subr.mxu0 0.0
    %1243 = vmatpush2.msra.mxu0 0.0
    %1244 = vmatprep.subr.mxu0 0.0
    %1245 = vmatpush2.msra.mxu0 0.0
    %1246 = vmatprep.subr.mxu0 0.0
    %1247 = vmatpush2.msra.mxu0 0.0
    %1248 = vmatprep.subr.mxu0 0.0
    %1249 = vmatpush2.msra.mxu0 0.0
    %1250 = vmatprep.subr.mxu0 0.0
    %1251 = vmatpush2.msra.mxu0 0.0
    %1252 = vmatprep.subr.mxu0 0.0
    %1253 = vmatpush2.msra.mxu0 0.0
    %1254 = vmatprep.subr.mxu0 0.0
    %1255 = vmatpush2.msra.mxu0 0.0
    %1256 = vmatprep.subr.mxu0 0.0
    %1257 = vmatpush2.msra.mxu0 0.0
    %1258 = vmatprep.subr.mxu0 0.0
    %1259 = vmatpush2.msra.mxu0 0.0
    %1260 = vmatprep.subr.mxu0 0.0
    %1261 = vmatpush2.msra.mxu0 0.0
    %1262 = vmatprep.subr.mxu0 0.0
    %1263 = vmatpush2.msra.mxu0 0.0
    %1264 = vmatprep.mubr.f32.mxu0 0.0
    %1265 = vmatmul.mubr.f32.gmra.mxu0 %v1198
    %v1266 = vpop.f32.mrf.mxu0
    %v1267 = vadd.f32 %v192, %v1266
    %v1268 = vpop.f32.mrf.mxu0
    %1269 = vdwg.mxu0
    %v1270 = vsel %vm538, %v1267, -inf
    %1271 = vmax.xlane.f32.xlu0 %v1270
    %v1272 = vpop.xlane.xlu0 %1271
    %v1273 = vsub.f32 %v1267, %v1272
    %v1274 = vmul.f32 %v1273, 1.442695
    %v1275 = vpow.pop %v1274
    %v1276 = vsel %vm538, %v1275, 0.0
    %1277 = vadd.xlane.f32.xlu0 %v1276
    %v1278 = vpop.xlane.xlu0 %1277
    %v1279 = vlog2.pop %v1278
    %v1280 = vmul.f32 %v1279, 0.6931472
    %v1281 = vadd.f32 %v1280, %v1272
    %v1282 = vsub.f32 %v1267, %v1281
    %1283 = vst.msk [vmem:[#allocation7 + $0x2] sm:$0x1] %vm538, %v1282
    %1285 = vst.msk [vmem:[#allocation8 + $0x2] sm:$0x1] %vm554, %v1197
    %1286 = vst [vmem:[#allocation10] sm:$0x4] %v1012
    %1287 = vmatprep.subr.mxu0 0.0
    %1288 = vmatpush1.msra.mxu0 0.0
    %1289 = vmatprep.subr.mxu0 0.0
    %1290 = vmatpush1.msra.mxu0 0.0
    %1291 = vmatprep.subr.mxu0 0.0
    %1292 = vmatpush1.msra.mxu0 0.0
    %1293 = vmatprep.subr.mxu0 0.0
    %1294 = vmatpush1.msra.mxu0 0.0
    %1295 = vmatprep.subr.mxu0 0.0
    %1296 = vmatpush1.msra.mxu0 0.0
    %1297 = vmatprep.subr.mxu0 0.0
    %1298 = vmatpush1.msra.mxu0 0.0
    %1299 = vmatprep.subr.mxu0 0.0
    %1300 = vmatpush1.msra.mxu0 0.0
    %1301 = vmatprep.subr.mxu0 0.0
    %1302 = vmatpush1.msra.mxu0 0.0
    %1303 = vmatprep.subr.mxu0 0.0
    %1304 = vmatpush1.msra.mxu0 0.0
    %1305 = vmatprep.subr.mxu0 0.0
    %1306 = vmatpush1.msra.mxu0 0.0
    %1307 = vmatprep.subr.mxu0 0.0
    %1308 = vmatpush1.msra.mxu0 0.0
    %1309 = vmatprep.subr.mxu0 0.0
    %1310 = vmatpush1.msra.mxu0 0.0
    %1311 = vmatprep.subr.mxu0 %v182
    %1312 = vmatpush1.msra.mxu0 %v181
    %1313 = vmatprep.subr.mxu0 %v180
    %1314 = vmatpush1.msra.mxu0 %v179
    %1315 = vmatprep.subr.mxu0 %v178
    %1316 = vmatpush1.msra.mxu0 %v177
    %1317 = vmatprep.subr.mxu0 %v176
    %1318 = vmatpush1.msra.mxu0 %v175
    %1319 = vmatprep.subr.mxu0 0.0
    %1320 = vmatpush2.msra.mxu0 0.0
    %1321 = vmatprep.subr.mxu0 0.0
    %1322 = vmatpush2.msra.mxu0 0.0
    %1323 = vmatprep.subr.mxu0 0.0
    %1324 = vmatpush2.msra.mxu0 0.0
    %1325 = vmatprep.subr.mxu0 0.0
    %1326 = vmatpush2.msra.mxu0 0.0
    %1327 = vmatprep.subr.mxu0 0.0
    %1328 = vmatpush2.msra.mxu0 0.0
    %1329 = vmatprep.subr.mxu0 0.0
    %1330 = vmatpush2.msra.mxu0 0.0
    %1331 = vmatprep.subr.mxu0 0.0
    %1332 = vmatpush2.msra.mxu0 0.0
    %1333 = vmatprep.subr.mxu0 0.0
    %1334 = vmatpush2.msra.mxu0 0.0
    %1335 = vmatprep.subr.mxu0 0.0
    %1336 = vmatpush2.msra.mxu0 0.0
    %1337 = vmatprep.subr.mxu0 0.0
    %1338 = vmatpush2.msra.mxu0 0.0
    %1339 = vmatprep.subr.mxu0 0.0
    %1340 = vmatpush2.msra.mxu0 0.0
    %1341 = vmatprep.subr.mxu0 0.0
    %1342 = vmatpush2.msra.mxu0 0.0
    %1343 = vmatprep.subr.mxu0 0.0
    %1344 = vmatpush2.msra.mxu0 0.0
    %1345 = vmatprep.subr.mxu0 0.0
    %1346 = vmatpush2.msra.mxu0 0.0
    %1347 = vmatprep.subr.mxu0 0.0
    %1348 = vmatpush2.msra.mxu0 0.0
    %1349 = vmatprep.subr.mxu0 0.0
    %1350 = vmatpush2.msra.mxu0 0.0
    %1351 = vmatprep.mubr.f32.mxu0 0.0
    %1352 = vmatmul.mubr.f32.gmra.mxu0 %v1198
    %v1353 = vpop.f32.mrf.mxu0
    %v1354 = vadd.f32 0.0, %v1353
    %v1355 = vpop.f32.mrf.mxu0
    %v1356 = vadd.f32 0.0, %v1355
    %1357 = vdwg.mxu0
    %v1360 = vrot.slane %v1354, 5
    %v1361 = vrot.slane %v1356, 5
    %v1364 = vadd.f32 %v155, %v1360
    %v1365 = vadd.f32 %v157, %v1361
    %vm1366 = vcmask 1043459
    %v1367 = vsel %vm1366, %v1364, -inf
    %1368 = vmax.xlane.f32.xlu0 %v1367
    %v1369 = vpop.xlane.xlu0 %1368
    %v1370 = vsub.f32 %v1364, %v1369
    %v1371 = vmul.f32 %v1370, 1.442695
    %v1372 = vpow.pop %v1371
    %v1373 = vsel %vm1366, %v1372, 0.0
    %1374 = vadd.xlane.f32.xlu0 %v1373
    %v1375 = vpop.xlane.xlu0 %1374
    %v1376 = vrcp.pop %v1375
    %v1377 = vmul.f32 %v1372, %v1376
    %v1379 = vrot.slane %v1377, 3
    %1381 = vmatprep.subr.mxu0 0.0
    %1382 = vmatpush1.msra.mxu0 %v174
    %1383 = vmatprep.subr.mxu0 0.0
    %1384 = vmatpush1.msra.mxu0 %v173
    %1385 = vmatprep.subr.mxu0 0.0
    %1386 = vmatpush1.msra.mxu0 %v172
    %1387 = vmatprep.subr.mxu0 0.0
    %1388 = vmatpush1.msra.mxu0 %v171
    %1389 = vmatprep.subr.mxu0 0.0
    %1390 = vmatpush1.msra.mxu0 %v170
    %1391 = vmatprep.subr.mxu0 0.0
    %1392 = vmatpush1.msra.mxu0 %v169
    %1393 = vmatprep.subr.mxu0 0.0
    %1394 = vmatpush1.msra.mxu0 %v168
    %1395 = vmatprep.subr.mxu0 0.0
    %1396 = vmatpush1.msra.mxu0 %v167
    %1397 = vmatprep.subr.mxu0 0.0
    %1398 = vmatpush1.msra.mxu0 %v166
    %1399 = vmatprep.subr.mxu0 0.0
    %1400 = vmatpush1.msra.mxu0 %v165
    %1401 = vmatprep.subr.mxu0 0.0
    %1402 = vmatpush1.msra.mxu0 %v164
    %1403 = vmatprep.subr.mxu0 0.0
    %1404 = vmatpush1.msra.mxu0 %v163
    %1405 = vmatprep.subr.mxu0 0.0
    %1406 = vmatpush1.msra.mxu0 %v162
    %1407 = vmatprep.subr.mxu0 0.0
    %1408 = vmatpush1.msra.mxu0 %v161
    %1409 = vmatprep.subr.mxu0 0.0
    %1410 = vmatpush1.msra.mxu0 %v160
    %1411 = vmatprep.subr.mxu0 0.0
    %1412 = vmatpush1.msra.mxu0 %v159
    %1413 = vmatprep.subr.mxu0 0.0
    %1414 = vmatpush2.msra.mxu0 0.0
    %1415 = vmatprep.subr.mxu0 0.0
    %1416 = vmatpush2.msra.mxu0 0.0
    %1417 = vmatprep.subr.mxu0 0.0
    %1418 = vmatpush2.msra.mxu0 0.0
    %1419 = vmatprep.subr.mxu0 0.0
    %1420 = vmatpush2.msra.mxu0 0.0
    %1421 = vmatprep.subr.mxu0 0.0
    %1422 = vmatpush2.msra.mxu0 0.0
    %1423 = vmatprep.subr.mxu0 0.0
    %1424 = vmatpush2.msra.mxu0 0.0
    %1425 = vmatprep.subr.mxu0 0.0
    %1426 = vmatpush2.msra.mxu0 0.0
    %1427 = vmatprep.subr.mxu0 0.0
    %1428 = vmatpush2.msra.mxu0 0.0
    %1429 = vmatprep.subr.mxu0 0.0
    %1430 = vmatpush2.msra.mxu0 0.0
    %1431 = vmatprep.subr.mxu0 0.0
    %1432 = vmatpush2.msra.mxu0 0.0
    %1433 = vmatprep.subr.mxu0 0.0
    %1434 = vmatpush2.msra.mxu0 0.0
    %1435 = vmatprep.subr.mxu0 0.0
    %1436 = vmatpush2.msra.mxu0 0.0
    %1437 = vmatprep.subr.mxu0 0.0
    %1438 = vmatpush2.msra.mxu0 0.0
    %1439 = vmatprep.subr.mxu0 0.0
    %1440 = vmatpush2.msra.mxu0 0.0
    %1441 = vmatprep.subr.mxu0 0.0
    %1442 = vmatpush2.msra.mxu0 0.0
    %1443 = vmatprep.subr.mxu0 0.0
    %1444 = vmatpush2.msra.mxu0 0.0
    %1445 = vmatprep.mubr.f32.mxu0 0.0
    %1446 = vmatmul.mubr.f32.gmra.mxu0 %v1379
    %v1447 = vpop.f32.mrf.mxu0
    %v1448 = vadd.f32 0.0, %v1447
    %v1449 = vpop.f32.mrf.mxu0
    %1450 = vdwg.mxu0
    %v1452 = vrot.slane %v1448, 5
    %v1454 = vadd.f32 %v1365, %v1452
    %v1455 = vmax.f32 %v1454, 0.0
    %v1457 = vrot.slane %v1455, 3
    %v1458 = vsel %vm84, %v1457, 0
    %1460 = vmatprep.subr.mxu0 0.0
    %1461 = vmatpush1.msra.mxu0 0.0
    %1462 = vmatprep.subr.mxu0 0.0
    %1463 = vmatpush1.msra.mxu0 0.0
    %1464 = vmatprep.subr.mxu0 0.0
    %1465 = vmatpush1.msra.mxu0 0.0
    %1466 = vmatprep.subr.mxu0 0.0
    %1467 = vmatpush1.msra.mxu0 0.0
    %1468 = vmatprep.subr.mxu0 0.0
    %1469 = vmatpush1.msra.mxu0 0.0
    %1470 = vmatprep.subr.mxu0 0.0
    %1471 = vmatpush1.msra.mxu0 0.0
    %1472 = vmatprep.subr.mxu0 0.0
    %1473 = vmatpush1.msra.mxu0 0.0
    %1474 = vmatprep.subr.mxu0 0.0
    %1475 = vmatpush1.msra.mxu0 0.0
    %1476 = vmatprep.subr.mxu0 0.0
    %1477 = vmatpush1.msra.mxu0 0.0
    %1478 = vmatprep.subr.mxu0 0.0
    %1479 = vmatpush1.msra.mxu0 0.0
    %1480 = vmatprep.subr.mxu0 0.0
    %1481 = vmatpush1.msra.mxu0 0.0
    %1482 = vmatprep.subr.mxu0 0.0
    %1483 = vmatpush1.msra.mxu0 0.0
    %1484 = vmatprep.subr.mxu0 0.0
    %1485 = vmatpush1.msra.mxu0 %v186
    %1486 = vmatprep.subr.mxu0 0.0
    %1487 = vmatpush1.msra.mxu0 %v185
    %1488 = vmatprep.subr.mxu0 0.0
    %1489 = vmatpush1.msra.mxu0 %v184
    %1490 = vmatprep.subr.mxu0 0.0
    %1491 = vmatpush1.msra.mxu0 %v183
    %1492 = vmatprep.subr.mxu0 0.0
    %1493 = vmatpush2.msra.mxu0 0.0
    %1494 = vmatprep.subr.mxu0 0.0
    %1495 = vmatpush2.msra.mxu0 0.0
    %1496 = vmatprep.subr.mxu0 0.0
    %1497 = vmatpush2.msra.mxu0 0.0
    %1498 = vmatprep.subr.mxu0 0.0
    %1499 = vmatpush2.msra.mxu0 0.0
    %1500 = vmatprep.subr.mxu0 0.0
    %1501 = vmatpush2.msra.mxu0 0.0
    %1502 = vmatprep.subr.mxu0 0.0
    %1503 = vmatpush2.msra.mxu0 0.0
    %1504 = vmatprep.subr.mxu0 0.0
    %1505 = vmatpush2.msra.mxu0 0.0
    %1506 = vmatprep.subr.mxu0 0.0
    %1507 = vmatpush2.msra.mxu0 0.0
    %1508 = vmatprep.subr.mxu0 0.0
    %1509 = vmatpush2.msra.mxu0 0.0
    %1510 = vmatprep.subr.mxu0 0.0
    %1511 = vmatpush2.msra.mxu0 0.0
    %1512 = vmatprep.subr.mxu0 0.0
    %1513 = vmatpush2.msra.mxu0 0.0
    %1514 = vmatprep.subr.mxu0 0.0
    %1515 = vmatpush2.msra.mxu0 0.0
    %1516 = vmatprep.subr.mxu0 0.0
    %1517 = vmatpush2.msra.mxu0 0.0
    %1518 = vmatprep.subr.mxu0 0.0
    %1519 = vmatpush2.msra.mxu0 0.0
    %1520 = vmatprep.subr.mxu0 0.0
    %1521 = vmatpush2.msra.mxu0 0.0
    %1522 = vmatprep.subr.mxu0 0.0
    %1523 = vmatpush2.msra.mxu0 0.0
    %1524 = vmatprep.mubr.f32.mxu0 0.0
    %1525 = vmatmul.mubr.f32.gmra.mxu0 %v1458
    %v1526 = vpop.f32.mrf.mxu0
    %v1527 = vadd.f32 %v187, %v1526
    %v1528 = vpop.f32.mrf.mxu0
    %1529 = vdwg.mxu0
    %v1531 = vrot.slane %v1365, 3
    %1532 = vrot.lane.b32.xlu0 %v1531, 96
    %v1533 = vpop.permute.xlu0 %1532
    %v1535 = vadd.f32 %v1527, %v1533
    %v1536 = vxor.u32 %v1535, 2147483648
    %v1537 = vmul.f32 %v1536, 1.442695
    %v1538 = vpow.pop %v1537
    %v1539 = vadd.f32 %v1538, 1.0
    %v1540 = vrcp.pop %v1539
    %v1541 = vmul.f32 1.0, %v1540
    %1542 = vrot.lane.b32.xlu0 %v1531, 32
    %v1543 = vpop.permute.xlu0 %1542
    %v1545 = vmul.f32 %v1541, %v1543
    %1547 = vrot.lane.b32.xlu0 %v1545, 64
    %v1548 = vpop.permute.xlu0 %1547
    %v1550 = vadd.f32 %v1527, %v1548
    %v1551 = vtanh.pop %v1550
    %v1552 = vsub.f32 1.0, %v1541
    %1554 = vrot.lane.b32.xlu0 %v1551, 96
    %v1555 = vpop.permute.xlu0 %1554
    %v1557 = vmul.f32 %v1552, %v1555
    %v1558 = vmul.f32 %v1541, %v1194
    %v1559 = vadd.f32 %v1557, %v1558
    %1561 = vrot.lane.b32.xlu0 %v1559, 96
    %v1562 = vpop.permute.xlu0 %1561
    %v1563 = vsel %vm84, %v1562, 0
    %1565 = vmatprep.subr.mxu0 0.0
    %1566 = vmatpush1.msra.mxu0 0.0
    %1567 = vmatprep.subr.mxu0 0.0
    %1568 = vmatpush1.msra.mxu0 0.0
    %1569 = vmatprep.subr.mxu0 0.0
    %1570 = vmatpush1.msra.mxu0 0.0
    %1571 = vmatprep.subr.mxu0 0.0
    %1572 = vmatpush1.msra.mxu0 0.0
    %1573 = vmatprep.subr.mxu0 0.0
    %1574 = vmatpush1.msra.mxu0 0.0
    %1575 = vmatprep.subr.mxu0 0.0
    %1576 = vmatpush1.msra.mxu0 0.0
    %1577 = vmatprep.subr.mxu0 0.0
    %1578 = vmatpush1.msra.mxu0 0.0
    %1579 = vmatprep.subr.mxu0 0.0
    %1580 = vmatpush1.msra.mxu0 0.0
    %1581 = vmatprep.subr.mxu0 0.0
    %1582 = vmatpush1.msra.mxu0 0.0
    %1583 = vmatprep.subr.mxu0 0.0
    %1584 = vmatpush1.msra.mxu0 0.0
    %1585 = vmatprep.subr.mxu0 0.0
    %1586 = vmatpush1.msra.mxu0 0.0
    %1587 = vmatprep.subr.mxu0 0.0
    %1588 = vmatpush1.msra.mxu0 0.0
    %1589 = vmatprep.subr.mxu0 0.0
    %1590 = vmatpush1.msra.mxu0 %v191
    %1591 = vmatprep.subr.mxu0 0.0
    %1592 = vmatpush1.msra.mxu0 %v190
    %1593 = vmatprep.subr.mxu0 0.0
    %1594 = vmatpush1.msra.mxu0 %v189
    %1595 = vmatprep.subr.mxu0 0.0
    %1596 = vmatpush1.msra.mxu0 %v188
    %1597 = vmatprep.subr.mxu0 0.0
    %1598 = vmatpush2.msra.mxu0 0.0
    %1599 = vmatprep.subr.mxu0 0.0
    %1600 = vmatpush2.msra.mxu0 0.0
    %1601 = vmatprep.subr.mxu0 0.0
    %1602 = vmatpush2.msra.mxu0 0.0
    %1603 = vmatprep.subr.mxu0 0.0
    %1604 = vmatpush2.msra.mxu0 0.0
    %1605 = vmatprep.subr.mxu0 0.0
    %1606 = vmatpush2.msra.mxu0 0.0
    %1607 = vmatprep.subr.mxu0 0.0
    %1608 = vmatpush2.msra.mxu0 0.0
    %1609 = vmatprep.subr.mxu0 0.0
    %1610 = vmatpush2.msra.mxu0 0.0
    %1611 = vmatprep.subr.mxu0 0.0
    %1612 = vmatpush2.msra.mxu0 0.0
    %1613 = vmatprep.subr.mxu0 0.0
    %1614 = vmatpush2.msra.mxu0 0.0
    %1615 = vmatprep.subr.mxu0 0.0
    %1616 = vmatpush2.msra.mxu0 0.0
    %1617 = vmatprep.subr.mxu0 0.0
    %1618 = vmatpush2.msra.mxu0 0.0
    %1619 = vmatprep.subr.mxu0 0.0
    %1620 = vmatpush2.msra.mxu0 0.0
    %1621 = vmatprep.subr.mxu0 0.0
    %1622 = vmatpush2.msra.mxu0 0.0
    %1623 = vmatprep.subr.mxu0 0.0
    %1624 = vmatpush2.msra.mxu0 0.0
    %1625 = vmatprep.subr.mxu0 0.0
    %1626 = vmatpush2.msra.mxu0 0.0
    %1627 = vmatprep.subr.mxu0 0.0
    %1628 = vmatpush2.msra.mxu0 0.0
    %1629 = vmatprep.mubr.f32.mxu0 0.0
    %1630 = vmatmul.mubr.f32.gmra.mxu0 %v1563
    %v1631 = vpop.f32.mrf.mxu0
    %v1632 = vadd.f32 %v192, %v1631
    %v1633 = vpop.f32.mrf.mxu0
    %1634 = vdwg.mxu0
    %v1635 = vsel %vm538, %v1632, -inf
    %1636 = vmax.xlane.f32.xlu0 %v1635
    %v1637 = vpop.xlane.xlu0 %1636
    %v1638 = vsub.f32 %v1632, %v1637
    %v1639 = vmul.f32 %v1638, 1.442695
    %v1640 = vpow.pop %v1639
    %v1641 = vsel %vm538, %v1640, 0.0
    %1642 = vadd.xlane.f32.xlu0 %v1641
    %v1643 = vpop.xlane.xlu0 %1642
    %v1644 = vlog2.pop %v1643
    %v1645 = vmul.f32 %v1644, 0.6931472
    %v1646 = vadd.f32 %v1645, %v1637
    %v1647 = vsub.f32 %v1632, %v1646
    %1648 = vst.msk [vmem:[#allocation7 + $0x3] sm:$0x1] %vm538, %v1647
    %1650 = vst.msk [vmem:[#allocation8 + $0x3] sm:$0x1] %vm554, %v1562
    %1651 = vst [vmem:[#allocation10] sm:$0x8] %v1377
    %1652 = vmatprep.subr.mxu0 0.0
    %1653 = vmatpush1.msra.mxu0 0.0
    %1654 = vmatprep.subr.mxu0 0.0
    %1655 = vmatpush1.msra.mxu0 0.0
    %1656 = vmatprep.subr.mxu0 0.0
    %1657 = vmatpush1.msra.mxu0 0.0
    %1658 = vmatprep.subr.mxu0 0.0
    %1659 = vmatpush1.msra.mxu0 0.0
    %1660 = vmatprep.subr.mxu0 0.0
    %1661 = vmatpush1.msra.mxu0 0.0
    %1662 = vmatprep.subr.mxu0 0.0
    %1663 = vmatpush1.msra.mxu0 0.0
    %1664 = vmatprep.subr.mxu0 0.0
    %1665 = vmatpush1.msra.mxu0 0.0
    %1666 = vmatprep.subr.mxu0 0.0
    %1667 = vmatpush1.msra.mxu0 0.0
    %1668 = vmatprep.subr.mxu0 0.0
    %1669 = vmatpush1.msra.mxu0 0.0
    %1670 = vmatprep.subr.mxu0 0.0
    %1671 = vmatpush1.msra.mxu0 0.0
    %1672 = vmatprep.subr.mxu0 0.0
    %1673 = vmatpush1.msra.mxu0 0.0
    %1674 = vmatprep.subr.mxu0 0.0
    %1675 = vmatpush1.msra.mxu0 0.0
    %1676 = vmatprep.subr.mxu0 %v182
    %1677 = vmatpush1.msra.mxu0 %v181
    %1678 = vmatprep.subr.mxu0 %v180
    %1679 = vmatpush1.msra.mxu0 %v179
    %1680 = vmatprep.subr.mxu0 %v178
    %1681 = vmatpush1.msra.mxu0 %v177
    %1682 = vmatprep.subr.mxu0 %v176
    %1683 = vmatpush1.msra.mxu0 %v175
    %1684 = vmatprep.subr.mxu0 0.0
    %1685 = vmatpush2.msra.mxu0 0.0
    %1686 = vmatprep.subr.mxu0 0.0
    %1687 = vmatpush2.msra.mxu0 0.0
    %1688 = vmatprep.subr.mxu0 0.0
    %1689 = vmatpush2.msra.mxu0 0.0
    %1690 = vmatprep.subr.mxu0 0.0
    %1691 = vmatpush2.msra.mxu0 0.0
    %1692 = vmatprep.subr.mxu0 0.0
    %1693 = vmatpush2.msra.mxu0 0.0
    %1694 = vmatprep.subr.mxu0 0.0
    %1695 = vmatpush2.msra.mxu0 0.0
    %1696 = vmatprep.subr.mxu0 0.0
    %1697 = vmatpush2.msra.mxu0 0.0
    %1698 = vmatprep.subr.mxu0 0.0
    %1699 = vmatpush2.msra.mxu0 0.0
    %1700 = vmatprep.subr.mxu0 0.0
    %1701 = vmatpush2.msra.mxu0 0.0
    %1702 = vmatprep.subr.mxu0 0.0
    %1703 = vmatpush2.msra.mxu0 0.0
    %1704 = vmatprep.subr.mxu0 0.0
    %1705 = vmatpush2.msra.mxu0 0.0
    %1706 = vmatprep.subr.mxu0 0.0
    %1707 = vmatpush2.msra.mxu0 0.0
    %1708 = vmatprep.subr.mxu0 0.0
    %1709 = vmatpush2.msra.mxu0 0.0
    %1710 = vmatprep.subr.mxu0 0.0
    %1711 = vmatpush2.msra.mxu0 0.0
    %1712 = vmatprep.subr.mxu0 0.0
    %1713 = vmatpush2.msra.mxu0 0.0
    %1714 = vmatprep.subr.mxu0 0.0
    %1715 = vmatpush2.msra.mxu0 0.0
    %1716 = vmatprep.mubr.f32.mxu0 0.0
    %1717 = vmatmul.mubr.f32.gmra.mxu0 %v1563
    %v1718 = vpop.f32.mrf.mxu0
    %v1719 = vadd.f32 0.0, %v1718
    %v1720 = vpop.f32.mrf.mxu0
    %v1721 = vadd.f32 0.0, %v1720
    %1722 = vdwg.mxu0
    %v1725 = vrot.slane %v1719, 4
    %v1726 = vrot.slane %v1721, 4
    %v1729 = vadd.f32 %v155, %v1725
    %v1730 = vadd.f32 %v157, %v1726
    %vm1731 = vcmask 1044484
    %v1732 = vsel %vm1731, %v1729, -inf
    %1733 = vmax.xlane.f32.xlu0 %v1732
    %v1734 = vpop.xlane.xlu0 %1733
    %v1735 = vsub.f32 %v1729, %v1734
    %v1736 = vmul.f32 %v1735, 1.442695
    %v1737 = vpow.pop %v1736
    %v1738 = vsel %vm1731, %v1737, 0.0
    %1739 = vadd.xlane.f32.xlu0 %v1738
    %v1740 = vpop.xlane.xlu0 %1739
    %v1741 = vrcp.pop %v1740
    %v1742 = vmul.f32 %v1737, %v1741
    %v1744 = vrot.slane %v1742, 4
    %1746 = vmatprep.subr.mxu0 0.0
    %1747 = vmatpush1.msra.mxu0 %v174
    %1748 = vmatprep.subr.mxu0 0.0
    %1749 = vmatpush1.msra.mxu0 %v173
    %1750 = vmatprep.subr.mxu0 0.0
    %1751 = vmatpush1.msra.mxu0 %v172
    %1752 = vmatprep.subr.mxu0 0.0
    %1753 = vmatpush1.msra.mxu0 %v171
    %1754 = vmatprep.subr.mxu0 0.0
    %1755 = vmatpush1.msra.mxu0 %v170
    %1756 = vmatprep.subr.mxu0 0.0
    %1757 = vmatpush1.msra.mxu0 %v169
    %1758 = vmatprep.subr.mxu0 0.0
    %1759 = vmatpush1.msra.mxu0 %v168
    %1760 = vmatprep.subr.mxu0 0.0
    %1761 = vmatpush1.msra.mxu0 %v167
    %1762 = vmatprep.subr.mxu0 0.0
    %1763 = vmatpush1.msra.mxu0 %v166
    %1764 = vmatprep.subr.mxu0 0.0
    %1765 = vmatpush1.msra.mxu0 %v165
    %1766 = vmatprep.subr.mxu0 0.0
    %1767 = vmatpush1.msra.mxu0 %v164
    %1768 = vmatprep.subr.mxu0 0.0
    %1769 = vmatpush1.msra.mxu0 %v163
    %1770 = vmatprep.subr.mxu0 0.0
    %1771 = vmatpush1.msra.mxu0 %v162
    %1772 = vmatprep.subr.mxu0 0.0
    %1773 = vmatpush1.msra.mxu0 %v161
    %1774 = vmatprep.subr.mxu0 0.0
    %1775 = vmatpush1.msra.mxu0 %v160
    %1776 = vmatprep.subr.mxu0 0.0
    %1777 = vmatpush1.msra.mxu0 %v159
    %1778 = vmatprep.subr.mxu0 0.0
    %1779 = vmatpush2.msra.mxu0 0.0
    %1780 = vmatprep.subr.mxu0 0.0
    %1781 = vmatpush2.msra.mxu0 0.0
    %1782 = vmatprep.subr.mxu0 0.0
    %1783 = vmatpush2.msra.mxu0 0.0
    %1784 = vmatprep.subr.mxu0 0.0
    %1785 = vmatpush2.msra.mxu0 0.0
    %1786 = vmatprep.subr.mxu0 0.0
    %1787 = vmatpush2.msra.mxu0 0.0
    %1788 = vmatprep.subr.mxu0 0.0
    %1789 = vmatpush2.msra.mxu0 0.0
    %1790 = vmatprep.subr.mxu0 0.0
    %1791 = vmatpush2.msra.mxu0 0.0
    %1792 = vmatprep.subr.mxu0 0.0
    %1793 = vmatpush2.msra.mxu0 0.0
    %1794 = vmatprep.subr.mxu0 0.0
    %1795 = vmatpush2.msra.mxu0 0.0
    %1796 = vmatprep.subr.mxu0 0.0
    %1797 = vmatpush2.msra.mxu0 0.0
    %1798 = vmatprep.subr.mxu0 0.0
    %1799 = vmatpush2.msra.mxu0 0.0
    %1800 = vmatprep.subr.mxu0 0.0
    %1801 = vmatpush2.msra.mxu0 0.0
    %1802 = vmatprep.subr.mxu0 0.0
    %1803 = vmatpush2.msra.mxu0 0.0
    %1804 = vmatprep.subr.mxu0 0.0
    %1805 = vmatpush2.msra.mxu0 0.0
    %1806 = vmatprep.subr.mxu0 0.0
    %1807 = vmatpush2.msra.mxu0 0.0
    %1808 = vmatprep.subr.mxu0 0.0
    %1809 = vmatpush2.msra.mxu0 0.0
    %1810 = vmatprep.mubr.f32.mxu0 0.0
    %1811 = vmatmul.mubr.f32.gmra.mxu0 %v1744
    %v1812 = vpop.f32.mrf.mxu0
    %v1813 = vadd.f32 0.0, %v1812
    %v1814 = vpop.f32.mrf.mxu0
    %1815 = vdwg.mxu0
    %v1817 = vrot.slane %v1813, 4
    %v1819 = vadd.f32 %v1730, %v1817
    %v1820 = vmax.f32 %v1819, 0.0
    %v1822 = vrot.slane %v1820, 4
    %v1823 = vsel %vm84, %v1822, 0
    %1825 = vmatprep.subr.mxu0 0.0
    %1826 = vmatpush1.msra.mxu0 0.0
    %1827 = vmatprep.subr.mxu0 0.0
    %1828 = vmatpush1.msra.mxu0 0.0
    %1829 = vmatprep.subr.mxu0 0.0
    %1830 = vmatpush1.msra.mxu0 0.0
    %1831 = vmatprep.subr.mxu0 0.0
    %1832 = vmatpush1.msra.mxu0 0.0
    %1833 = vmatprep.subr.mxu0 0.0
    %1834 = vmatpush1.msra.mxu0 0.0
    %1835 = vmatprep.subr.mxu0 0.0
    %1836 = vmatpush1.msra.mxu0 0.0
    %1837 = vmatprep.subr.mxu0 0.0
    %1838 = vmatpush1.msra.mxu0 0.0
    %1839 = vmatprep.subr.mxu0 0.0
    %1840 = vmatpush1.msra.mxu0 0.0
    %1841 = vmatprep.subr.mxu0 0.0
    %1842 = vmatpush1.msra.mxu0 0.0
    %1843 = vmatprep.subr.mxu0 0.0
    %1844 = vmatpush1.msra.mxu0 0.0
    %1845 = vmatprep.subr.mxu0 0.0
    %1846 = vmatpush1.msra.mxu0 0.0
    %1847 = vmatprep.subr.mxu0 0.0
    %1848 = vmatpush1.msra.mxu0 0.0
    %1849 = vmatprep.subr.mxu0 0.0
    %1850 = vmatpush1.msra.mxu0 %v186
    %1851 = vmatprep.subr.mxu0 0.0
    %1852 = vmatpush1.msra.mxu0 %v185
    %1853 = vmatprep.subr.mxu0 0.0
    %1854 = vmatpush1.msra.mxu0 %v184
    %1855 = vmatprep.subr.mxu0 0.0
    %1856 = vmatpush1.msra.mxu0 %v183
    %1857 = vmatprep.subr.mxu0 0.0
    %1858 = vmatpush2.msra.mxu0 0.0
    %1859 = vmatprep.subr.mxu0 0.0
    %1860 = vmatpush2.msra.mxu0 0.0
    %1861 = vmatprep.subr.mxu0 0.0
    %1862 = vmatpush2.msra.mxu0 0.0
    %1863 = vmatprep.subr.mxu0 0.0
    %1864 = vmatpush2.msra.mxu0 0.0
    %1865 = vmatprep.subr.mxu0 0.0
    %1866 = vmatpush2.msra.mxu0 0.0
    %1867 = vmatprep.subr.mxu0 0.0
    %1868 = vmatpush2.msra.mxu0 0.0
    %1869 = vmatprep.subr.mxu0 0.0
    %1870 = vmatpush2.msra.mxu0 0.0
    %1871 = vmatprep.subr.mxu0 0.0
    %1872 = vmatpush2.msra.mxu0 0.0
    %1873 = vmatprep.subr.mxu0 0.0
    %1874 = vmatpush2.msra.mxu0 0.0
    %1875 = vmatprep.subr.mxu0 0.0
    %1876 = vmatpush2.msra.mxu0 0.0
    %1877 = vmatprep.subr.mxu0 0.0
    %1878 = vmatpush2.msra.mxu0 0.0
    %1879 = vmatprep.subr.mxu0 0.0
    %1880 = vmatpush2.msra.mxu0 0.0
    %1881 = vmatprep.subr.mxu0 0.0
    %1882 = vmatpush2.msra.mxu0 0.0
    %1883 = vmatprep.subr.mxu0 0.0
    %1884 = vmatpush2.msra.mxu0 0.0
    %1885 = vmatprep.subr.mxu0 0.0
    %1886 = vmatpush2.msra.mxu0 0.0
    %1887 = vmatprep.subr.mxu0 0.0
    %1888 = vmatpush2.msra.mxu0 0.0
    %1889 = vmatprep.mubr.f32.mxu0 0.0
    %1890 = vmatmul.mubr.f32.gmra.mxu0 %v1823
    %v1891 = vpop.f32.mrf.mxu0
    %v1892 = vadd.f32 %v187, %v1891
    %v1893 = vpop.f32.mrf.mxu0
    %1894 = vdwg.mxu0
    %v1896 = vrot.slane %v1730, 4
    %1897 = vrot.lane.b32.xlu0 %v1896, 96
    %v1898 = vpop.permute.xlu0 %1897
    %v1900 = vadd.f32 %v1892, %v1898
    %v1901 = vxor.u32 %v1900, 2147483648
    %v1902 = vmul.f32 %v1901, 1.442695
    %v1903 = vpow.pop %v1902
    %v1904 = vadd.f32 %v1903, 1.0
    %v1905 = vrcp.pop %v1904
    %v1906 = vmul.f32 1.0, %v1905
    %1907 = vrot.lane.b32.xlu0 %v1896, 32
    %v1908 = vpop.permute.xlu0 %1907
    %v1910 = vmul.f32 %v1906, %v1908
    %1912 = vrot.lane.b32.xlu0 %v1910, 64
    %v1913 = vpop.permute.xlu0 %1912
    %v1915 = vadd.f32 %v1892, %v1913
    %v1916 = vtanh.pop %v1915
    %v1917 = vsub.f32 1.0, %v1906
    %1919 = vrot.lane.b32.xlu0 %v1916, 96
    %v1920 = vpop.permute.xlu0 %1919
    %v1922 = vmul.f32 %v1917, %v1920
    %v1923 = vmul.f32 %v1906, %v1559
    %v1924 = vadd.f32 %v1922, %v1923
    %1926 = vrot.lane.b32.xlu0 %v1924, 96
    %v1927 = vpop.permute.xlu0 %1926
    %v1928 = vsel %vm84, %v1927, 0
    %1930 = vmatprep.subr.mxu0 0.0
    %1931 = vmatpush1.msra.mxu0 0.0
    %1932 = vmatprep.subr.mxu0 0.0
    %1933 = vmatpush1.msra.mxu0 0.0
    %1934 = vmatprep.subr.mxu0 0.0
    %1935 = vmatpush1.msra.mxu0 0.0
    %1936 = vmatprep.subr.mxu0 0.0
    %1937 = vmatpush1.msra.mxu0 0.0
    %1938 = vmatprep.subr.mxu0 0.0
    %1939 = vmatpush1.msra.mxu0 0.0
    %1940 = vmatprep.subr.mxu0 0.0
    %1941 = vmatpush1.msra.mxu0 0.0
    %1942 = vmatprep.subr.mxu0 0.0
    %1943 = vmatpush1.msra.mxu0 0.0
    %1944 = vmatprep.subr.mxu0 0.0
    %1945 = vmatpush1.msra.mxu0 0.0
    %1946 = vmatprep.subr.mxu0 0.0
    %1947 = vmatpush1.msra.mxu0 0.0
    %1948 = vmatprep.subr.mxu0 0.0
    %1949 = vmatpush1.msra.mxu0 0.0
    %1950 = vmatprep.subr.mxu0 0.0
    %1951 = vmatpush1.msra.mxu0 0.0
    %1952 = vmatprep.subr.mxu0 0.0
    %1953 = vmatpush1.msra.mxu0 0.0
    %1954 = vmatprep.subr.mxu0 0.0
    %1955 = vmatpush1.msra.mxu0 %v191
    %1956 = vmatprep.subr.mxu0 0.0
    %1957 = vmatpush1.msra.mxu0 %v190
    %1958 = vmatprep.subr.mxu0 0.0
    %1959 = vmatpush1.msra.mxu0 %v189
    %1960 = vmatprep.subr.mxu0 0.0
    %1961 = vmatpush1.msra.mxu0 %v188
    %1962 = vmatprep.subr.mxu0 0.0
    %1963 = vmatpush2.msra.mxu0 0.0
    %1964 = vmatprep.subr.mxu0 0.0
    %1965 = vmatpush2.msra.mxu0 0.0
    %1966 = vmatprep.subr.mxu0 0.0
    %1967 = vmatpush2.msra.mxu0 0.0
    %1968 = vmatprep.subr.mxu0 0.0
    %1969 = vmatpush2.msra.mxu0 0.0
    %1970 = vmatprep.subr.mxu0 0.0
    %1971 = vmatpush2.msra.mxu0 0.0
    %1972 = vmatprep.subr.mxu0 0.0
    %1973 = vmatpush2.msra.mxu0 0.0
    %1974 = vmatprep.subr.mxu0 0.0
    %1975 = vmatpush2.msra.mxu0 0.0
    %1976 = vmatprep.subr.mxu0 0.0
    %1977 = vmatpush2.msra.mxu0 0.0
    %1978 = vmatprep.subr.mxu0 0.0
    %1979 = vmatpush2.msra.mxu0 0.0
    %1980 = vmatprep.subr.mxu0 0.0
    %1981 = vmatpush2.msra.mxu0 0.0
    %1982 = vmatprep.subr.mxu0 0.0
    %1983 = vmatpush2.msra.mxu0 0.0
    %1984 = vmatprep.subr.mxu0 0.0
    %1985 = vmatpush2.msra.mxu0 0.0
    %1986 = vmatprep.subr.mxu0 0.0
    %1987 = vmatpush2.msra.mxu0 0.0
    %1988 = vmatprep.subr.mxu0 0.0
    %1989 = vmatpush2.msra.mxu0 0.0
    %1990 = vmatprep.subr.mxu0 0.0
    %1991 = vmatpush2.msra.mxu0 0.0
    %1992 = vmatprep.subr.mxu0 0.0
    %1993 = vmatpush2.msra.mxu0 0.0
    %1994 = vmatprep.mubr.f32.mxu0 0.0
    %1995 = vmatmul.mubr.f32.gmra.mxu0 %v1928
    %v1996 = vpop.f32.mrf.mxu0
    %v1997 = vadd.f32 %v192, %v1996
    %v1998 = vpop.f32.mrf.mxu0
    %1999 = vdwg.mxu0
    %v2000 = vsel %vm538, %v1997, -inf
    %2001 = vmax.xlane.f32.xlu0 %v2000
    %v2002 = vpop.xlane.xlu0 %2001
    %v2003 = vsub.f32 %v1997, %v2002
    %v2004 = vmul.f32 %v2003, 1.442695
    %v2005 = vpow.pop %v2004
    %v2006 = vsel %vm538, %v2005, 0.0
    %2007 = vadd.xlane.f32.xlu0 %v2006
    %v2008 = vpop.xlane.xlu0 %2007
    %v2009 = vlog2.pop %v2008
    %v2010 = vmul.f32 %v2009, 0.6931472
    %v2011 = vadd.f32 %v2010, %v2002
    %v2012 = vsub.f32 %v1997, %v2011
    %2013 = vst.msk [vmem:[#allocation7 + $0x4] sm:$0x1] %vm538, %v2012
    %2015 = vst.msk [vmem:[#allocation8 + $0x4] sm:$0x1] %vm554, %v1927
    %2016 = vst [vmem:[#allocation10] sm:$0x10] %v1742
    %2017 = vmatprep.subr.mxu0 0.0
    %2018 = vmatpush1.msra.mxu0 0.0
    %2019 = vmatprep.subr.mxu0 0.0
    %2020 = vmatpush1.msra.mxu0 0.0
    %2021 = vmatprep.subr.mxu0 0.0
    %2022 = vmatpush1.msra.mxu0 0.0
    %2023 = vmatprep.subr.mxu0 0.0
    %2024 = vmatpush1.msra.mxu0 0.0
    %2025 = vmatprep.subr.mxu0 0.0
    %2026 = vmatpush1.msra.mxu0 0.0
    %2027 = vmatprep.subr.mxu0 0.0
    %2028 = vmatpush1.msra.mxu0 0.0
    %2029 = vmatprep.subr.mxu0 0.0
    %2030 = vmatpush1.msra.mxu0 0.0
    %2031 = vmatprep.subr.mxu0 0.0
    %2032 = vmatpush1.msra.mxu0 0.0
    %2033 = vmatprep.subr.mxu0 0.0
    %2034 = vmatpush1.msra.mxu0 0.0
    %2035 = vmatprep.subr.mxu0 0.0
    %2036 = vmatpush1.msra.mxu0 0.0
    %2037 = vmatprep.subr.mxu0 0.0
    %2038 = vmatpush1.msra.mxu0 0.0
    %2039 = vmatprep.subr.mxu0 0.0
    %2040 = vmatpush1.msra.mxu0 0.0
    %2041 = vmatprep.subr.mxu0 %v182
    %2042 = vmatpush1.msra.mxu0 %v181
    %2043 = vmatprep.subr.mxu0 %v180
    %2044 = vmatpush1.msra.mxu0 %v179
    %2045 = vmatprep.subr.mxu0 %v178
    %2046 = vmatpush1.msra.mxu0 %v177
    %2047 = vmatprep.subr.mxu0 %v176
    %2048 = vmatpush1.msra.mxu0 %v175
    %2049 = vmatprep.subr.mxu0 0.0
    %2050 = vmatpush2.msra.mxu0 0.0
    %2051 = vmatprep.subr.mxu0 0.0
    %2052 = vmatpush2.msra.mxu0 0.0
    %2053 = vmatprep.subr.mxu0 0.0
    %2054 = vmatpush2.msra.mxu0 0.0
    %2055 = vmatprep.subr.mxu0 0.0
    %2056 = vmatpush2.msra.mxu0 0.0
    %2057 = vmatprep.subr.mxu0 0.0
    %2058 = vmatpush2.msra.mxu0 0.0
    %2059 = vmatprep.subr.mxu0 0.0
    %2060 = vmatpush2.msra.mxu0 0.0
    %2061 = vmatprep.subr.mxu0 0.0
    %2062 = vmatpush2.msra.mxu0 0.0
    %2063 = vmatprep.subr.mxu0 0.0
    %2064 = vmatpush2.msra.mxu0 0.0
    %2065 = vmatprep.subr.mxu0 0.0
    %2066 = vmatpush2.msra.mxu0 0.0
    %2067 = vmatprep.subr.mxu0 0.0
    %2068 = vmatpush2.msra.mxu0 0.0
    %2069 = vmatprep.subr.mxu0 0.0
    %2070 = vmatpush2.msra.mxu0 0.0
    %2071 = vmatprep.subr.mxu0 0.0
    %2072 = vmatpush2.msra.mxu0 0.0
    %2073 = vmatprep.subr.mxu0 0.0
    %2074 = vmatpush2.msra.mxu0 0.0
    %2075 = vmatprep.subr.mxu0 0.0
    %2076 = vmatpush2.msra.mxu0 0.0
    %2077 = vmatprep.subr.mxu0 0.0
    %2078 = vmatpush2.msra.mxu0 0.0
    %2079 = vmatprep.subr.mxu0 0.0
    %2080 = vmatpush2.msra.mxu0 0.0
    %2081 = vmatprep.mubr.f32.mxu0 0.0
    %2082 = vmatmul.mubr.f32.gmra.mxu0 %v1928
    %v2083 = vpop.f32.mrf.mxu0
    %v2084 = vadd.f32 0.0, %v2083
    %v2085 = vpop.f32.mrf.mxu0
    %v2086 = vadd.f32 0.0, %v2085
    %2087 = vdwg.mxu0
    %v2090 = vrot.slane %v2084, 3
    %v2091 = vrot.slane %v2086, 3
    %v2094 = vadd.f32 %v155, %v2090
    %v2095 = vadd.f32 %v157, %v2091
    %vm2096 = vcmask 1045509
    %v2097 = vsel %vm2096, %v2094, -inf
    %2098 = vmax.xlane.f32.xlu0 %v2097
    %v2099 = vpop.xlane.xlu0 %2098
    %v2100 = vsub.f32 %v2094, %v2099
    %v2101 = vmul.f32 %v2100, 1.442695
    %v2102 = vpow.pop %v2101
    %v2103 = vsel %vm2096, %v2102, 0.0
    %2104 = vadd.xlane.f32.xlu0 %v2103
    %v2105 = vpop.xlane.xlu0 %2104
    %v2106 = vrcp.pop %v2105
    %v2107 = vmul.f32 %v2102, %v2106
    %v2109 = vrot.slane %v2107, 5
    %2111 = vmatprep.subr.mxu0 0.0
    %2112 = vmatpush1.msra.mxu0 %v174
    %2113 = vmatprep.subr.mxu0 0.0
    %2114 = vmatpush1.msra.mxu0 %v173
    %2115 = vmatprep.subr.mxu0 0.0
    %2116 = vmatpush1.msra.mxu0 %v172
    %2117 = vmatprep.subr.mxu0 0.0
    %2118 = vmatpush1.msra.mxu0 %v171
    %2119 = vmatprep.subr.mxu0 0.0
    %2120 = vmatpush1.msra.mxu0 %v170
    %2121 = vmatprep.subr.mxu0 0.0
    %2122 = vmatpush1.msra.mxu0 %v169
    %2123 = vmatprep.subr.mxu0 0.0
    %2124 = vmatpush1.msra.mxu0 %v168
    %2125 = vmatprep.subr.mxu0 0.0
    %2126 = vmatpush1.msra.mxu0 %v167
    %2127 = vmatprep.subr.mxu0 0.0
    %2128 = vmatpush1.msra.mxu0 %v166
    %2129 = vmatprep.subr.mxu0 0.0
    %2130 = vmatpush1.msra.mxu0 %v165
    %2131 = vmatprep.subr.mxu0 0.0
    %2132 = vmatpush1.msra.mxu0 %v164
    %2133 = vmatprep.subr.mxu0 0.0
    %2134 = vmatpush1.msra.mxu0 %v163
    %2135 = vmatprep.subr.mxu0 0.0
    %2136 = vmatpush1.msra.mxu0 %v162
    %2137 = vmatprep.subr.mxu0 0.0
    %2138 = vmatpush1.msra.mxu0 %v161
    %2139 = vmatprep.subr.mxu0 0.0
    %2140 = vmatpush1.msra.mxu0 %v160
    %2141 = vmatprep.subr.mxu0 0.0
    %2142 = vmatpush1.msra.mxu0 %v159
    %2143 = vmatprep.subr.mxu0 0.0
    %2144 = vmatpush2.msra.mxu0 0.0
    %2145 = vmatprep.subr.mxu0 0.0
    %2146 = vmatpush2.msra.mxu0 0.0
    %2147 = vmatprep.subr.mxu0 0.0
    %2148 = vmatpush2.msra.mxu0 0.0
    %2149 = vmatprep.subr.mxu0 0.0
    %2150 = vmatpush2.msra.mxu0 0.0
    %2151 = vmatprep.subr.mxu0 0.0
    %2152 = vmatpush2.msra.mxu0 0.0
    %2153 = vmatprep.subr.mxu0 0.0
    %2154 = vmatpush2.msra.mxu0 0.0
    %2155 = vmatprep.subr.mxu0 0.0
    %2156 = vmatpush2.msra.mxu0 0.0
    %2157 = vmatprep.subr.mxu0 0.0
    %2158 = vmatpush2.msra.mxu0 0.0
    %2159 = vmatprep.subr.mxu0 0.0
    %2160 = vmatpush2.msra.mxu0 0.0
    %2161 = vmatprep.subr.mxu0 0.0
    %2162 = vmatpush2.msra.mxu0 0.0
    %2163 = vmatprep.subr.mxu0 0.0
    %2164 = vmatpush2.msra.mxu0 0.0
    %2165 = vmatprep.subr.mxu0 0.0
    %2166 = vmatpush2.msra.mxu0 0.0
    %2167 = vmatprep.subr.mxu0 0.0
    %2168 = vmatpush2.msra.mxu0 0.0
    %2169 = vmatprep.subr.mxu0 0.0
    %2170 = vmatpush2.msra.mxu0 0.0
    %2171 = vmatprep.subr.mxu0 0.0
    %2172 = vmatpush2.msra.mxu0 0.0
    %2173 = vmatprep.subr.mxu0 0.0
    %2174 = vmatpush2.msra.mxu0 0.0
    %2175 = vmatprep.mubr.f32.mxu0 0.0
    %2176 = vmatmul.mubr.f32.gmra.mxu0 %v2109
    %v2177 = vpop.f32.mrf.mxu0
    %v2178 = vadd.f32 0.0, %v2177
    %v2179 = vpop.f32.mrf.mxu0
    %2180 = vdwg.mxu0
    %v2182 = vrot.slane %v2178, 3
    %v2184 = vadd.f32 %v2095, %v2182
    %v2185 = vmax.f32 %v2184, 0.0
    %v2187 = vrot.slane %v2185, 5
    %v2188 = vsel %vm84, %v2187, 0
    %2190 = vmatprep.subr.mxu0 0.0
    %2191 = vmatpush1.msra.mxu0 0.0
    %2192 = vmatprep.subr.mxu0 0.0
    %2193 = vmatpush1.msra.mxu0 0.0
    %2194 = vmatprep.subr.mxu0 0.0
    %2195 = vmatpush1.msra.mxu0 0.0
    %2196 = vmatprep.subr.mxu0 0.0
    %2197 = vmatpush1.msra.mxu0 0.0
    %2198 = vmatprep.subr.mxu0 0.0
    %2199 = vmatpush1.msra.mxu0 0.0
    %2200 = vmatprep.subr.mxu0 0.0
    %2201 = vmatpush1.msra.mxu0 0.0
    %2202 = vmatprep.subr.mxu0 0.0
    %2203 = vmatpush1.msra.mxu0 0.0
    %2204 = vmatprep.subr.mxu0 0.0
    %2205 = vmatpush1.msra.mxu0 0.0
    %2206 = vmatprep.subr.mxu0 0.0
    %2207 = vmatpush1.msra.mxu0 0.0
    %2208 = vmatprep.subr.mxu0 0.0
    %2209 = vmatpush1.msra.mxu0 0.0
    %2210 = vmatprep.subr.mxu0 0.0
    %2211 = vmatpush1.msra.mxu0 0.0
    %2212 = vmatprep.subr.mxu0 0.0
    %2213 = vmatpush1.msra.mxu0 0.0
    %2214 = vmatprep.subr.mxu0 0.0
    %2215 = vmatpush1.msra.mxu0 %v186
    %2216 = vmatprep.subr.mxu0 0.0
    %2217 = vmatpush1.msra.mxu0 %v185
    %2218 = vmatprep.subr.mxu0 0.0
    %2219 = vmatpush1.msra.mxu0 %v184
    %2220 = vmatprep.subr.mxu0 0.0
    %2221 = vmatpush1.msra.mxu0 %v183
    %2222 = vmatprep.subr.mxu0 0.0
    %2223 = vmatpush2.msra.mxu0 0.0
    %2224 = vmatprep.subr.mxu0 0.0
    %2225 = vmatpush2.msra.mxu0 0.0
    %2226 = vmatprep.subr.mxu0 0.0
    %2227 = vmatpush2.msra.mxu0 0.0
    %2228 = vmatprep.subr.mxu0 0.0
    %2229 = vmatpush2.msra.mxu0 0.0
    %2230 = vmatprep.subr.mxu0 0.0
    %2231 = vmatpush2.msra.mxu0 0.0
    %2232 = vmatprep.subr.mxu0 0.0
    %2233 = vmatpush2.msra.mxu0 0.0
    %2234 = vmatprep.subr.mxu0 0.0
    %2235 = vmatpush2.msra.mxu0 0.0
    %2236 = vmatprep.subr.mxu0 0.0
    %2237 = vmatpush2.msra.mxu0 0.0
    %2238 = vmatprep.subr.mxu0 0.0
    %2239 = vmatpush2.msra.mxu0 0.0
    %2240 = vmatprep.subr.mxu0 0.0
    %2241 = vmatpush2.msra.mxu0 0.0
    %2242 = vmatprep.subr.mxu0 0.0
    %2243 = vmatpush2.msra.mxu0 0.0
    %2244 = vmatprep.subr.mxu0 0.0
    %2245 = vmatpush2.msra.mxu0 0.0
    %2246 = vmatprep.subr.mxu0 0.0
    %2247 = vmatpush2.msra.mxu0 0.0
    %2248 = vmatprep.subr.mxu0 0.0
    %2249 = vmatpush2.msra.mxu0 0.0
    %2250 = vmatprep.subr.mxu0 0.0
    %2251 = vmatpush2.msra.mxu0 0.0
    %2252 = vmatprep.subr.mxu0 0.0
    %2253 = vmatpush2.msra.mxu0 0.0
    %2254 = vmatprep.mubr.f32.mxu0 0.0
    %2255 = vmatmul.mubr.f32.gmra.mxu0 %v2188
    %v2256 = vpop.f32.mrf.mxu0
    %v2257 = vadd.f32 %v187, %v2256
    %v2258 = vpop.f32.mrf.mxu0
    %2259 = vdwg.mxu0
    %v2261 = vrot.slane %v2095, 5
    %2262 = vrot.lane.b32.xlu0 %v2261, 96
    %v2263 = vpop.permute.xlu0 %2262
    %v2265 = vadd.f32 %v2257, %v2263
    %v2266 = vxor.u32 %v2265, 2147483648
    %v2267 = vmul.f32 %v2266, 1.442695
    %v2268 = vpow.pop %v2267
    %v2269 = vadd.f32 %v2268, 1.0
    %v2270 = vrcp.pop %v2269
    %v2271 = vmul.f32 1.0, %v2270
    %2272 = vrot.lane.b32.xlu0 %v2261, 32
    %v2273 = vpop.permute.xlu0 %2272
    %v2275 = vmul.f32 %v2271, %v2273
    %2277 = vrot.lane.b32.xlu0 %v2275, 64
    %v2278 = vpop.permute.xlu0 %2277
    %v2280 = vadd.f32 %v2257, %v2278
    %v2281 = vtanh.pop %v2280
    %v2282 = vsub.f32 1.0, %v2271
    %2284 = vrot.lane.b32.xlu0 %v2281, 96
    %v2285 = vpop.permute.xlu0 %2284
    %v2287 = vmul.f32 %v2282, %v2285
    %v2288 = vmul.f32 %v2271, %v1924
    %v2289 = vadd.f32 %v2287, %v2288
    %2291 = vrot.lane.b32.xlu0 %v2289, 96
    %v2292 = vpop.permute.xlu0 %2291
    %v2293 = vsel %vm84, %v2292, 0
    %2295 = vmatprep.subr.mxu0 0.0
    %2296 = vmatpush1.msra.mxu0 0.0
    %2297 = vmatprep.subr.mxu0 0.0
    %2298 = vmatpush1.msra.mxu0 0.0
    %2299 = vmatprep.subr.mxu0 0.0
    %2300 = vmatpush1.msra.mxu0 0.0
    %2301 = vmatprep.subr.mxu0 0.0
    %2302 = vmatpush1.msra.mxu0 0.0
    %2303 = vmatprep.subr.mxu0 0.0
    %2304 = vmatpush1.msra.mxu0 0.0
    %2305 = vmatprep.subr.mxu0 0.0
    %2306 = vmatpush1.msra.mxu0 0.0
    %2307 = vmatprep.subr.mxu0 0.0
    %2308 = vmatpush1.msra.mxu0 0.0
    %2309 = vmatprep.subr.mxu0 0.0
    %2310 = vmatpush1.msra.mxu0 0.0
    %2311 = vmatprep.subr.mxu0 0.0
    %2312 = vmatpush1.msra.mxu0 0.0
    %2313 = vmatprep.subr.mxu0 0.0
    %2314 = vmatpush1.msra.mxu0 0.0
    %2315 = vmatprep.subr.mxu0 0.0
    %2316 = vmatpush1.msra.mxu0 0.0
    %2317 = vmatprep.subr.mxu0 0.0
    %2318 = vmatpush1.msra.mxu0 0.0
    %2319 = vmatprep.subr.mxu0 0.0
    %2320 = vmatpush1.msra.mxu0 %v191
    %2321 = vmatprep.subr.mxu0 0.0
    %2322 = vmatpush1.msra.mxu0 %v190
    %2323 = vmatprep.subr.mxu0 0.0
    %2324 = vmatpush1.msra.mxu0 %v189
    %2325 = vmatprep.subr.mxu0 0.0
    %2326 = vmatpush1.msra.mxu0 %v188
    %2327 = vmatprep.subr.mxu0 0.0
    %2328 = vmatpush2.msra.mxu0 0.0
    %2329 = vmatprep.subr.mxu0 0.0
    %2330 = vmatpush2.msra.mxu0 0.0
    %2331 = vmatprep.subr.mxu0 0.0
    %2332 = vmatpush2.msra.mxu0 0.0
    %2333 = vmatprep.subr.mxu0 0.0
    %2334 = vmatpush2.msra.mxu0 0.0
    %2335 = vmatprep.subr.mxu0 0.0
    %2336 = vmatpush2.msra.mxu0 0.0
    %2337 = vmatprep.subr.mxu0 0.0
    %2338 = vmatpush2.msra.mxu0 0.0
    %2339 = vmatprep.subr.mxu0 0.0
    %2340 = vmatpush2.msra.mxu0 0.0
    %2341 = vmatprep.subr.mxu0 0.0
    %2342 = vmatpush2.msra.mxu0 0.0
    %2343 = vmatprep.subr.mxu0 0.0
    %2344 = vmatpush2.msra.mxu0 0.0
    %2345 = vmatprep.subr.mxu0 0.0
    %2346 = vmatpush2.msra.mxu0 0.0
    %2347 = vmatprep.subr.mxu0 0.0
    %2348 = vmatpush2.msra.mxu0 0.0
    %2349 = vmatprep.subr.mxu0 0.0
    %2350 = vmatpush2.msra.mxu0 0.0
    %2351 = vmatprep.subr.mxu0 0.0
    %2352 = vmatpush2.msra.mxu0 0.0
    %2353 = vmatprep.subr.mxu0 0.0
    %2354 = vmatpush2.msra.mxu0 0.0
    %2355 = vmatprep.subr.mxu0 0.0
    %2356 = vmatpush2.msra.mxu0 0.0
    %2357 = vmatprep.subr.mxu0 0.0
    %2358 = vmatpush2.msra.mxu0 0.0
    %2359 = vmatprep.mubr.f32.mxu0 0.0
    %2360 = vmatmul.mubr.f32.gmra.mxu0 %v2293
    %v2361 = vpop.f32.mrf.mxu0
    %v2362 = vadd.f32 %v192, %v2361
    %v2363 = vpop.f32.mrf.mxu0
    %2364 = vdwg.mxu0
    %v2365 = vsel %vm538, %v2362, -inf
    %2366 = vmax.xlane.f32.xlu0 %v2365
    %v2367 = vpop.xlane.xlu0 %2366
    %v2368 = vsub.f32 %v2362, %v2367
    %v2369 = vmul.f32 %v2368, 1.442695
    %v2370 = vpow.pop %v2369
    %v2371 = vsel %vm538, %v2370, 0.0
    %2372 = vadd.xlane.f32.xlu0 %v2371
    %v2373 = vpop.xlane.xlu0 %2372
    %v2374 = vlog2.pop %v2373
    %v2375 = vmul.f32 %v2374, 0.6931472
    %v2376 = vadd.f32 %v2375, %v2367
    %v2377 = vsub.f32 %v2362, %v2376
    %2378 = vst.msk [vmem:[#allocation7 + $0x5] sm:$0x1] %vm538, %v2377
    %2380 = vst.msk [vmem:[#allocation8 + $0x5] sm:$0x1] %vm554, %v2292
    %2381 = vst [vmem:[#allocation10] sm:$0x20] %v2107
    %2382 = vmatprep.subr.mxu0 0.0
    %2383 = vmatpush1.msra.mxu0 0.0
    %2384 = vmatprep.subr.mxu0 0.0
    %2385 = vmatpush1.msra.mxu0 0.0
    %2386 = vmatprep.subr.mxu0 0.0
    %2387 = vmatpush1.msra.mxu0 0.0
    %2388 = vmatprep.subr.mxu0 0.0
    %2389 = vmatpush1.msra.mxu0 0.0
    %2390 = vmatprep.subr.mxu0 0.0
    %2391 = vmatpush1.msra.mxu0 0.0
    %2392 = vmatprep.subr.mxu0 0.0
    %2393 = vmatpush1.msra.mxu0 0.0
    %2394 = vmatprep.subr.mxu0 0.0
    %2395 = vmatpush1.msra.mxu0 0.0
    %2396 = vmatprep.subr.mxu0 0.0
    %2397 = vmatpush1.msra.mxu0 0.0
    %2398 = vmatprep.subr.mxu0 0.0
    %2399 = vmatpush1.msra.mxu0 0.0
    %2400 = vmatprep.subr.mxu0 0.0
    %2401 = vmatpush1.msra.mxu0 0.0
    %2402 = vmatprep.subr.mxu0 0.0
    %2403 = vmatpush1.msra.mxu0 0.0
    %2404 = vmatprep.subr.mxu0 0.0
    %2405 = vmatpush1.msra.mxu0 0.0
    %2406 = vmatprep.subr.mxu0 %v182
    %2407 = vmatpush1.msra.mxu0 %v181
    %2408 = vmatprep.subr.mxu0 %v180
    %2409 = vmatpush1.msra.mxu0 %v179
    %2410 = vmatprep.subr.mxu0 %v178
    %2411 = vmatpush1.msra.mxu0 %v177
    %2412 = vmatprep.subr.mxu0 %v176
    %2413 = vmatpush1.msra.mxu0 %v175
    %2414 = vmatprep.subr.mxu0 0.0
    %2415 = vmatpush2.msra.mxu0 0.0
    %2416 = vmatprep.subr.mxu0 0.0
    %2417 = vmatpush2.msra.mxu0 0.0
    %2418 = vmatprep.subr.mxu0 0.0
    %2419 = vmatpush2.msra.mxu0 0.0
    %2420 = vmatprep.subr.mxu0 0.0
    %2421 = vmatpush2.msra.mxu0 0.0
    %2422 = vmatprep.subr.mxu0 0.0
    %2423 = vmatpush2.msra.mxu0 0.0
    %2424 = vmatprep.subr.mxu0 0.0
    %2425 = vmatpush2.msra.mxu0 0.0
    %2426 = vmatprep.subr.mxu0 0.0
    %2427 = vmatpush2.msra.mxu0 0.0
    %2428 = vmatprep.subr.mxu0 0.0
    %2429 = vmatpush2.msra.mxu0 0.0
    %2430 = vmatprep.subr.mxu0 0.0
    %2431 = vmatpush2.msra.mxu0 0.0
    %2432 = vmatprep.subr.mxu0 0.0
    %2433 = vmatpush2.msra.mxu0 0.0
    %2434 = vmatprep.subr.mxu0 0.0
    %2435 = vmatpush2.msra.mxu0 0.0
    %2436 = vmatprep.subr.mxu0 0.0
    %2437 = vmatpush2.msra.mxu0 0.0
    %2438 = vmatprep.subr.mxu0 0.0
    %2439 = vmatpush2.msra.mxu0 0.0
    %2440 = vmatprep.subr.mxu0 0.0
    %2441 = vmatpush2.msra.mxu0 0.0
    %2442 = vmatprep.subr.mxu0 0.0
    %2443 = vmatpush2.msra.mxu0 0.0
    %2444 = vmatprep.subr.mxu0 0.0
    %2445 = vmatpush2.msra.mxu0 0.0
    %2446 = vmatprep.mubr.f32.mxu0 0.0
    %2447 = vmatmul.mubr.f32.gmra.mxu0 %v2293
    %v2448 = vpop.f32.mrf.mxu0
    %v2449 = vadd.f32 0.0, %v2448
    %v2450 = vpop.f32.mrf.mxu0
    %v2451 = vadd.f32 0.0, %v2450
    %2452 = vdwg.mxu0
    %v2455 = vrot.slane %v2449, 2
    %v2456 = vrot.slane %v2451, 2
    %v2459 = vadd.f32 %v155, %v2455
    %v2460 = vadd.f32 %v157, %v2456
    %vm2461 = vcmask 1046534
    %v2462 = vsel %vm2461, %v2459, -inf
    %2463 = vmax.xlane.f32.xlu0 %v2462
    %v2464 = vpop.xlane.xlu0 %2463
    %v2465 = vsub.f32 %v2459, %v2464
    %v2466 = vmul.f32 %v2465, 1.442695
    %v2467 = vpow.pop %v2466
    %v2468 = vsel %vm2461, %v2467, 0.0
    %2469 = vadd.xlane.f32.xlu0 %v2468
    %v2470 = vpop.xlane.xlu0 %2469
    %v2471 = vrcp.pop %v2470
    %v2472 = vmul.f32 %v2467, %v2471
    %v2474 = vrot.slane %v2472, 6
    %2476 = vmatprep.subr.mxu0 0.0
    %2477 = vmatpush1.msra.mxu0 %v174
    %2478 = vmatprep.subr.mxu0 0.0
    %2479 = vmatpush1.msra.mxu0 %v173
    %2480 = vmatprep.subr.mxu0 0.0
    %2481 = vmatpush1.msra.mxu0 %v172
    %2482 = vmatprep.subr.mxu0 0.0
    %2483 = vmatpush1.msra.mxu0 %v171
    %2484 = vmatprep.subr.mxu0 0.0
    %2485 = vmatpush1.msra.mxu0 %v170
    %2486 = vmatprep.subr.mxu0 0.0
    %2487 = vmatpush1.msra.mxu0 %v169
    %2488 = vmatprep.subr.mxu0 0.0
    %2489 = vmatpush1.msra.mxu0 %v168
    %2490 = vmatprep.subr.mxu0 0.0
    %2491 = vmatpush1.msra.mxu0 %v167
    %2492 = vmatprep.subr.mxu0 0.0
    %2493 = vmatpush1.msra.mxu0 %v166
    %2494 = vmatprep.subr.mxu0 0.0
    %2495 = vmatpush1.msra.mxu0 %v165
    %2496 = vmatprep.subr.mxu0 0.0
    %2497 = vmatpush1.msra.mxu0 %v164
    %2498 = vmatprep.subr.mxu0 0.0
    %2499 = vmatpush1.msra.mxu0 %v163
    %2500 = vmatprep.subr.mxu0 0.0
    %2501 = vmatpush1.msra.mxu0 %v162
    %2502 = vmatprep.subr.mxu0 0.0
    %2503 = vmatpush1.msra.mxu0 %v161
    %2504 = vmatprep.subr.mxu0 0.0
    %2505 = vmatpush1.msra.mxu0 %v160
    %2506 = vmatprep.subr.mxu0 0.0
    %2507 = vmatpush1.msra.mxu0 %v159
    %2508 = vmatprep.subr.mxu0 0.0
    %2509 = vmatpush2.msra.mxu0 0.0
    %2510 = vmatprep.subr.mxu0 0.0
    %2511 = vmatpush2.msra.mxu0 0.0
    %2512 = vmatprep.subr.mxu0 0.0
    %2513 = vmatpush2.msra.mxu0 0.0
    %2514 = vmatprep.subr.mxu0 0.0
    %2515 = vmatpush2.msra.mxu0 0.0
    %2516 = vmatprep.subr.mxu0 0.0
    %2517 = vmatpush2.msra.mxu0 0.0
    %2518 = vmatprep.subr.mxu0 0.0
    %2519 = vmatpush2.msra.mxu0 0.0
    %2520 = vmatprep.subr.mxu0 0.0
    %2521 = vmatpush2.msra.mxu0 0.0
    %2522 = vmatprep.subr.mxu0 0.0
    %2523 = vmatpush2.msra.mxu0 0.0
    %2524 = vmatprep.subr.mxu0 0.0
    %2525 = vmatpush2.msra.mxu0 0.0
    %2526 = vmatprep.subr.mxu0 0.0
    %2527 = vmatpush2.msra.mxu0 0.0
    %2528 = vmatprep.subr.mxu0 0.0
    %2529 = vmatpush2.msra.mxu0 0.0
    %2530 = vmatprep.subr.mxu0 0.0
    %2531 = vmatpush2.msra.mxu0 0.0
    %2532 = vmatprep.subr.mxu0 0.0
    %2533 = vmatpush2.msra.mxu0 0.0
    %2534 = vmatprep.subr.mxu0 0.0
    %2535 = vmatpush2.msra.mxu0 0.0
    %2536 = vmatprep.subr.mxu0 0.0
    %2537 = vmatpush2.msra.mxu0 0.0
    %2538 = vmatprep.subr.mxu0 0.0
    %2539 = vmatpush2.msra.mxu0 0.0
    %2540 = vmatprep.mubr.f32.mxu0 0.0
    %2541 = vmatmul.mubr.f32.gmra.mxu0 %v2474
    %v2542 = vpop.f32.mrf.mxu0
    %v2543 = vadd.f32 0.0, %v2542
    %v2544 = vpop.f32.mrf.mxu0
    %2545 = vdwg.mxu0
    %v2547 = vrot.slane %v2543, 2
    %v2549 = vadd.f32 %v2460, %v2547
    %v2550 = vmax.f32 %v2549, 0.0
    %v2552 = vrot.slane %v2550, 6
    %v2553 = vsel %vm84, %v2552, 0
    %2555 = vmatprep.subr.mxu0 0.0
    %2556 = vmatpush1.msra.mxu0 0.0
    %2557 = vmatprep.subr.mxu0 0.0
    %2558 = vmatpush1.msra.mxu0 0.0
    %2559 = vmatprep.subr.mxu0 0.0
    %2560 = vmatpush1.msra.mxu0 0.0
    %2561 = vmatprep.subr.mxu0 0.0
    %2562 = vmatpush1.msra.mxu0 0.0
    %2563 = vmatprep.subr.mxu0 0.0
    %2564 = vmatpush1.msra.mxu0 0.0
    %2565 = vmatprep.subr.mxu0 0.0
    %2566 = vmatpush1.msra.mxu0 0.0
    %2567 = vmatprep.subr.mxu0 0.0
    %2568 = vmatpush1.msra.mxu0 0.0
    %2569 = vmatprep.subr.mxu0 0.0
    %2570 = vmatpush1.msra.mxu0 0.0
    %2571 = vmatprep.subr.mxu0 0.0
    %2572 = vmatpush1.msra.mxu0 0.0
    %2573 = vmatprep.subr.mxu0 0.0
    %2574 = vmatpush1.msra.mxu0 0.0
    %2575 = vmatprep.subr.mxu0 0.0
    %2576 = vmatpush1.msra.mxu0 0.0
    %2577 = vmatprep.subr.mxu0 0.0
    %2578 = vmatpush1.msra.mxu0 0.0
    %2579 = vmatprep.subr.mxu0 0.0
    %2580 = vmatpush1.msra.mxu0 %v186
    %2581 = vmatprep.subr.mxu0 0.0
    %2582 = vmatpush1.msra.mxu0 %v185
    %2583 = vmatprep.subr.mxu0 0.0
    %2584 = vmatpush1.msra.mxu0 %v184
    %2585 = vmatprep.subr.mxu0 0.0
    %2586 = vmatpush1.msra.mxu0 %v183
    %2587 = vmatprep.subr.mxu0 0.0
    %2588 = vmatpush2.msra.mxu0 0.0
    %2589 = vmatprep.subr.mxu0 0.0
    %2590 = vmatpush2.msra.mxu0 0.0
    %2591 = vmatprep.subr.mxu0 0.0
    %2592 = vmatpush2.msra.mxu0 0.0
    %2593 = vmatprep.subr.mxu0 0.0
    %2594 = vmatpush2.msra.mxu0 0.0
    %2595 = vmatprep.subr.mxu0 0.0
    %2596 = vmatpush2.msra.mxu0 0.0
    %2597 = vmatprep.subr.mxu0 0.0
    %2598 = vmatpush2.msra.mxu0 0.0
    %2599 = vmatprep.subr.mxu0 0.0
    %2600 = vmatpush2.msra.mxu0 0.0
    %2601 = vmatprep.subr.mxu0 0.0
    %2602 = vmatpush2.msra.mxu0 0.0
    %2603 = vmatprep.subr.mxu0 0.0
    %2604 = vmatpush2.msra.mxu0 0.0
    %2605 = vmatprep.subr.mxu0 0.0
    %2606 = vmatpush2.msra.mxu0 0.0
    %2607 = vmatprep.subr.mxu0 0.0
    %2608 = vmatpush2.msra.mxu0 0.0
    %2609 = vmatprep.subr.mxu0 0.0
    %2610 = vmatpush2.msra.mxu0 0.0
    %2611 = vmatprep.subr.mxu0 0.0
    %2612 = vmatpush2.msra.mxu0 0.0
    %2613 = vmatprep.subr.mxu0 0.0
    %2614 = vmatpush2.msra.mxu0 0.0
    %2615 = vmatprep.subr.mxu0 0.0
    %2616 = vmatpush2.msra.mxu0 0.0
    %2617 = vmatprep.subr.mxu0 0.0
    %2618 = vmatpush2.msra.mxu0 0.0
    %2619 = vmatprep.mubr.f32.mxu0 0.0
    %2620 = vmatmul.mubr.f32.gmra.mxu0 %v2553
    %v2621 = vpop.f32.mrf.mxu0
    %v2622 = vadd.f32 %v187, %v2621
    %v2623 = vpop.f32.mrf.mxu0
    %2624 = vdwg.mxu0
    %v2626 = vrot.slane %v2460, 6
    %2627 = vrot.lane.b32.xlu0 %v2626, 96
    %v2628 = vpop.permute.xlu0 %2627
    %v2630 = vadd.f32 %v2622, %v2628
    %v2631 = vxor.u32 %v2630, 2147483648
    %v2632 = vmul.f32 %v2631, 1.442695
    %v2633 = vpow.pop %v2632
    %v2634 = vadd.f32 %v2633, 1.0
    %v2635 = vrcp.pop %v2634
    %v2636 = vmul.f32 1.0, %v2635
    %2637 = vrot.lane.b32.xlu0 %v2626, 32
    %v2638 = vpop.permute.xlu0 %2637
    %v2640 = vmul.f32 %v2636, %v2638
    %2642 = vrot.lane.b32.xlu0 %v2640, 64
    %v2643 = vpop.permute.xlu0 %2642
    %v2645 = vadd.f32 %v2622, %v2643
    %v2646 = vtanh.pop %v2645
    %v2647 = vsub.f32 1.0, %v2636
    %2649 = vrot.lane.b32.xlu0 %v2646, 96
    %v2650 = vpop.permute.xlu0 %2649
    %v2652 = vmul.f32 %v2647, %v2650
    %v2653 = vmul.f32 %v2636, %v2289
    %v2654 = vadd.f32 %v2652, %v2653
    %2656 = vrot.lane.b32.xlu0 %v2654, 96
    %v2657 = vpop.permute.xlu0 %2656
    %v2658 = vsel %vm84, %v2657, 0
    %2660 = vmatprep.subr.mxu0 0.0
    %2661 = vmatpush1.msra.mxu0 0.0
    %2662 = vmatprep.subr.mxu0 0.0
    %2663 = vmatpush1.msra.mxu0 0.0
    %2664 = vmatprep.subr.mxu0 0.0
    %2665 = vmatpush1.msra.mxu0 0.0
    %2666 = vmatprep.subr.mxu0 0.0
    %2667 = vmatpush1.msra.mxu0 0.0
    %2668 = vmatprep.subr.mxu0 0.0
    %2669 = vmatpush1.msra.mxu0 0.0
    %2670 = vmatprep.subr.mxu0 0.0
    %2671 = vmatpush1.msra.mxu0 0.0
    %2672 = vmatprep.subr.mxu0 0.0
    %2673 = vmatpush1.msra.mxu0 0.0
    %2674 = vmatprep.subr.mxu0 0.0
    %2675 = vmatpush1.msra.mxu0 0.0
    %2676 = vmatprep.subr.mxu0 0.0
    %2677 = vmatpush1.msra.mxu0 0.0
    %2678 = vmatprep.subr.mxu0 0.0
    %2679 = vmatpush1.msra.mxu0 0.0
    %2680 = vmatprep.subr.mxu0 0.0
    %2681 = vmatpush1.msra.mxu0 0.0
    %2682 = vmatprep.subr.mxu0 0.0
    %2683 = vmatpush1.msra.mxu0 0.0
    %2684 = vmatprep.subr.mxu0 0.0
    %2685 = vmatpush1.msra.mxu0 %v191
    %2686 = vmatprep.subr.mxu0 0.0
    %2687 = vmatpush1.msra.mxu0 %v190
    %2688 = vmatprep.subr.mxu0 0.0
    %2689 = vmatpush1.msra.mxu0 %v189
    %2690 = vmatprep.subr.mxu0 0.0
    %2691 = vmatpush1.msra.mxu0 %v188
    %2692 = vmatprep.subr.mxu0 0.0
    %2693 = vmatpush2.msra.mxu0 0.0
    %2694 = vmatprep.subr.mxu0 0.0
    %2695 = vmatpush2.msra.mxu0 0.0
    %2696 = vmatprep.subr.mxu0 0.0
    %2697 = vmatpush2.msra.mxu0 0.0
    %2698 = vmatprep.subr.mxu0 0.0
    %2699 = vmatpush2.msra.mxu0 0.0
    %2700 = vmatprep.subr.mxu0 0.0
    %2701 = vmatpush2.msra.mxu0 0.0
    %2702 = vmatprep.subr.mxu0 0.0
    %2703 = vmatpush2.msra.mxu0 0.0
    %2704 = vmatprep.subr.mxu0 0.0
    %2705 = vmatpush2.msra.mxu0 0.0
    %2706 = vmatprep.subr.mxu0 0.0
    %2707 = vmatpush2.msra.mxu0 0.0
    %2708 = vmatprep.subr.mxu0 0.0
    %2709 = vmatpush2.msra.mxu0 0.0
    %2710 = vmatprep.subr.mxu0 0.0
    %2711 = vmatpush2.msra.mxu0 0.0
    %2712 = vmatprep.subr.mxu0 0.0
    %2713 = vmatpush2.msra.mxu0 0.0
    %2714 = vmatprep.subr.mxu0 0.0
    %2715 = vmatpush2.msra.mxu0 0.0
    %2716 = vmatprep.subr.mxu0 0.0
    %2717 = vmatpush2.msra.mxu0 0.0
    %2718 = vmatprep.subr.mxu0 0.0
    %2719 = vmatpush2.msra.mxu0 0.0
    %2720 = vmatprep.subr.mxu0 0.0
    %2721 = vmatpush2.msra.mxu0 0.0
    %2722 = vmatprep.subr.mxu0 0.0
    %2723 = vmatpush2.msra.mxu0 0.0
    %2724 = vmatprep.mubr.f32.mxu0 0.0
    %2725 = vmatmul.mubr.f32.gmra.mxu0 %v2658
    %v2726 = vpop.f32.mrf.mxu0
    %v2727 = vadd.f32 %v192, %v2726
    %v2728 = vpop.f32.mrf.mxu0
    %2729 = vdwg.mxu0
    %v2730 = vsel %vm538, %v2727, -inf
    %2731 = vmax.xlane.f32.xlu0 %v2730
    %v2732 = vpop.xlane.xlu0 %2731
    %v2733 = vsub.f32 %v2727, %v2732
    %v2734 = vmul.f32 %v2733, 1.442695
    %v2735 = vpow.pop %v2734
    %v2736 = vsel %vm538, %v2735, 0.0
    %2737 = vadd.xlane.f32.xlu0 %v2736
    %v2738 = vpop.xlane.xlu0 %2737
    %v2739 = vlog2.pop %v2738
    %v2740 = vmul.f32 %v2739, 0.6931472
    %v2741 = vadd.f32 %v2740, %v2732
    %v2742 = vsub.f32 %v2727, %v2741
    %2743 = vst.msk [vmem:[#allocation7 + $0x6] sm:$0x1] %vm538, %v2742
    %2745 = vst.msk [vmem:[#allocation8 + $0x6] sm:$0x1] %vm554, %v2657
    %2746 = vst [vmem:[#allocation10] sm:$0x40] %v2472
    %2747 = vmatprep.subr.mxu0 0.0
    %2748 = vmatpush1.msra.mxu0 0.0
    %2749 = vmatprep.subr.mxu0 0.0
    %2750 = vmatpush1.msra.mxu0 0.0
    %2751 = vmatprep.subr.mxu0 0.0
    %2752 = vmatpush1.msra.mxu0 0.0
    %2753 = vmatprep.subr.mxu0 0.0
    %2754 = vmatpush1.msra.mxu0 0.0
    %2755 = vmatprep.subr.mxu0 0.0
    %2756 = vmatpush1.msra.mxu0 0.0
    %2757 = vmatprep.subr.mxu0 0.0
    %2758 = vmatpush1.msra.mxu0 0.0
    %2759 = vmatprep.subr.mxu0 0.0
    %2760 = vmatpush1.msra.mxu0 0.0
    %2761 = vmatprep.subr.mxu0 0.0
    %2762 = vmatpush1.msra.mxu0 0.0
    %2763 = vmatprep.subr.mxu0 0.0
    %2764 = vmatpush1.msra.mxu0 0.0
    %2765 = vmatprep.subr.mxu0 0.0
    %2766 = vmatpush1.msra.mxu0 0.0
    %2767 = vmatprep.subr.mxu0 0.0
    %2768 = vmatpush1.msra.mxu0 0.0
    %2769 = vmatprep.subr.mxu0 0.0
    %2770 = vmatpush1.msra.mxu0 0.0
    %2771 = vmatprep.subr.mxu0 %v182
    %2772 = vmatpush1.msra.mxu0 %v181
    %2773 = vmatprep.subr.mxu0 %v180
    %2774 = vmatpush1.msra.mxu0 %v179
    %2775 = vmatprep.subr.mxu0 %v178
    %2776 = vmatpush1.msra.mxu0 %v177
    %2777 = vmatprep.subr.mxu0 %v176
    %2778 = vmatpush1.msra.mxu0 %v175
    %2779 = vmatprep.subr.mxu0 0.0
    %2780 = vmatpush2.msra.mxu0 0.0
    %2781 = vmatprep.subr.mxu0 0.0
    %2782 = vmatpush2.msra.mxu0 0.0
    %2783 = vmatprep.subr.mxu0 0.0
    %2784 = vmatpush2.msra.mxu0 0.0
    %2785 = vmatprep.subr.mxu0 0.0
    %2786 = vmatpush2.msra.mxu0 0.0
    %2787 = vmatprep.subr.mxu0 0.0
    %2788 = vmatpush2.msra.mxu0 0.0
    %2789 = vmatprep.subr.mxu0 0.0
    %2790 = vmatpush2.msra.mxu0 0.0
    %2791 = vmatprep.subr.mxu0 0.0
    %2792 = vmatpush2.msra.mxu0 0.0
    %2793 = vmatprep.subr.mxu0 0.0
    %2794 = vmatpush2.msra.mxu0 0.0
    %2795 = vmatprep.subr.mxu0 0.0
    %2796 = vmatpush2.msra.mxu0 0.0
    %2797 = vmatprep.subr.mxu0 0.0
    %2798 = vmatpush2.msra.mxu0 0.0
    %2799 = vmatprep.subr.mxu0 0.0
    %2800 = vmatpush2.msra.mxu0 0.0
    %2801 = vmatprep.subr.mxu0 0.0
    %2802 = vmatpush2.msra.mxu0 0.0
    %2803 = vmatprep.subr.mxu0 0.0
    %2804 = vmatpush2.msra.mxu0 0.0
    %2805 = vmatprep.subr.mxu0 0.0
    %2806 = vmatpush2.msra.mxu0 0.0
    %2807 = vmatprep.subr.mxu0 0.0
    %2808 = vmatpush2.msra.mxu0 0.0
    %2809 = vmatprep.subr.mxu0 0.0
    %2810 = vmatpush2.msra.mxu0 0.0
    %2811 = vmatprep.mubr.f32.mxu0 0.0
    %2812 = vmatmul.mubr.f32.gmra.mxu0 %v2658
    %v2813 = vpop.f32.mrf.mxu0
    %v2814 = vadd.f32 0.0, %v2813
    %v2815 = vpop.f32.mrf.mxu0
    %v2816 = vadd.f32 0.0, %v2815
    %2817 = vdwg.mxu0
    %v2820 = vrot.slane %v2814, 1
    %v2821 = vrot.slane %v2816, 1
    %v2824 = vadd.f32 %v155, %v2820
    %v2825 = vadd.f32 %v157, %v2821
    %vm2826 = vcmask 1047559
    %v2827 = vsel %vm2826, %v2824, -inf
    %2828 = vmax.xlane.f32.xlu0 %v2827
    %v2829 = vpop.xlane.xlu0 %2828
    %v2830 = vsub.f32 %v2824, %v2829
    %v2831 = vmul.f32 %v2830, 1.442695
    %v2832 = vpow.pop %v2831
    %v2833 = vsel %vm2826, %v2832, 0.0
    %2834 = vadd.xlane.f32.xlu0 %v2833
    %v2835 = vpop.xlane.xlu0 %2834
    %v2836 = vrcp.pop %v2835
    %v2837 = vmul.f32 %v2832, %v2836
    %v2839 = vrot.slane %v2837, 7
    %2841 = vmatprep.subr.mxu0 0.0
    %2842 = vmatpush1.msra.mxu0 %v174
    %2843 = vmatprep.subr.mxu0 0.0
    %2844 = vmatpush1.msra.mxu0 %v173
    %2845 = vmatprep.subr.mxu0 0.0
    %2846 = vmatpush1.msra.mxu0 %v172
    %2847 = vmatprep.subr.mxu0 0.0
    %2848 = vmatpush1.msra.mxu0 %v171
    %2849 = vmatprep.subr.mxu0 0.0
    %2850 = vmatpush1.msra.mxu0 %v170
    %2851 = vmatprep.subr.mxu0 0.0
    %2852 = vmatpush1.msra.mxu0 %v169
    %2853 = vmatprep.subr.mxu0 0.0
    %2854 = vmatpush1.msra.mxu0 %v168
    %2855 = vmatprep.subr.mxu0 0.0
    %2856 = vmatpush1.msra.mxu0 %v167
    %2857 = vmatprep.subr.mxu0 0.0
    %2858 = vmatpush1.msra.mxu0 %v166
    %2859 = vmatprep.subr.mxu0 0.0
    %2860 = vmatpush1.msra.mxu0 %v165
    %2861 = vmatprep.subr.mxu0 0.0
    %2862 = vmatpush1.msra.mxu0 %v164
    %2863 = vmatprep.subr.mxu0 0.0
    %2864 = vmatpush1.msra.mxu0 %v163
    %2865 = vmatprep.subr.mxu0 0.0
    %2866 = vmatpush1.msra.mxu0 %v162
    %2867 = vmatprep.subr.mxu0 0.0
    %2868 = vmatpush1.msra.mxu0 %v161
    %2869 = vmatprep.subr.mxu0 0.0
    %2870 = vmatpush1.msra.mxu0 %v160
    %2871 = vmatprep.subr.mxu0 0.0
    %2872 = vmatpush1.msra.mxu0 %v159
    %2873 = vmatprep.subr.mxu0 0.0
    %2874 = vmatpush2.msra.mxu0 0.0
    %2875 = vmatprep.subr.mxu0 0.0
    %2876 = vmatpush2.msra.mxu0 0.0
    %2877 = vmatprep.subr.mxu0 0.0
    %2878 = vmatpush2.msra.mxu0 0.0
    %2879 = vmatprep.subr.mxu0 0.0
    %2880 = vmatpush2.msra.mxu0 0.0
    %2881 = vmatprep.subr.mxu0 0.0
    %2882 = vmatpush2.msra.mxu0 0.0
    %2883 = vmatprep.subr.mxu0 0.0
    %2884 = vmatpush2.msra.mxu0 0.0
    %2885 = vmatprep.subr.mxu0 0.0
    %2886 = vmatpush2.msra.mxu0 0.0
    %2887 = vmatprep.subr.mxu0 0.0
    %2888 = vmatpush2.msra.mxu0 0.0
    %2889 = vmatprep.subr.mxu0 0.0
    %2890 = vmatpush2.msra.mxu0 0.0
    %2891 = vmatprep.subr.mxu0 0.0
    %2892 = vmatpush2.msra.mxu0 0.0
    %2893 = vmatprep.subr.mxu0 0.0
    %2894 = vmatpush2.msra.mxu0 0.0
    %2895 = vmatprep.subr.mxu0 0.0
    %2896 = vmatpush2.msra.mxu0 0.0
    %2897 = vmatprep.subr.mxu0 0.0
    %2898 = vmatpush2.msra.mxu0 0.0
    %2899 = vmatprep.subr.mxu0 0.0
    %2900 = vmatpush2.msra.mxu0 0.0
    %2901 = vmatprep.subr.mxu0 0.0
    %2902 = vmatpush2.msra.mxu0 0.0
    %2903 = vmatprep.subr.mxu0 0.0
    %2904 = vmatpush2.msra.mxu0 0.0
    %2905 = vmatprep.mubr.f32.mxu0 0.0
    %2906 = vmatmul.mubr.f32.gmra.mxu0 %v2839
    %v2907 = vpop.f32.mrf.mxu0
    %v2908 = vadd.f32 0.0, %v2907
    %v2909 = vpop.f32.mrf.mxu0
    %2910 = vdwg.mxu0
    %v2912 = vrot.slane %v2908, 1
    %v2914 = vadd.f32 %v2825, %v2912
    %v2915 = vmax.f32 %v2914, 0.0
    %v2917 = vrot.slane %v2915, 7
    %v2918 = vsel %vm84, %v2917, 0
    %2920 = vmatprep.subr.mxu0 0.0
    %2921 = vmatpush1.msra.mxu0 0.0
    %2922 = vmatprep.subr.mxu0 0.0
    %2923 = vmatpush1.msra.mxu0 0.0
    %2924 = vmatprep.subr.mxu0 0.0
    %2925 = vmatpush1.msra.mxu0 0.0
    %2926 = vmatprep.subr.mxu0 0.0
    %2927 = vmatpush1.msra.mxu0 0.0
    %2928 = vmatprep.subr.mxu0 0.0
    %2929 = vmatpush1.msra.mxu0 0.0
    %2930 = vmatprep.subr.mxu0 0.0
    %2931 = vmatpush1.msra.mxu0 0.0
    %2932 = vmatprep.subr.mxu0 0.0
    %2933 = vmatpush1.msra.mxu0 0.0
    %2934 = vmatprep.subr.mxu0 0.0
    %2935 = vmatpush1.msra.mxu0 0.0
    %2936 = vmatprep.subr.mxu0 0.0
    %2937 = vmatpush1.msra.mxu0 0.0
    %2938 = vmatprep.subr.mxu0 0.0
    %2939 = vmatpush1.msra.mxu0 0.0
    %2940 = vmatprep.subr.mxu0 0.0
    %2941 = vmatpush1.msra.mxu0 0.0
    %2942 = vmatprep.subr.mxu0 0.0
    %2943 = vmatpush1.msra.mxu0 0.0
    %2944 = vmatprep.subr.mxu0 0.0
    %2945 = vmatpush1.msra.mxu0 %v186
    %2946 = vmatprep.subr.mxu0 0.0
    %2947 = vmatpush1.msra.mxu0 %v185
    %2948 = vmatprep.subr.mxu0 0.0
    %2949 = vmatpush1.msra.mxu0 %v184
    %2950 = vmatprep.subr.mxu0 0.0
    %2951 = vmatpush1.msra.mxu0 %v183
    %2952 = vmatprep.subr.mxu0 0.0
    %2953 = vmatpush2.msra.mxu0 0.0
    %2954 = vmatprep.subr.mxu0 0.0
    %2955 = vmatpush2.msra.mxu0 0.0
    %2956 = vmatprep.subr.mxu0 0.0
    %2957 = vmatpush2.msra.mxu0 0.0
    %2958 = vmatprep.subr.mxu0 0.0
    %2959 = vmatpush2.msra.mxu0 0.0
    %2960 = vmatprep.subr.mxu0 0.0
    %2961 = vmatpush2.msra.mxu0 0.0
    %2962 = vmatprep.subr.mxu0 0.0
    %2963 = vmatpush2.msra.mxu0 0.0
    %2964 = vmatprep.subr.mxu0 0.0
    %2965 = vmatpush2.msra.mxu0 0.0
    %2966 = vmatprep.subr.mxu0 0.0
    %2967 = vmatpush2.msra.mxu0 0.0
    %2968 = vmatprep.subr.mxu0 0.0
    %2969 = vmatpush2.msra.mxu0 0.0
    %2970 = vmatprep.subr.mxu0 0.0
    %2971 = vmatpush2.msra.mxu0 0.0
    %2972 = vmatprep.subr.mxu0 0.0
    %2973 = vmatpush2.msra.mxu0 0.0
    %2974 = vmatprep.subr.mxu0 0.0
    %2975 = vmatpush2.msra.mxu0 0.0
    %2976 = vmatprep.subr.mxu0 0.0
    %2977 = vmatpush2.msra.mxu0 0.0
    %2978 = vmatprep.subr.mxu0 0.0
    %2979 = vmatpush2.msra.mxu0 0.0
    %2980 = vmatprep.subr.mxu0 0.0
    %2981 = vmatpush2.msra.mxu0 0.0
    %2982 = vmatprep.subr.mxu0 0.0
    %2983 = vmatpush2.msra.mxu0 0.0
    %2984 = vmatprep.mubr.f32.mxu0 0.0
    %2985 = vmatmul.mubr.f32.gmra.mxu0 %v2918
    %v2986 = vpop.f32.mrf.mxu0
    %v2987 = vadd.f32 %v187, %v2986
    %v2988 = vpop.f32.mrf.mxu0
    %2989 = vdwg.mxu0
    %v2991 = vrot.slane %v2825, 7
    %2992 = vrot.lane.b32.xlu0 %v2991, 96
    %v2993 = vpop.permute.xlu0 %2992
    %v2995 = vadd.f32 %v2987, %v2993
    %v2996 = vxor.u32 %v2995, 2147483648
    %v2997 = vmul.f32 %v2996, 1.442695
    %v2998 = vpow.pop %v2997
    %v2999 = vadd.f32 %v2998, 1.0
    %v3000 = vrcp.pop %v2999
    %v3001 = vmul.f32 1.0, %v3000
    %3002 = vrot.lane.b32.xlu0 %v2991, 32
    %v3003 = vpop.permute.xlu0 %3002
    %v3005 = vmul.f32 %v3001, %v3003
    %3007 = vrot.lane.b32.xlu0 %v3005, 64
    %v3008 = vpop.permute.xlu0 %3007
    %v3010 = vadd.f32 %v2987, %v3008
    %v3011 = vtanh.pop %v3010
    %v3012 = vsub.f32 1.0, %v3001
    %3014 = vrot.lane.b32.xlu0 %v3011, 96
    %v3015 = vpop.permute.xlu0 %3014
    %v3017 = vmul.f32 %v3012, %v3015
    %v3018 = vmul.f32 %v3001, %v2654
    %v3019 = vadd.f32 %v3017, %v3018
    %3021 = vrot.lane.b32.xlu0 %v3019, 96
    %v3022 = vpop.permute.xlu0 %3021
    %v3023 = vsel %vm84, %v3022, 0
    %3025 = vmatprep.subr.mxu0 0.0
    %3026 = vmatpush1.msra.mxu0 0.0
    %3027 = vmatprep.subr.mxu0 0.0
    %3028 = vmatpush1.msra.mxu0 0.0
    %3029 = vmatprep.subr.mxu0 0.0
    %3030 = vmatpush1.msra.mxu0 0.0
    %3031 = vmatprep.subr.mxu0 0.0
    %3032 = vmatpush1.msra.mxu0 0.0
    %3033 = vmatprep.subr.mxu0 0.0
    %3034 = vmatpush1.msra.mxu0 0.0
    %3035 = vmatprep.subr.mxu0 0.0
    %3036 = vmatpush1.msra.mxu0 0.0
    %3037 = vmatprep.subr.mxu0 0.0
    %3038 = vmatpush1.msra.mxu0 0.0
    %3039 = vmatprep.subr.mxu0 0.0
    %3040 = vmatpush1.msra.mxu0 0.0
    %3041 = vmatprep.subr.mxu0 0.0
    %3042 = vmatpush1.msra.mxu0 0.0
    %3043 = vmatprep.subr.mxu0 0.0
    %3044 = vmatpush1.msra.mxu0 0.0
    %3045 = vmatprep.subr.mxu0 0.0
    %3046 = vmatpush1.msra.mxu0 0.0
    %3047 = vmatprep.subr.mxu0 0.0
    %3048 = vmatpush1.msra.mxu0 0.0
    %3049 = vmatprep.subr.mxu0 0.0
    %3050 = vmatpush1.msra.mxu0 %v191
    %3051 = vmatprep.subr.mxu0 0.0
    %3052 = vmatpush1.msra.mxu0 %v190
    %3053 = vmatprep.subr.mxu0 0.0
    %3054 = vmatpush1.msra.mxu0 %v189
    %3055 = vmatprep.subr.mxu0 0.0
    %3056 = vmatpush1.msra.mxu0 %v188
    %3057 = vmatprep.subr.mxu0 0.0
    %3058 = vmatpush2.msra.mxu0 0.0
    %3059 = vmatprep.subr.mxu0 0.0
    %3060 = vmatpush2.msra.mxu0 0.0
    %3061 = vmatprep.subr.mxu0 0.0
    %3062 = vmatpush2.msra.mxu0 0.0
    %3063 = vmatprep.subr.mxu0 0.0
    %3064 = vmatpush2.msra.mxu0 0.0
    %3065 = vmatprep.subr.mxu0 0.0
    %3066 = vmatpush2.msra.mxu0 0.0
    %3067 = vmatprep.subr.mxu0 0.0
    %3068 = vmatpush2.msra.mxu0 0.0
    %3069 = vmatprep.subr.mxu0 0.0
    %3070 = vmatpush2.msra.mxu0 0.0
    %3071 = vmatprep.subr.mxu0 0.0
    %3072 = vmatpush2.msra.mxu0 0.0
    %3073 = vmatprep.subr.mxu0 0.0
    %3074 = vmatpush2.msra.mxu0 0.0
    %3075 = vmatprep.subr.mxu0 0.0
    %3076 = vmatpush2.msra.mxu0 0.0
    %3077 = vmatprep.subr.mxu0 0.0
    %3078 = vmatpush2.msra.mxu0 0.0
    %3079 = vmatprep.subr.mxu0 0.0
    %3080 = vmatpush2.msra.mxu0 0.0
    %3081 = vmatprep.subr.mxu0 0.0
    %3082 = vmatpush2.msra.mxu0 0.0
    %3083 = vmatprep.subr.mxu0 0.0
    %3084 = vmatpush2.msra.mxu0 0.0
    %3085 = vmatprep.subr.mxu0 0.0
    %3086 = vmatpush2.msra.mxu0 0.0
    %3087 = vmatprep.subr.mxu0 0.0
    %3088 = vmatpush2.msra.mxu0 0.0
    %3089 = vmatprep.mubr.f32.mxu0 0.0
    %3090 = vmatmul.mubr.f32.gmra.mxu0 %v3023
    %v3091 = vpop.f32.mrf.mxu0
    %v3092 = vadd.f32 %v192, %v3091
    %v3093 = vpop.f32.mrf.mxu0
    %3094 = vdwg.mxu0
    %v3095 = vsel %vm538, %v3092, -inf
    %3096 = vmax.xlane.f32.xlu0 %v3095
    %v3097 = vpop.xlane.xlu0 %3096
    %v3098 = vsub.f32 %v3092, %v3097
    %v3099 = vmul.f32 %v3098, 1.442695
    %v3100 = vpow.pop %v3099
    %v3101 = vsel %vm538, %v3100, 0.0
    %3102 = vadd.xlane.f32.xlu0 %v3101
    %v3103 = vpop.xlane.xlu0 %3102
    %v3104 = vlog2.pop %v3103
    %v3105 = vmul.f32 %v3104, 0.6931472
    %v3106 = vadd.f32 %v3105, %v3097
    %v3107 = vsub.f32 %v3092, %v3106
    %3108 = vst.msk [vmem:[#allocation7 + $0x7] sm:$0x1] %vm538, %v3107
    %3110 = vst.msk [vmem:[#allocation8 + $0x7] sm:$0x1] %vm554, %v3022
    %3111 = vst [vmem:[#allocation10] sm:$0x80] %v2837
    // Predicated region
    $region46: #{tpu_custom_call.1} parent=1 // pred_check
      _
    $region47: #{tpu_custom_call.1} parent=1 // pred_check_branch
      %3113 = sbr.rel (0) target = $region49
    $region48: #{tpu_custom_call.1} parent=1 // pred_region
      %s3115 = ssub.s32 128, 128
      %3116 = vsyncadd [#allocation4], %s3115
      %s3118 = sshll.u32 [#allocation7], 4
      %s3119 = int_to_ptr.vmem [resolvable:$true] %s3118
      %3121 = dma.vmem_to_hbm [thread:$0]  %s3119, 128, %s9, [#allocation4]
    $region49: #{tpu_custom_call.1} parent=1 // pred_fallthru
      _
    // Predicated region
    $region50: #{tpu_custom_call.1} parent=1 // pred_check
      _
    $region51: #{tpu_custom_call.1} parent=1 // pred_check_branch
      %3123 = sbr.rel (0) target = $region53
    $region52: #{tpu_custom_call.1} parent=1 // pred_region
      %s3125 = ssub.s32 128, 128
      %3126 = vsyncadd [#allocation9], %s3125
      %s3128 = sshll.u32 [#allocation8], 4
      %s3129 = int_to_ptr.vmem [resolvable:$true] %s3128
      %3131 = dma.vmem_to_hbm [thread:$0]  %s3129, 128, %s10, [#allocation9]
    $region53: #{tpu_custom_call.1} parent=1 // pred_fallthru
      _
    // Predicated region
    $region54: #{tpu_custom_call.1} parent=1 // pred_check
      _
    $region55: #{tpu_custom_call.1} parent=1 // pred_check_branch
      %3133 = sbr.rel (0) target = $region57
    $region56: #{tpu_custom_call.1} parent=1 // pred_region
      %s3135 = ssub.s32 128, 128
      %3136 = vsyncadd [#allocation9], %s3135
      %s3138 = sshll.u32 [#allocation10], 4
      %s3139 = int_to_ptr.vmem [resolvable:$true] %s3138
      %3141 = dma.vmem_to_hbm [thread:$0]  %s3139, 128, %s11, [#allocation9]
    $region57: #{tpu_custom_call.1} parent=1 // pred_fallthru
      _
    // Predicated region
    $region58: #{tpu_custom_call.1} parent=1 // pred_check
      _
    $region59: #{tpu_custom_call.1} parent=1 // pred_check_branch
      %3143 = sbr.rel (0) target = $region61
    $region60: #{tpu_custom_call.1} parent=1 // pred_region
      %3144 = dma.done [#allocation4], 128
    $region61: #{tpu_custom_call.1} parent=1 // pred_fallthru
      _
    // Predicated region
    $region62: #{tpu_custom_call.1} parent=1 // pred_check
      _
    $region63: #{tpu_custom_call.1} parent=1 // pred_check_branch
      %3146 = sbr.rel (0) target = $region65
    $region64: #{tpu_custom_call.1} parent=1 // pred_region
      %3147 = dma.done [#allocation9], 128
    $region65: #{tpu_custom_call.1} parent=1 // pred_fallthru
      _
    // Predicated region
    $region66: #{tpu_custom_call.1} parent=1 // pred_check
      _
    $region67: #{tpu_custom_call.1} parent=1 // pred_check_branch
      %3149 = sbr.rel (0) target = $region69
    $region68: #{tpu_custom_call.1} parent=1 // pred_region
      %3150 = dma.done [#allocation9], 128
    $region69: #{tpu_custom_call.1} parent=1 // pred_fallthru
      _
    %3151 = vsyncpa [#allocation3], 1
    %3152 = vsyncpa [#allocation6], 1
    %3153 = vsyncpa [#allocation4], 1
    %3154 = vsyncpa [#allocation9], 1

</llo_original>
